<compile_context>
chip_gen: v5e
topology: v5e:2x2
jax: 0.10.0
libtpu: 0.0.40
codegen_flags: <defaults>
</compile_context>

<pallas_src>
import jax
import jax.numpy as jnp
from jax import lax
from jax.experimental import pallas as pl
from jax.experimental.pallas import tpu as pltpu

LANE = 128


def _basic_block_kernel(x_ref, w1_ref, s1_ref, b1_ref, w2_ref, s2_ref, b2_ref,
                        o_ref):
    """Fused conv3x3 -> BN -> ReLU -> conv3x3 -> BN -> +residual -> ReLU.

    Per grid step (one batch item):
      x_ref:  (1, H, W, CP)     bf16 input block (channels padded to CP)
      w1/w2:  (3, 3*CP, CP)     bf16 weights, kh-major; rows = kw*CP + cin
      s*/b*:  (1, CP)           f32 folded BN scale / bias
      o_ref:  (1, H, W, CP)     f32 output block
    """
    _, H, W, CP = x_ref.shape
    cdt = x_ref.dtype  # bf16 compute dtype for MXU inputs

    def pad_hw(t):
        # (H, W, CP) -> (H+2, W+2, CP) with a zero halo ring (value-side; each
        # element written exactly once — no redundant full-buffer zeroing).
        zc = jnp.zeros((H, 1, CP), cdt)
        t = jnp.concatenate([zc, t, zc], axis=1)
        zr = jnp.zeros((1, W + 2, CP), cdt)
        return jnp.concatenate([zr, t, zr], axis=0)

    def conv3x3(xp, w_ref):
        # xp: (H+2, W+2, CP).  Fold kw into K: taps[r, w, kw*CP + c] =
        # xp[r, w+kw, c]  ->  3 matmuls (one per kh) with K = 3*CP.
        taps = jnp.concatenate(
            [xp[:, 0:W, :], xp[:, 1:W + 1, :], xp[:, 2:W + 2, :]], axis=-1)
        acc = jnp.zeros((H * W, CP), jnp.float32)
        for kh in range(3):  # kh shift = view along the outer axis (cheap)
            t = taps[kh:kh + H].reshape(H * W, 3 * CP)
            acc = acc + jnp.dot(t, w_ref[kh],
                                preferred_element_type=jnp.float32)
        return acc

    x = x_ref[0]  # (H, W, CP) bf16

    # conv1 -> bn1 -> relu
    acc1 = conv3x3(pad_hw(x), w1_ref)
    h1 = jnp.maximum(acc1 * s1_ref[...] + b1_ref[...], 0.0)
    h1 = h1.reshape(H, W, CP).astype(cdt)

    # conv2 -> bn2 -> +residual -> relu
    acc2 = conv3x3(pad_hw(h1), w2_ref)
    res = x.astype(jnp.float32).reshape(H * W, CP)
    out = jnp.maximum(acc2 * s2_ref[...] + b2_ref[...] + res, 0.0)
    o_ref[0] = out.reshape(H, W, CP).astype(o_ref.dtype)


def basic_block_forward(x_nchw, params, eps=1e-5):
    """x_nchw: (B, C, H, W) float32.  Returns (B, C, H, W) float32."""
    B, C, H, W = x_nchw.shape
    Cout = params["w1"].shape[0]
    assert Cout == C, "downsample=None requires inplanes == planes"
    CP = max(LANE, ((C + LANE - 1) // LANE) * LANE)  # lane-dense channel pad

    # NCHW -> NHWC, pad channels to CP, cast to bf16 (f32 accumulation in-kernel).
    x_nhwc = jnp.transpose(x_nchw, (0, 2, 3, 1))
    x_p = jnp.pad(x_nhwc, ((0, 0), (0, 0), (0, 0), (0, CP - C))).astype(jnp.bfloat16)

    def prep_w(w):
        # PyTorch (Cout, Cin, 3, 3) -> (3, 3*CP, CP); second axis = kw*CP + cin.
        w = jnp.transpose(w, (2, 3, 1, 0))  # (kh, kw, Cin, Cout)
        w = jnp.pad(w, ((0, 0), (0, 0), (0, CP - C), (0, CP - Cout)))
        return w.reshape(3, 3 * CP, CP).astype(jnp.bfloat16)

    def fold_bn(g, be, m, v):
        s = g / jnp.sqrt(v + eps)
        b = be - m * s
        s = jnp.pad(s, (0, CP - Cout)).reshape(1, CP).astype(jnp.float32)
        b = jnp.pad(b, (0, CP - Cout)).reshape(1, CP).astype(jnp.float32)
        return s, b

    w1 = prep_w(params["w1"])
    w2 = prep_w(params["w2"])
    s1, b1 = fold_bn(params["g1"], params["be1"], params["m1"], params["v1"])
    s2, b2 = fold_bn(params["g2"], params["be2"], params["m2"], params["v2"])

    out = pl.pallas_call(
        _basic_block_kernel,
        out_shape=jax.ShapeDtypeStruct((B, H, W, CP), jnp.float32),
        grid=(B,),  # parallel batch axis -> both v7x TensorCores get work
        in_specs=[
            pl.BlockSpec((1, H, W, CP), lambda b: (b, 0, 0, 0)),
            pl.BlockSpec((3, 3 * CP, CP), lambda b: (0, 0, 0)),
            pl.BlockSpec((1, CP), lambda b: (0, 0)),
            pl.BlockSpec((1, CP), lambda b: (0, 0)),
            pl.BlockSpec((3, 3 * CP, CP), lambda b: (0, 0, 0)),
            pl.BlockSpec((1, CP), lambda b: (0, 0)),
            pl.BlockSpec((1, CP), lambda b: (0, 0)),
        ],
        out_specs=pl.BlockSpec((1, H, W, CP), lambda b: (b, 0, 0, 0)),
        compiler_params=pltpu.CompilerParams(
            dimension_semantics=("parallel",)),
    )(x_p, w1, s1, b1, w2, s2, b2)

    # Drop channel padding, NHWC -> NCHW.
    return jnp.transpose(out[..., :C], (0, 3, 1, 2))


def basic_block_reference(x_nchw, params, eps=1e-5):
    """Pure-JAX f32 reference (NCHW, matches PyTorch eval-mode forward)."""
    def conv(x, w):
        return lax.conv_general_dilated(
            x, w, window_strides=(1, 1), padding=((1, 1), (1, 1)),
            dimension_numbers=("NCHW", "OIHW", "NCHW"))

    def bn(x, g, be, m, v):
        g, be, m, v = (a.reshape(1, -1, 1, 1) for a in (g, be, m, v))
        return (x - m) / jnp.sqrt(v + eps) * g + be

    out = conv(x_nchw, params["w1"])
    out = jnp.maximum(bn(out, params["g1"], params["be1"], params["m1"], params["v1"]), 0.0)
    out = conv(out, params["w2"])
    out = bn(out, params["g2"], params["be2"], params["m2"], params["v2"])
    return jnp.maximum(out + x_nchw, 0.0)


if __name__ == "__main__":
    B, C, H, W = 2, 4, 16, 16  # inplanes = planes = 4, stride = 1
    key = jax.random.PRNGKey(0)
    keys = jax.random.split(key, 11)

    params = {
        "w1": 0.1 * jax.random.normal(keys[0], (C, C, 3, 3), jnp.float32),
        "g1": 1.0 + 0.1 * jax.random.normal(keys[1], (C,), jnp.float32),
        "be1": 0.1 * jax.random.normal(keys[2], (C,), jnp.float32),
        "m1": 0.1 * jax.random.normal(keys[3], (C,), jnp.float32),
        "v1": 0.5 + jnp.abs(jax.random.normal(keys[4], (C,), jnp.float32)),
        "w2": 0.1 * jax.random.normal(keys[5], (C, C, 3, 3), jnp.float32),
        "g2": 1.0 + 0.1 * jax.random.normal(keys[6], (C,), jnp.float32),
        "be2": 0.1 * jax.random.normal(keys[7], (C,), jnp.float32),
        "m2": 0.1 * jax.random.normal(keys[8], (C,), jnp.float32),
        "v2": 0.5 + jnp.abs(jax.random.normal(keys[9], (C,), jnp.float32)),
    }
    x = jax.random.normal(keys[10], (B, C, H, W), jnp.float32)

    fwd = jax.jit(basic_block_forward)
    out = jax.block_until_ready(fwd(x, params))
    ref = jax.block_until_ready(basic_block_reference(x, params))

    assert out.shape == (B, C, H, W)
    # bf16 activations/weights (f32 accumulation) -> looser tolerance vs f32 ref.
    max_err = float(jnp.max(jnp.abs(out - ref)))
    assert jnp.allclose(out, ref, atol=5e-2, rtol=5e-2), f"max abs err = {max_err}"
    print("KERNEL_OK")
</pallas_src>

<mosaic_0001>
module attributes {stable_mosaic.version = 11 : i64} {
  func.func @_basic_block_kernel(%arg0: i32, %arg1: memref<1x16x16x128xbf16, #tpu.memory_space<vmem>>, %arg2: memref<3x384x128xbf16, #tpu.memory_space<vmem>>, %arg3: memref<1x128xf32, #tpu.memory_space<vmem>>, %arg4: memref<1x128xf32, #tpu.memory_space<vmem>>, %arg5: memref<3x384x128xbf16, #tpu.memory_space<vmem>>, %arg6: memref<1x128xf32, #tpu.memory_space<vmem>>, %arg7: memref<1x128xf32, #tpu.memory_space<vmem>>, %arg8: memref<1x16x16x128xf32, #tpu.memory_space<vmem>>) attributes {dimension_semantics = [#tpu.dimension_semantics<parallel>], iteration_bounds = array<i64: 2>, scalar_prefetch = 0 : i64, scratch_operands = 0 : i64, tpu.core_type = #tpu.core_type<tc>, window_params = [{transform_indices = @transform_0, window_bounds = array<i64: 1, 16, 16, 128>}, {pipeline_mode = #tpu.pipeline_mode<synchronous>, transform_indices = @transform_1, window_bounds = array<i64: 3, 384, 128>}, {pipeline_mode = #tpu.pipeline_mode<synchronous>, transform_indices = @transform_2, window_bounds = array<i64: 1, 128>}, {pipeline_mode = #tpu.pipeline_mode<synchronous>, transform_indices = @transform_3, window_bounds = array<i64: 1, 128>}, {pipeline_mode = #tpu.pipeline_mode<synchronous>, transform_indices = @transform_4, window_bounds = array<i64: 3, 384, 128>}, {pipeline_mode = #tpu.pipeline_mode<synchronous>, transform_indices = @transform_5, window_bounds = array<i64: 1, 128>}, {pipeline_mode = #tpu.pipeline_mode<synchronous>, transform_indices = @transform_6, window_bounds = array<i64: 1, 128>}, {transform_indices = @transform_7, window_bounds = array<i64: 1, 16, 16, 128>}]} {
    %c0 = arith.constant 0 : index
    %c0_0 = arith.constant 0 : index
    %c0_1 = arith.constant 0 : index
    %c0_2 = arith.constant 0 : index
    %0 = vector.load %arg1[%c0, %c0_0, %c0_1, %c0_2] : memref<1x16x16x128xbf16, #tpu.memory_space<vmem>>, vector<1x16x16x128xbf16>
    %1 = vector.shape_cast %0 : vector<1x16x16x128xbf16> to vector<16x16x128xbf16>
    %cst = arith.constant 0.000000e+00 : bf16
    %2 = vector.broadcast %cst : bf16 to vector<16x1x128xbf16>
    %3 = tpu.concatenate %2, %1, %2 in 1 : vector<16x1x128xbf16>, vector<16x16x128xbf16>, vector<16x1x128xbf16> -> vector<16x18x128xbf16>
    %cst_3 = arith.constant 0.000000e+00 : bf16
    %4 = vector.broadcast %cst_3 : bf16 to vector<1x18x128xbf16>
    %5 = tpu.concatenate %4, %3, %4 in 0 : vector<1x18x128xbf16>, vector<16x18x128xbf16>, vector<1x18x128xbf16> -> vector<18x18x128xbf16>
    %6 = vector.extract_strided_slice %5 {offsets = [0, 0, 0], sizes = [18, 16, 128], strides = [1, 1, 1]} : vector<18x18x128xbf16> to vector<18x16x128xbf16>
    %7 = vector.extract_strided_slice %5 {offsets = [0, 1, 0], sizes = [18, 16, 128], strides = [1, 1, 1]} : vector<18x18x128xbf16> to vector<18x16x128xbf16>
    %8 = vector.extract_strided_slice %5 {offsets = [0, 2, 0], sizes = [18, 16, 128], strides = [1, 1, 1]} : vector<18x18x128xbf16> to vector<18x16x128xbf16>
    %9 = tpu.concatenate %6, %7, %8 in 2 : vector<18x16x128xbf16>, vector<18x16x128xbf16>, vector<18x16x128xbf16> -> vector<18x16x384xbf16>
    %cst_4 = arith.constant 0.000000e+00 : f32
    %10 = vector.broadcast %cst_4 : f32 to vector<256x128xf32>
    %11 = vector.extract_strided_slice %9 {offsets = [0, 0, 0], sizes = [16, 16, 384], strides = [1, 1, 1]} : vector<18x16x384xbf16> to vector<16x16x384xbf16>
    %12 = vector.shape_cast %11 : vector<16x16x384xbf16> to vector<256x384xbf16>
    %c0_5 = arith.constant 0 : index
    %c0_6 = arith.constant 0 : index
    %c0_7 = arith.constant 0 : index
    %13 = vector.load %arg2[%c0_5, %c0_6, %c0_7] : memref<3x384x128xbf16, #tpu.memory_space<vmem>>, vector<1x384x128xbf16>
    %14 = vector.shape_cast %13 : vector<1x384x128xbf16> to vector<384x128xbf16>
    %cst_8 = arith.constant dense<0.000000e+00> : vector<256x128xf32>
    %15 = tpu.matmul %12, %14, %cst_8 {dimension_numbers = #tpu.dot_dimension_numbers<[1], [0], [0], [1], [0, 0, 1, 1], [], []>} : vector<256x384xbf16>, vector<384x128xbf16>, vector<256x128xf32> -> vector<256x128xf32>
    %16 = arith.addf %10, %15 : vector<256x128xf32>
    %17 = vector.extract_strided_slice %9 {offsets = [1, 0, 0], sizes = [16, 16, 384], strides = [1, 1, 1]} : vector<18x16x384xbf16> to vector<16x16x384xbf16>
    %18 = vector.shape_cast %17 : vector<16x16x384xbf16> to vector<256x384xbf16>
    %c1 = arith.constant 1 : index
    %c0_9 = arith.constant 0 : index
    %c0_10 = arith.constant 0 : index
    %19 = vector.load %arg2[%c1, %c0_9, %c0_10] : memref<3x384x128xbf16, #tpu.memory_space<vmem>>, vector<1x384x128xbf16>
    %20 = vector.shape_cast %19 : vector<1x384x128xbf16> to vector<384x128xbf16>
    %cst_11 = arith.constant dense<0.000000e+00> : vector<256x128xf32>
    %21 = tpu.matmul %18, %20, %cst_11 {dimension_numbers = #tpu.dot_dimension_numbers<[1], [0], [0], [1], [0, 0, 1, 1], [], []>} : vector<256x384xbf16>, vector<384x128xbf16>, vector<256x128xf32> -> vector<256x128xf32>
    %22 = arith.addf %16, %21 : vector<256x128xf32>
    %23 = vector.extract_strided_slice %9 {offsets = [2, 0, 0], sizes = [16, 16, 384], strides = [1, 1, 1]} : vector<18x16x384xbf16> to vector<16x16x384xbf16>
    %24 = vector.shape_cast %23 : vector<16x16x384xbf16> to vector<256x384xbf16>
    %c2 = arith.constant 2 : index
    %c0_12 = arith.constant 0 : index
    %c0_13 = arith.constant 0 : index
    %25 = vector.load %arg2[%c2, %c0_12, %c0_13] : memref<3x384x128xbf16, #tpu.memory_space<vmem>>, vector<1x384x128xbf16>
    %26 = vector.shape_cast %25 : vector<1x384x128xbf16> to vector<384x128xbf16>
    %cst_14 = arith.constant dense<0.000000e+00> : vector<256x128xf32>
    %27 = tpu.matmul %24, %26, %cst_14 {dimension_numbers = #tpu.dot_dimension_numbers<[1], [0], [0], [1], [0, 0, 1, 1], [], []>} : vector<256x384xbf16>, vector<384x128xbf16>, vector<256x128xf32> -> vector<256x128xf32>
    %28 = arith.addf %22, %27 : vector<256x128xf32>
    %c0_15 = arith.constant 0 : index
    %c0_16 = arith.constant 0 : index
    %29 = vector.load %arg3[%c0_15, %c0_16] : memref<1x128xf32, #tpu.memory_space<vmem>>, vector<1x128xf32>
    %30 = vector.broadcast %29 : vector<1x128xf32> to vector<256x128xf32>
    %31 = arith.mulf %28, %30 : vector<256x128xf32>
    %c0_17 = arith.constant 0 : index
    %c0_18 = arith.constant 0 : index
    %32 = vector.load %arg4[%c0_17, %c0_18] : memref<1x128xf32, #tpu.memory_space<vmem>>, vector<1x128xf32>
    %33 = vector.broadcast %32 : vector<1x128xf32> to vector<256x128xf32>
    %34 = arith.addf %31, %33 : vector<256x128xf32>
    %cst_19 = arith.constant 0.000000e+00 : f32
    %35 = vector.broadcast %cst_19 : f32 to vector<256x128xf32>
    %36 = arith.maximumf %34, %35 : vector<256x128xf32>
    %37 = vector.shape_cast %36 : vector<256x128xf32> to vector<16x16x128xf32>
    %38 = arith.truncf %37 : vector<16x16x128xf32> to vector<16x16x128xbf16>
    %cst_20 = arith.constant 0.000000e+00 : bf16
    %39 = vector.broadcast %cst_20 : bf16 to vector<16x1x128xbf16>
    %40 = tpu.concatenate %39, %38, %39 in 1 : vector<16x1x128xbf16>, vector<16x16x128xbf16>, vector<16x1x128xbf16> -> vector<16x18x128xbf16>
    %cst_21 = arith.constant 0.000000e+00 : bf16
    %41 = vector.broadcast %cst_21 : bf16 to vector<1x18x128xbf16>
    %42 = tpu.concatenate %41, %40, %41 in 0 : vector<1x18x128xbf16>, vector<16x18x128xbf16>, vector<1x18x128xbf16> -> vector<18x18x128xbf16>
    %43 = vector.extract_strided_slice %42 {offsets = [0, 0, 0], sizes = [18, 16, 128], strides = [1, 1, 1]} : vector<18x18x128xbf16> to vector<18x16x128xbf16>
    %44 = vector.extract_strided_slice %42 {offsets = [0, 1, 0], sizes = [18, 16, 128], strides = [1, 1, 1]} : vector<18x18x128xbf16> to vector<18x16x128xbf16>
    %45 = vector.extract_strided_slice %42 {offsets = [0, 2, 0], sizes = [18, 16, 128], strides = [1, 1, 1]} : vector<18x18x128xbf16> to vector<18x16x128xbf16>
    %46 = tpu.concatenate %43, %44, %45 in 2 : vector<18x16x128xbf16>, vector<18x16x128xbf16>, vector<18x16x128xbf16> -> vector<18x16x384xbf16>
    %cst_22 = arith.constant 0.000000e+00 : f32
    %47 = vector.broadcast %cst_22 : f32 to vector<256x128xf32>
    %48 = vector.extract_strided_slice %46 {offsets = [0, 0, 0], sizes = [16, 16, 384], strides = [1, 1, 1]} : vector<18x16x384xbf16> to vector<16x16x384xbf16>
    %49 = vector.shape_cast %48 : vector<16x16x384xbf16> to vector<256x384xbf16>
    %c0_23 = arith.constant 0 : index
    %c0_24 = arith.constant 0 : index
    %c0_25 = arith.constant 0 : index
    %50 = vector.load %arg5[%c0_23, %c0_24, %c0_25] : memref<3x384x128xbf16, #tpu.memory_space<vmem>>, vector<1x384x128xbf16>
    %51 = vector.shape_cast %50 : vector<1x384x128xbf16> to vector<384x128xbf16>
    %cst_26 = arith.constant dense<0.000000e+00> : vector<256x128xf32>
    %52 = tpu.matmul %49, %51, %cst_26 {dimension_numbers = #tpu.dot_dimension_numbers<[1], [0], [0], [1], [0, 0, 1, 1], [], []>} : vector<256x384xbf16>, vector<384x128xbf16>, vector<256x128xf32> -> vector<256x128xf32>
    %53 = arith.addf %47, %52 : vector<256x128xf32>
    %54 = vector.extract_strided_slice %46 {offsets = [1, 0, 0], sizes = [16, 16, 384], strides = [1, 1, 1]} : vector<18x16x384xbf16> to vector<16x16x384xbf16>
    %55 = vector.shape_cast %54 : vector<16x16x384xbf16> to vector<256x384xbf16>
    %c1_27 = arith.constant 1 : index
    %c0_28 = arith.constant 0 : index
    %c0_29 = arith.constant 0 : index
    %56 = vector.load %arg5[%c1_27, %c0_28, %c0_29] : memref<3x384x128xbf16, #tpu.memory_space<vmem>>, vector<1x384x128xbf16>
    %57 = vector.shape_cast %56 : vector<1x384x128xbf16> to vector<384x128xbf16>
    %cst_30 = arith.constant dense<0.000000e+00> : vector<256x128xf32>
    %58 = tpu.matmul %55, %57, %cst_30 {dimension_numbers = #tpu.dot_dimension_numbers<[1], [0], [0], [1], [0, 0, 1, 1], [], []>} : vector<256x384xbf16>, vector<384x128xbf16>, vector<256x128xf32> -> vector<256x128xf32>
    %59 = arith.addf %53, %58 : vector<256x128xf32>
    %60 = vector.extract_strided_slice %46 {offsets = [2, 0, 0], sizes = [16, 16, 384], strides = [1, 1, 1]} : vector<18x16x384xbf16> to vector<16x16x384xbf16>
    %61 = vector.shape_cast %60 : vector<16x16x384xbf16> to vector<256x384xbf16>
    %c2_31 = arith.constant 2 : index
    %c0_32 = arith.constant 0 : index
    %c0_33 = arith.constant 0 : index
    %62 = vector.load %arg5[%c2_31, %c0_32, %c0_33] : memref<3x384x128xbf16, #tpu.memory_space<vmem>>, vector<1x384x128xbf16>
    %63 = vector.shape_cast %62 : vector<1x384x128xbf16> to vector<384x128xbf16>
    %cst_34 = arith.constant dense<0.000000e+00> : vector<256x128xf32>
    %64 = tpu.matmul %61, %63, %cst_34 {dimension_numbers = #tpu.dot_dimension_numbers<[1], [0], [0], [1], [0, 0, 1, 1], [], []>} : vector<256x384xbf16>, vector<384x128xbf16>, vector<256x128xf32> -> vector<256x128xf32>
    %65 = arith.addf %59, %64 : vector<256x128xf32>
    %66 = arith.extf %1 : vector<16x16x128xbf16> to vector<16x16x128xf32>
    %67 = vector.shape_cast %66 : vector<16x16x128xf32> to vector<256x128xf32>
    %c0_35 = arith.constant 0 : index
    %c0_36 = arith.constant 0 : index
    %68 = vector.load %arg6[%c0_35, %c0_36] : memref<1x128xf32, #tpu.memory_space<vmem>>, vector<1x128xf32>
    %69 = vector.broadcast %68 : vector<1x128xf32> to vector<256x128xf32>
    %70 = arith.mulf %65, %69 : vector<256x128xf32>
    %c0_37 = arith.constant 0 : index
    %c0_38 = arith.constant 0 : index
    %71 = vector.load %arg7[%c0_37, %c0_38] : memref<1x128xf32, #tpu.memory_space<vmem>>, vector<1x128xf32>
    %72 = vector.broadcast %71 : vector<1x128xf32> to vector<256x128xf32>
    %73 = arith.addf %70, %72 : vector<256x128xf32>
    %74 = arith.addf %73, %67 : vector<256x128xf32>
    %cst_39 = arith.constant 0.000000e+00 : f32
    %75 = vector.broadcast %cst_39 : f32 to vector<256x128xf32>
    %76 = arith.maximumf %74, %75 : vector<256x128xf32>
    %77 = vector.shape_cast %76 : vector<256x128xf32> to vector<16x16x128xf32>
    %c0_40 = arith.constant 0 : index
    %c0_41 = arith.constant 0 : index
    %c0_42 = arith.constant 0 : index
    %c0_43 = arith.constant 0 : index
    %78 = vector.load %arg8[%c0_40, %c0_41, %c0_42, %c0_43] : memref<1x16x16x128xf32, #tpu.memory_space<vmem>>, vector<1x16x16x128xf32>
    %79 = vector.shape_cast %78 : vector<1x16x16x128xf32> to vector<16x16x128xf32>
    %80 = vector.shape_cast %77 : vector<16x16x128xf32> to vector<1x16x16x128xf32>
    tpu.vector_store %arg8[%c0_40, %c0_41, %c0_42, %c0_43], %80 {strides = array<i32>} : memref<1x16x16x128xf32, #tpu.memory_space<vmem>>, vector<1x16x16x128xf32>,
    return
  }
  func.func @transform_0(%arg0: i32) -> (i32, i32, i32, i32) {
    %c0_i32 = arith.constant 0 : i32
    %c0_i32_0 = arith.constant 0 : i32
    %c0_i32_1 = arith.constant 0 : i32
    %c0_i32_2 = arith.constant 0 : i32
    return %arg0, %c0_i32, %c0_i32_0, %c0_i32_1 : i32, i32, i32, i32
  }
  func.func @transform_1(%arg0: i32) -> (i32, i32, i32) {
    %c0_i32 = arith.constant 0 : i32
    %c0_i32_0 = arith.constant 0 : i32
    %c0_i32_1 = arith.constant 0 : i32
    %c0_i32_2 = arith.constant 0 : i32
    return %c0_i32, %c0_i32_0, %c0_i32_1 : i32, i32, i32
  }
  func.func @transform_2(%arg0: i32) -> (i32, i32) {
    %c0_i32 = arith.constant 0 : i32
    %c0_i32_0 = arith.constant 0 : i32
    %c0_i32_1 = arith.constant 0 : i32
    return %c0_i32, %c0_i32_0 : i32, i32
  }
  func.func @transform_3(%arg0: i32) -> (i32, i32) {
    %c0_i32 = arith.constant 0 : i32
    %c0_i32_0 = arith.constant 0 : i32
    %c0_i32_1 = arith.constant 0 : i32
    return %c0_i32, %c0_i32_0 : i32, i32
  }
  func.func @transform_4(%arg0: i32) -> (i32, i32, i32) {
    %c0_i32 = arith.constant 0 : i32
    %c0_i32_0 = arith.constant 0 : i32
    %c0_i32_1 = arith.constant 0 : i32
    %c0_i32_2 = arith.constant 0 : i32
    return %c0_i32, %c0_i32_0, %c0_i32_1 : i32, i32, i32
  }
  func.func @transform_5(%arg0: i32) -> (i32, i32) {
    %c0_i32 = arith.constant 0 : i32
    %c0_i32_0 = arith.constant 0 : i32
    %c0_i32_1 = arith.constant 0 : i32
    return %c0_i32, %c0_i32_0 : i32, i32
  }
  func.func @transform_6(%arg0: i32) -> (i32, i32) {
    %c0_i32 = arith.constant 0 : i32
    %c0_i32_0 = arith.constant 0 : i32
    %c0_i32_1 = arith.constant 0 : i32
    return %c0_i32, %c0_i32_0 : i32, i32
  }
  func.func @transform_7(%arg0: i32) -> (i32, i32, i32, i32) {
    %c0_i32 = arith.constant 0 : i32
    %c0_i32_0 = arith.constant 0 : i32
    %c0_i32_1 = arith.constant 0 : i32
    %c0_i32_2 = arith.constant 0 : i32
    return %arg0, %c0_i32, %c0_i32_0, %c0_i32_1 : i32, i32, i32, i32
  }
}

</mosaic_0001>

<llo_original>
// kernel: basic_block_forward.1
$region0: #{basic_block_forward.1}
  #allocation0 [shape = 'u32[]', space=smem, size = 0x4, offset = 0x4, fixed_abs, tag = 'smem constant byte address 0x4 - core index']
  #allocation1 [shape = 'u32[72,128]{1,0:T(1,128)}', space=vmem, size = 0x9000, scoped, tag = 'internal scratch']
  %s0 = inlined_call_operand.vmem [shape: bf16[2,16,16,128], index: 0, kind: input, shape index: {}]
  %s1 = inlined_call_operand.vmem [shape: bf16[3,384,128], index: 1, kind: input, shape index: {}]
  %s2 = inlined_call_operand.vmem [shape: f32[1,128], index: 2, kind: input, shape index: {}]
  %s3 = inlined_call_operand.vmem [shape: f32[1,128], index: 3, kind: input, shape index: {}]
  %s4 = inlined_call_operand.vmem [shape: bf16[3,384,128], index: 4, kind: input, shape index: {}]
  %s5 = inlined_call_operand.vmem [shape: f32[1,128], index: 5, kind: input, shape index: {}]
  %s6 = inlined_call_operand.vmem [shape: f32[1,128], index: 6, kind: input, shape index: {}]
  %s7 = inlined_call_operand.vmem [shape: f32[2,16,16,128], index: 7, kind: output, shape index: {}]
  %s8 = sld [smem:[#allocation0]]
  $region61: #{basic_block_forward.1} parent=0
    _
  %s10 = ssub.s32 1, %s8
  %s11 = scalar_select 0, %s10, %s8
  loop: start=0, step=1, limit=4
  $region2: #{basic_block_forward.1} parent=0 // loop_pre_header
    _
  $region3: #{basic_block_forward.1} parent=0 // loop_header
    %s13 = sphi 0, %s17
    %p14 = scmp.ge.s32.totalorder %s13, 4
    %s23 = sphi 0, %s25
    %s26 = sphi 0, %s23
    %s27 = sphi 0, %s26
    %s43 = sphi 0, %s27
    %s47 = sphi 0, %s47
    %s49 = sphi 0, %s47
    %s50 = sphi 0, %s49
    %s64 = sphi 0, %s50
    %s68 = sphi 0, %s68
    %s70 = sphi 0, %s68
    %s71 = sphi 0, %s70
    %s85 = sphi 0, %s71
    %s89 = sphi 0, %s89
    %s91 = sphi 0, %s89
    %s92 = sphi 0, %s91
    %s106 = sphi 0, %s92
    %s110 = sphi 0, %s110
    %s112 = sphi 0, %s110
    %s113 = sphi 0, %s112
    %s127 = sphi 0, %s113
    %s131 = sphi 0, %s131
    %s133 = sphi 0, %s131
    %s134 = sphi 0, %s133
    %s148 = sphi 0, %s134
    %s152 = sphi 0, %s152
    %s154 = sphi 0, %s152
    %s155 = sphi 0, %s154
    %s169 = sphi 0, %s155
    %s175 = sphi 0, %s177
    %s178 = sphi 0, %s175
    %s179 = sphi 0, %s178
    %s195 = sphi 0, %s179
  $region4: #{basic_block_forward.1} parent=0 // loop_header_branch
    %16 = sbr.rel (%p14) target = $region8
  $region5: #{basic_block_forward.1} parent=0 // loop_body
    %s18 = ssub.s32 %s13, 1
    %s19 = ssub.s32 %s13, 2
    %s20 = sadd.s32 %s13, 1
    %s21 = ssub.s32 %s13, %s20
    %p22 = scmp.eq.s32.totalorder %s21, 0
    %s24 = sadd.s32 %s23, 1
    %s25 = scalar_select %p22, %s23, %s24
    %p28 = pneg %p22
    %p29 = scmp.eq.s32.totalorder %s13, 1
    %p30 = por %p28, %p29
    %p31 = scmp.ne.s32.totalorder %s23, %s26
    %p32 = scmp.eq.s32.totalorder %s13, 0
    %p33 = por %p31, %p32
    %p34 = scmp.ne.s32.totalorder %s23, %s26
    %p35 = scmp.eq.s32.totalorder %s18, 1
    %p36 = por %p34, %p35
    %p37 = scmp.ne.s32.totalorder %s26, %s27
    %p38 = scmp.eq.s32.totalorder %s18, 0
    %p39 = por %p37, %p38
    %p40 = scmp.ne.s32.totalorder %s26, %s27
    %p41 = scmp.eq.s32.totalorder %s19, 1
    %p42 = por %p40, %p41
    %p44 = scmp.ne.s32.totalorder %s27, %s43
    %p45 = scmp.eq.s32.totalorder %s19, 0
    %p46 = por %p44, %p45
    %s48 = sadd.s32 %s47, 1
    %p51 = scmp.eq.s32.totalorder %s13, 1
    %p52 = scmp.ne.s32.totalorder %s47, %s49
    %p53 = scmp.eq.s32.totalorder %s13, 0
    %p54 = por %p52, %p53
    %p55 = scmp.ne.s32.totalorder %s47, %s49
    %p56 = scmp.eq.s32.totalorder %s18, 1
    %p57 = por %p55, %p56
    %p58 = scmp.ne.s32.totalorder %s49, %s50
    %p59 = scmp.eq.s32.totalorder %s18, 0
    %p60 = por %p58, %p59
    %p61 = scmp.ne.s32.totalorder %s49, %s50
    %p62 = scmp.eq.s32.totalorder %s19, 1
    %p63 = por %p61, %p62
    %p65 = scmp.ne.s32.totalorder %s50, %s64
    %p66 = scmp.eq.s32.totalorder %s19, 0
    %p67 = por %p65, %p66
    %s69 = sadd.s32 %s68, 1
    %p72 = scmp.eq.s32.totalorder %s13, 1
    %p73 = scmp.ne.s32.totalorder %s68, %s70
    %p74 = scmp.eq.s32.totalorder %s13, 0
    %p75 = por %p73, %p74
    %p76 = scmp.ne.s32.totalorder %s68, %s70
    %p77 = scmp.eq.s32.totalorder %s18, 1
    %p78 = por %p76, %p77
    %p79 = scmp.ne.s32.totalorder %s70, %s71
    %p80 = scmp.eq.s32.totalorder %s18, 0
    %p81 = por %p79, %p80
    %p82 = scmp.ne.s32.totalorder %s70, %s71
    %p83 = scmp.eq.s32.totalorder %s19, 1
    %p84 = por %p82, %p83
    %p86 = scmp.ne.s32.totalorder %s71, %s85
    %p87 = scmp.eq.s32.totalorder %s19, 0
    %p88 = por %p86, %p87
    %s90 = sadd.s32 %s89, 1
    %p93 = scmp.eq.s32.totalorder %s13, 1
    %p94 = scmp.ne.s32.totalorder %s89, %s91
    %p95 = scmp.eq.s32.totalorder %s13, 0
    %p96 = por %p94, %p95
    %p97 = scmp.ne.s32.totalorder %s89, %s91
    %p98 = scmp.eq.s32.totalorder %s18, 1
    %p99 = por %p97, %p98
    %p100 = scmp.ne.s32.totalorder %s91, %s92
    %p101 = scmp.eq.s32.totalorder %s18, 0
    %p102 = por %p100, %p101
    %p103 = scmp.ne.s32.totalorder %s91, %s92
    %p104 = scmp.eq.s32.totalorder %s19, 1
    %p105 = por %p103, %p104
    %p107 = scmp.ne.s32.totalorder %s92, %s106
    %p108 = scmp.eq.s32.totalorder %s19, 0
    %p109 = por %p107, %p108
    %s111 = sadd.s32 %s110, 1
    %p114 = scmp.eq.s32.totalorder %s13, 1
    %p115 = scmp.ne.s32.totalorder %s110, %s112
    %p116 = scmp.eq.s32.totalorder %s13, 0
    %p117 = por %p115, %p116
    %p118 = scmp.ne.s32.totalorder %s110, %s112
    %p119 = scmp.eq.s32.totalorder %s18, 1
    %p120 = por %p118, %p119
    %p121 = scmp.ne.s32.totalorder %s112, %s113
    %p122 = scmp.eq.s32.totalorder %s18, 0
    %p123 = por %p121, %p122
    %p124 = scmp.ne.s32.totalorder %s112, %s113
    %p125 = scmp.eq.s32.totalorder %s19, 1
    %p126 = por %p124, %p125
    %p128 = scmp.ne.s32.totalorder %s113, %s127
    %p129 = scmp.eq.s32.totalorder %s19, 0
    %p130 = por %p128, %p129
    %s132 = sadd.s32 %s131, 1
    %p135 = scmp.eq.s32.totalorder %s13, 1
    %p136 = scmp.ne.s32.totalorder %s131, %s133
    %p137 = scmp.eq.s32.totalorder %s13, 0
    %p138 = por %p136, %p137
    %p139 = scmp.ne.s32.totalorder %s131, %s133
    %p140 = scmp.eq.s32.totalorder %s18, 1
    %p141 = por %p139, %p140
    %p142 = scmp.ne.s32.totalorder %s133, %s134
    %p143 = scmp.eq.s32.totalorder %s18, 0
    %p144 = por %p142, %p143
    %p145 = scmp.ne.s32.totalorder %s133, %s134
    %p146 = scmp.eq.s32.totalorder %s19, 1
    %p147 = por %p145, %p146
    %p149 = scmp.ne.s32.totalorder %s134, %s148
    %p150 = scmp.eq.s32.totalorder %s19, 0
    %p151 = por %p149, %p150
    %s153 = sadd.s32 %s152, 1
    %p156 = scmp.eq.s32.totalorder %s13, 1
    %p157 = scmp.ne.s32.totalorder %s152, %s154
    %p158 = scmp.eq.s32.totalorder %s13, 0
    %p159 = por %p157, %p158
    %p160 = scmp.ne.s32.totalorder %s152, %s154
    %p161 = scmp.eq.s32.totalorder %s18, 1
    %p162 = por %p160, %p161
    %p163 = scmp.ne.s32.totalorder %s154, %s155
    %p164 = scmp.eq.s32.totalorder %s18, 0
    %p165 = por %p163, %p164
    %p166 = scmp.ne.s32.totalorder %s154, %s155
    %p167 = scmp.eq.s32.totalorder %s19, 1
    %p168 = por %p166, %p167
    %p170 = scmp.ne.s32.totalorder %s155, %s169
    %p171 = scmp.eq.s32.totalorder %s19, 0
    %p172 = por %p170, %p171
    %s173 = ssub.s32 %s13, %s20
    %p174 = scmp.eq.s32.totalorder %s173, 0
    %s176 = sadd.s32 %s175, 1
    %s177 = scalar_select %p174, %s175, %s176
    %p180 = pneg %p174
    %p181 = scmp.eq.s32.totalorder %s13, 1
    %p182 = por %p180, %p181
    %p183 = scmp.ne.s32.totalorder %s175, %s178
    %p184 = scmp.eq.s32.totalorder %s13, 0
    %p185 = por %p183, %p184
    %p186 = scmp.ne.s32.totalorder %s175, %s178
    %p187 = scmp.eq.s32.totalorder %s18, 1
    %p188 = por %p186, %p187
    %p189 = scmp.ne.s32.totalorder %s178, %s179
    %p190 = scmp.eq.s32.totalorder %s18, 0
    %p191 = por %p189, %p190
    %p192 = scmp.ne.s32.totalorder %s178, %s179
    %p193 = scmp.eq.s32.totalorder %s19, 1
    %p194 = por %p192, %p193
    %p196 = scmp.ne.s32.totalorder %s179, %s195
    %p197 = scmp.eq.s32.totalorder %s19, 0
    %p198 = por %p196, %p197
    %p199 = scmp.le.s32.totalorder 1, %s13
    %p200 = scmp.lt.s32.totalorder %s13, 3
    %p201 = pnand %p199, %p200
    %p202 = pneg %p201
    // Predicated region
    $region9: #{basic_block_forward.1} parent=5 // pred_check
      _
    $region10: #{basic_block_forward.1} parent=5 // pred_check_branch
      %204 = sbr.rel (%p201) target = $region12
    $region11: #{basic_block_forward.1} parent=5 // pred_region
      %s205 = ssub.s32 %s13, 1
      // Predicated region
      $region13: #{basic_block_forward.1} parent=11 // pred_check
        %p206 = pneg %p60
      $region14: #{basic_block_forward.1} parent=11 // pred_check_branch
        %208 = sbr.rel (%p206) target = $region16
      $region15: #{basic_block_forward.1} parent=11 // pred_region
        _
      $region16: #{basic_block_forward.1} parent=11 // pred_fallthru
        _
      // Predicated region
      $region17: #{basic_block_forward.1} parent=11 // pred_check
        %p209 = pneg %p81
      $region18: #{basic_block_forward.1} parent=11 // pred_check_branch
        %211 = sbr.rel (%p209) target = $region20
      $region19: #{basic_block_forward.1} parent=11 // pred_region
        _
      $region20: #{basic_block_forward.1} parent=11 // pred_fallthru
        _
      // Predicated region
      $region21: #{basic_block_forward.1} parent=11 // pred_check
        %p212 = pneg %p102
      $region22: #{basic_block_forward.1} parent=11 // pred_check_branch
        %214 = sbr.rel (%p212) target = $region24
      $region23: #{basic_block_forward.1} parent=11 // pred_region
        _
      $region24: #{basic_block_forward.1} parent=11 // pred_fallthru
        _
      // Predicated region
      $region25: #{basic_block_forward.1} parent=11 // pred_check
        %p215 = pneg %p123
      $region26: #{basic_block_forward.1} parent=11 // pred_check_branch
        %217 = sbr.rel (%p215) target = $region28
      $region27: #{basic_block_forward.1} parent=11 // pred_region
        _
      $region28: #{basic_block_forward.1} parent=11 // pred_fallthru
        _
      // Predicated region
      $region29: #{basic_block_forward.1} parent=11 // pred_check
        %p218 = pneg %p144
      $region30: #{basic_block_forward.1} parent=11 // pred_check_branch
        %220 = sbr.rel (%p218) target = $region32
      $region31: #{basic_block_forward.1} parent=11 // pred_region
        _
      $region32: #{basic_block_forward.1} parent=11 // pred_fallthru
        _
      // Predicated region
      $region33: #{basic_block_forward.1} parent=11 // pred_check
        %p221 = pneg %p165
      $region34: #{basic_block_forward.1} parent=11 // pred_check_branch
        %223 = sbr.rel (%p221) target = $region36
      $region35: #{basic_block_forward.1} parent=11 // pred_region
        _
      $region36: #{basic_block_forward.1} parent=11 // pred_fallthru
        _
    $region12: #{basic_block_forward.1} parent=5 // pred_fallthru
      _
    %p224 = scmp.lt.s32.totalorder %s13, 2
    // Predicated region
    $region37: #{basic_block_forward.1} parent=5 // pred_check
      %p225 = pneg %p224
    $region38: #{basic_block_forward.1} parent=5 // pred_check_branch
      %227 = sbr.rel (%p225) target = $region40
    $region39: #{basic_block_forward.1} parent=5 // pred_region
      // Predicated region
      $region41: #{basic_block_forward.1} parent=39 // pred_check
        %p228 = pneg %p33
      $region42: #{basic_block_forward.1} parent=39 // pred_check_branch
        %230 = sbr.rel (%p228) target = $region44
      $region43: #{basic_block_forward.1} parent=39 // pred_region
        %p231 = scmp.lt.s32.totalorder %s13, 1
        %s232 = scalar_select %p231, %s13, 1
        %s233 = smul.addr %s232, 32
        %s234 = smul.addr %s233, 4
        %s235 = scalar_lea.vmem %s0, %s234
      $region44: #{basic_block_forward.1} parent=39 // pred_fallthru
        _
    $region40: #{basic_block_forward.1} parent=5 // pred_fallthru
      _
    %p236 = scmp.le.s32.totalorder 1, %s13
    %p237 = scmp.lt.s32.totalorder %s13, 3
    %p238 = pnand %p236, %p237
    %p239 = pneg %p238
    // Predicated region
    $region45: #{basic_block_forward.1} parent=5 // pred_check
      _
    $region46: #{basic_block_forward.1} parent=5 // pred_check_branch
      %241 = sbr.rel (%p238) target = $region48
    $region47: #{basic_block_forward.1} parent=5 // pred_region
      %s242 = ssub.s32 %s13, 1
      %p243 = scmp.lt.s32.totalorder %s18, 1
      %s244 = scalar_select %p243, %s18, 1
      %s245 = smul.addr %s244, 32
      %s246 = smul.addr %s245, 4
      %s247 = scalar_lea.vmem %s0, %s246
      %p248 = pneg %p39
      %p249 = pneg %p36
      %p250 = pneg %p60
      %p251 = pneg %p57
      %p252 = pneg %p81
      %p253 = pneg %p78
      %p254 = pneg %p102
      %p255 = pneg %p99
      %p256 = pneg %p123
      %p257 = pneg %p120
      %p258 = pneg %p144
      %p259 = pneg %p141
      %p260 = pneg %p165
      %p261 = pneg %p162
      %p262 = pneg %p191
      %p263 = pneg %p188
      %p264 = scmp.lt.s32.totalorder %s18, 1
      %s265 = scalar_select %p264, %s18, 1
      %s266 = smul.addr %s265, 32
      %s267 = smul.addr %s266, 8
      %s268 = scalar_lea.vmem %s7, %s267
      %p269 = scmp.lt.s32.totalorder %s18, 1
      %s270 = scalar_select %p269, %s18, 1
      %s271 = smul.addr %s270, 32
      %s272 = smul.addr %s271, 4
      %s273 = scalar_lea.vmem %s0, %s272
      %p274 = scmp.lt.s32.totalorder %s18, 1
      %s275 = scalar_select %p274, %s18, 1
      %s276 = smul.addr %s275, 32
      %s277 = smul.addr %s276, 8
      %s278 = scalar_lea.vmem %s7, %s277
      %v280 = vld [vmem:[%s273] sm:$0xf]
      %v281 = vld [vmem:[%s273 + $0x4] sm:$0xf]
      %v282 = vld [vmem:[%s273 + $0x8] sm:$0xf]
      %v283 = vld [vmem:[%s273 + $0xc] sm:$0xf]
      %v284 = vld [vmem:[%s273 + $0x10] sm:$0xf]
      %v285 = vld [vmem:[%s273 + $0x14] sm:$0xf]
      %v286 = vld [vmem:[%s273 + $0x18] sm:$0xf]
      %v287 = vld [vmem:[%s273 + $0x1c] sm:$0xf]
      %v288 = vld [vmem:[%s273 + $0x20] sm:$0xf]
      %v289 = vld [vmem:[%s273 + $0x24] sm:$0xf]
      %v290 = vld [vmem:[%s273 + $0x28] sm:$0xf]
      %v291 = vld [vmem:[%s273 + $0x2c] sm:$0xf]
      %v292 = vld [vmem:[%s273 + $0x30] sm:$0xf]
      %v293 = vld [vmem:[%s273 + $0x34] sm:$0xf]
      %v294 = vld [vmem:[%s273 + $0x38] sm:$0xf]
      %v295 = vld [vmem:[%s273 + $0x3c] sm:$0xf]
      %v296 = vld [vmem:[%s273 + $0x40] sm:$0xf]
      %v297 = vld [vmem:[%s273 + $0x44] sm:$0xf]
      %v298 = vld [vmem:[%s273 + $0x48] sm:$0xf]
      %v299 = vld [vmem:[%s273 + $0x4c] sm:$0xf]
      %v300 = vld [vmem:[%s273 + $0x50] sm:$0xf]
      %v301 = vld [vmem:[%s273 + $0x54] sm:$0xf]
      %v302 = vld [vmem:[%s273 + $0x58] sm:$0xf]
      %v303 = vld [vmem:[%s273 + $0x5c] sm:$0xf]
      %v304 = vld [vmem:[%s273 + $0x60] sm:$0xf]
      %v305 = vld [vmem:[%s273 + $0x64] sm:$0xf]
      %v306 = vld [vmem:[%s273 + $0x68] sm:$0xf]
      %v307 = vld [vmem:[%s273 + $0x6c] sm:$0xf]
      %v308 = vld [vmem:[%s273 + $0x70] sm:$0xf]
      %v309 = vld [vmem:[%s273 + $0x74] sm:$0xf]
      %v310 = vld [vmem:[%s273 + $0x78] sm:$0xf]
      %v311 = vld [vmem:[%s273 + $0x7c] sm:$0xf]
      %v344 = vunpack.c.l.b16 %v280
      %v345 = vunpack.c.l.b16 %v281
      %v346 = vunpack.c.l.b16 %v282
      %v347 = vunpack.c.l.b16 %v283
      %v348 = vunpack.c.l.b16 %v284
      %v349 = vunpack.c.l.b16 %v285
      %v350 = vunpack.c.l.b16 %v286
      %v351 = vunpack.c.l.b16 %v287
      %v352 = vunpack.c.l.b16 %v288
      %v353 = vunpack.c.l.b16 %v289
      %v354 = vunpack.c.l.b16 %v290
      %v355 = vunpack.c.l.b16 %v291
      %v356 = vunpack.c.l.b16 %v292
      %v357 = vunpack.c.l.b16 %v293
      %v358 = vunpack.c.l.b16 %v294
      %v359 = vunpack.c.l.b16 %v295
      %v360 = vunpack.c.l.b16 %v296
      %v361 = vunpack.c.l.b16 %v297
      %v362 = vunpack.c.l.b16 %v298
      %v363 = vunpack.c.l.b16 %v299
      %v364 = vunpack.c.l.b16 %v300
      %v365 = vunpack.c.l.b16 %v301
      %v366 = vunpack.c.l.b16 %v302
      %v367 = vunpack.c.l.b16 %v303
      %v368 = vunpack.c.l.b16 %v304
      %v369 = vunpack.c.l.b16 %v305
      %v370 = vunpack.c.l.b16 %v306
      %v371 = vunpack.c.l.b16 %v307
      %v372 = vunpack.c.l.b16 %v308
      %v373 = vunpack.c.l.b16 %v309
      %v374 = vunpack.c.l.b16 %v310
      %v375 = vunpack.c.l.b16 %v311
      %v376 = vpack.c.b16 %v345, %v344
      %v377 = vpack.c.b16 %v347, %v346
      %v378 = vpack.c.b16 %v349, %v348
      %v379 = vpack.c.b16 %v351, %v350
      %v380 = vpack.c.b16 %v353, %v352
      %v381 = vpack.c.b16 %v355, %v354
      %v382 = vpack.c.b16 %v357, %v356
      %v383 = vpack.c.b16 %v359, %v358
      %v384 = vpack.c.b16 %v361, %v360
      %v385 = vpack.c.b16 %v363, %v362
      %v386 = vpack.c.b16 %v365, %v364
      %v387 = vpack.c.b16 %v367, %v366
      %v388 = vpack.c.b16 %v369, %v368
      %v389 = vpack.c.b16 %v371, %v370
      %v390 = vpack.c.b16 %v373, %v372
      %v391 = vpack.c.b16 %v375, %v374
      %v393 = vshrl.u32 %v376, 16
      %v395 = vrot.slane %v393, 7
      %v396 = vshll.u32 %v376, 16
      %v398 = vor.u32 %v395, %v396
      %v400 = vshrl.u32 %v377, 16
      %v402 = vrot.slane %v400, 7
      %v403 = vshll.u32 %v377, 16
      %v405 = vor.u32 %v402, %v403
      %v407 = vshrl.u32 %v378, 16
      %v409 = vrot.slane %v407, 7
      %v410 = vshll.u32 %v378, 16
      %v412 = vor.u32 %v409, %v410
      %v414 = vshrl.u32 %v379, 16
      %v416 = vrot.slane %v414, 7
      %v417 = vshll.u32 %v379, 16
      %v419 = vor.u32 %v416, %v417
      %v421 = vshrl.u32 %v380, 16
      %v423 = vrot.slane %v421, 7
      %v424 = vshll.u32 %v380, 16
      %v426 = vor.u32 %v423, %v424
      %v428 = vshrl.u32 %v381, 16
      %v430 = vrot.slane %v428, 7
      %v431 = vshll.u32 %v381, 16
      %v433 = vor.u32 %v430, %v431
      %v435 = vshrl.u32 %v382, 16
      %v437 = vrot.slane %v435, 7
      %v438 = vshll.u32 %v382, 16
      %v440 = vor.u32 %v437, %v438
      %v442 = vshrl.u32 %v383, 16
      %v444 = vrot.slane %v442, 7
      %v445 = vshll.u32 %v383, 16
      %v447 = vor.u32 %v444, %v445
      %v449 = vshrl.u32 %v384, 16
      %v451 = vrot.slane %v449, 7
      %v452 = vshll.u32 %v384, 16
      %v454 = vor.u32 %v451, %v452
      %v456 = vshrl.u32 %v385, 16
      %v458 = vrot.slane %v456, 7
      %v459 = vshll.u32 %v385, 16
      %v461 = vor.u32 %v458, %v459
      %v463 = vshrl.u32 %v386, 16
      %v465 = vrot.slane %v463, 7
      %v466 = vshll.u32 %v386, 16
      %v468 = vor.u32 %v465, %v466
      %v470 = vshrl.u32 %v387, 16
      %v472 = vrot.slane %v470, 7
      %v473 = vshll.u32 %v387, 16
      %v475 = vor.u32 %v472, %v473
      %v477 = vshrl.u32 %v388, 16
      %v479 = vrot.slane %v477, 7
      %v480 = vshll.u32 %v388, 16
      %v482 = vor.u32 %v479, %v480
      %v484 = vshrl.u32 %v389, 16
      %v486 = vrot.slane %v484, 7
      %v487 = vshll.u32 %v389, 16
      %v489 = vor.u32 %v486, %v487
      %v491 = vshrl.u32 %v390, 16
      %v493 = vrot.slane %v491, 7
      %v494 = vshll.u32 %v390, 16
      %v496 = vor.u32 %v493, %v494
      %v498 = vshrl.u32 %v391, 16
      %v500 = vrot.slane %v498, 7
      %v501 = vshll.u32 %v391, 16
      %v503 = vor.u32 %v500, %v501
      %vm536 = vcmask 1040384
      %vm537 = vsmask.f32 256
      %vm538 = vmand %vm536, %vm537
      %v539 = vsel %vm538, 0, %v398
      %v540 = vsel %vm538, 0, %v405
      %v541 = vsel %vm538, 0, %v412
      %v542 = vsel %vm538, 0, %v419
      %v543 = vsel %vm538, 0, %v426
      %v544 = vsel %vm538, 0, %v433
      %v545 = vsel %vm538, 0, %v440
      %v546 = vsel %vm538, 0, %v447
      %v547 = vsel %vm538, 0, %v454
      %v548 = vsel %vm538, 0, %v461
      %v549 = vsel %vm538, 0, %v468
      %v550 = vsel %vm538, 0, %v475
      %v551 = vsel %vm538, 0, %v482
      %v552 = vsel %vm538, 0, %v489
      %v553 = vsel %vm538, 0, %v496
      %v554 = vsel %vm538, 0, %v503
      %v555 = vsel %vm538, %v395, 0
      %v556 = vsel %vm538, %v402, 0
      %v557 = vsel %vm538, %v409, 0
      %v558 = vsel %vm538, %v416, 0
      %v559 = vsel %vm538, %v423, 0
      %v560 = vsel %vm538, %v430, 0
      %v561 = vsel %vm538, %v437, 0
      %v562 = vsel %vm538, %v444, 0
      %v563 = vsel %vm538, %v451, 0
      %v564 = vsel %vm538, %v458, 0
      %v565 = vsel %vm538, %v465, 0
      %v566 = vsel %vm538, %v472, 0
      %v567 = vsel %vm538, %v479, 0
      %v568 = vsel %vm538, %v486, 0
      %v569 = vsel %vm538, %v493, 0
      %v570 = vsel %vm538, %v500, 0
      %vm571 = vsmask.f32 7424
      %v573 = vshrl.u32 0, 16
      %v575 = vshll.u32 0, 16
      %v577 = vrot.slane %v575, 1
      %v578 = vor.u32 %v573, %v577
      %v579 = vsel %vm571, %v578, %v577
      %v581 = vshrl.u32 %v539, 16
      %v583 = vshll.u32 %v539, 16
      %v585 = vrot.slane %v583, 1
      %v586 = vor.u32 %v581, %v585
      %v588 = vshll.u32 %v555, 16
      %v590 = vrot.slane %v588, 1
      %v591 = vsel %vm571, %v586, %v590
      %v593 = vshrl.u32 %v540, 16
      %v595 = vshll.u32 %v540, 16
      %v597 = vrot.slane %v595, 1
      %v598 = vor.u32 %v593, %v597
      %v600 = vshll.u32 %v556, 16
      %v602 = vrot.slane %v600, 1
      %v603 = vsel %vm571, %v598, %v602
      %v605 = vshrl.u32 %v541, 16
      %v607 = vshll.u32 %v541, 16
      %v609 = vrot.slane %v607, 1
      %v610 = vor.u32 %v605, %v609
      %v612 = vshll.u32 %v557, 16
      %v614 = vrot.slane %v612, 1
      %v615 = vsel %vm571, %v610, %v614
      %v617 = vshrl.u32 %v542, 16
      %v619 = vshll.u32 %v542, 16
      %v621 = vrot.slane %v619, 1
      %v622 = vor.u32 %v617, %v621
      %v624 = vshll.u32 %v558, 16
      %v626 = vrot.slane %v624, 1
      %v627 = vsel %vm571, %v622, %v626
      %v629 = vshrl.u32 %v543, 16
      %v631 = vshll.u32 %v543, 16
      %v633 = vrot.slane %v631, 1
      %v634 = vor.u32 %v629, %v633
      %v636 = vshll.u32 %v559, 16
      %v638 = vrot.slane %v636, 1
      %v639 = vsel %vm571, %v634, %v638
      %v641 = vshrl.u32 %v544, 16
      %v643 = vshll.u32 %v544, 16
      %v645 = vrot.slane %v643, 1
      %v646 = vor.u32 %v641, %v645
      %v648 = vshll.u32 %v560, 16
      %v650 = vrot.slane %v648, 1
      %v651 = vsel %vm571, %v646, %v650
      %v653 = vshrl.u32 %v545, 16
      %v655 = vshll.u32 %v545, 16
      %v657 = vrot.slane %v655, 1
      %v658 = vor.u32 %v653, %v657
      %v660 = vshll.u32 %v561, 16
      %v662 = vrot.slane %v660, 1
      %v663 = vsel %vm571, %v658, %v662
      %v665 = vshrl.u32 %v546, 16
      %v667 = vshll.u32 %v546, 16
      %v669 = vrot.slane %v667, 1
      %v670 = vor.u32 %v665, %v669
      %v672 = vshll.u32 %v562, 16
      %v674 = vrot.slane %v672, 1
      %v675 = vsel %vm571, %v670, %v674
      %v677 = vshrl.u32 %v547, 16
      %v679 = vshll.u32 %v547, 16
      %v681 = vrot.slane %v679, 1
      %v682 = vor.u32 %v677, %v681
      %v684 = vshll.u32 %v563, 16
      %v686 = vrot.slane %v684, 1
      %v687 = vsel %vm571, %v682, %v686
      %v689 = vshrl.u32 %v548, 16
      %v691 = vshll.u32 %v548, 16
      %v693 = vrot.slane %v691, 1
      %v694 = vor.u32 %v689, %v693
      %v696 = vshll.u32 %v564, 16
      %v698 = vrot.slane %v696, 1
      %v699 = vsel %vm571, %v694, %v698
      %v701 = vshrl.u32 %v549, 16
      %v703 = vshll.u32 %v549, 16
      %v705 = vrot.slane %v703, 1
      %v706 = vor.u32 %v701, %v705
      %v708 = vshll.u32 %v565, 16
      %v710 = vrot.slane %v708, 1
      %v711 = vsel %vm571, %v706, %v710
      %v713 = vshrl.u32 %v550, 16
      %v715 = vshll.u32 %v550, 16
      %v717 = vrot.slane %v715, 1
      %v718 = vor.u32 %v713, %v717
      %v720 = vshll.u32 %v566, 16
      %v722 = vrot.slane %v720, 1
      %v723 = vsel %vm571, %v718, %v722
      %v725 = vshrl.u32 %v551, 16
      %v727 = vshll.u32 %v551, 16
      %v729 = vrot.slane %v727, 1
      %v730 = vor.u32 %v725, %v729
      %v732 = vshll.u32 %v567, 16
      %v734 = vrot.slane %v732, 1
      %v735 = vsel %vm571, %v730, %v734
      %v737 = vshrl.u32 %v552, 16
      %v739 = vshll.u32 %v552, 16
      %v741 = vrot.slane %v739, 1
      %v742 = vor.u32 %v737, %v741
      %v744 = vshll.u32 %v568, 16
      %v746 = vrot.slane %v744, 1
      %v747 = vsel %vm571, %v742, %v746
      %v749 = vshrl.u32 %v553, 16
      %v751 = vshll.u32 %v553, 16
      %v753 = vrot.slane %v751, 1
      %v754 = vor.u32 %v749, %v753
      %v756 = vshll.u32 %v569, 16
      %v758 = vrot.slane %v756, 1
      %v759 = vsel %vm571, %v754, %v758
      %v761 = vshrl.u32 %v554, 16
      %v763 = vshll.u32 %v554, 16
      %v765 = vrot.slane %v763, 1
      %v766 = vor.u32 %v761, %v765
      %v768 = vshll.u32 %v570, 16
      %v770 = vrot.slane %v768, 1
      %v771 = vsel %vm571, %v766, %v770
      %vm822 = vcmask 1046528
      %v823 = vrot.slane 0, 1
      %v824 = vsel %vm822, %v823, %v823
      %v825 = vrot.slane %v539, 1
      %v826 = vrot.slane %v555, 1
      %v827 = vsel %vm822, %v825, %v826
      %v828 = vrot.slane %v540, 1
      %v829 = vrot.slane %v556, 1
      %v830 = vsel %vm822, %v828, %v829
      %v831 = vrot.slane %v541, 1
      %v832 = vrot.slane %v557, 1
      %v833 = vsel %vm822, %v831, %v832
      %v834 = vrot.slane %v542, 1
      %v835 = vrot.slane %v558, 1
      %v836 = vsel %vm822, %v834, %v835
      %v837 = vrot.slane %v543, 1
      %v838 = vrot.slane %v559, 1
      %v839 = vsel %vm822, %v837, %v838
      %v840 = vrot.slane %v544, 1
      %v841 = vrot.slane %v560, 1
      %v842 = vsel %vm822, %v840, %v841
      %v843 = vrot.slane %v545, 1
      %v844 = vrot.slane %v561, 1
      %v845 = vsel %vm822, %v843, %v844
      %v846 = vrot.slane %v546, 1
      %v847 = vrot.slane %v562, 1
      %v848 = vsel %vm822, %v846, %v847
      %v849 = vrot.slane %v547, 1
      %v850 = vrot.slane %v563, 1
      %v851 = vsel %vm822, %v849, %v850
      %v852 = vrot.slane %v548, 1
      %v853 = vrot.slane %v564, 1
      %v854 = vsel %vm822, %v852, %v853
      %v855 = vrot.slane %v549, 1
      %v856 = vrot.slane %v565, 1
      %v857 = vsel %vm822, %v855, %v856
      %v858 = vrot.slane %v550, 1
      %v859 = vrot.slane %v566, 1
      %v860 = vsel %vm822, %v858, %v859
      %v861 = vrot.slane %v551, 1
      %v862 = vrot.slane %v567, 1
      %v863 = vsel %vm822, %v861, %v862
      %v864 = vrot.slane %v552, 1
      %v865 = vrot.slane %v568, 1
      %v866 = vsel %vm822, %v864, %v865
      %v867 = vrot.slane %v553, 1
      %v868 = vrot.slane %v569, 1
      %v869 = vsel %vm822, %v867, %v868
      %v870 = vrot.slane %v554, 1
      %v871 = vrot.slane %v570, 1
      %v872 = vsel %vm822, %v870, %v871
      %v890 = vld [vmem:[%s1] sm:$0xf]
      %v891 = vld [vmem:[%s1 + $0x4] sm:$0xf]
      %v892 = vld [vmem:[%s1 + $0x8] sm:$0xf]
      %v893 = vld [vmem:[%s1 + $0xc] sm:$0xf]
      %v894 = vld [vmem:[%s1 + $0x10] sm:$0xf]
      %v895 = vld [vmem:[%s1 + $0x14] sm:$0xf]
      %v896 = vld [vmem:[%s1 + $0x18] sm:$0xf]
      %v897 = vld [vmem:[%s1 + $0x1c] sm:$0xf]
      %v898 = vld [vmem:[%s1 + $0x20] sm:$0xf]
      %v899 = vld [vmem:[%s1 + $0x24] sm:$0xf]
      %v900 = vld [vmem:[%s1 + $0x28] sm:$0xf]
      %v901 = vld [vmem:[%s1 + $0x2c] sm:$0xf]
      %v902 = vld [vmem:[%s1 + $0x30] sm:$0xf]
      %v903 = vld [vmem:[%s1 + $0x34] sm:$0xf]
      %v904 = vld [vmem:[%s1 + $0x38] sm:$0xf]
      %v905 = vld [vmem:[%s1 + $0x3c] sm:$0xf]
      %v906 = vld [vmem:[%s1 + $0x40] sm:$0xf]
      %v907 = vld [vmem:[%s1 + $0x44] sm:$0xf]
      %v908 = vld [vmem:[%s1 + $0x48] sm:$0xf]
      %v909 = vld [vmem:[%s1 + $0x4c] sm:$0xf]
      %v910 = vld [vmem:[%s1 + $0x50] sm:$0xf]
      %v911 = vld [vmem:[%s1 + $0x54] sm:$0xf]
      %v912 = vld [vmem:[%s1 + $0x58] sm:$0xf]
      %v913 = vld [vmem:[%s1 + $0x5c] sm:$0xf]
      %v914 = vld [vmem:[%s1 + $0x60] sm:$0xf]
      %v915 = vld [vmem:[%s1 + $0x64] sm:$0xf]
      %v916 = vld [vmem:[%s1 + $0x68] sm:$0xf]
      %v917 = vld [vmem:[%s1 + $0x6c] sm:$0xf]
      %v918 = vld [vmem:[%s1 + $0x70] sm:$0xf]
      %v919 = vld [vmem:[%s1 + $0x74] sm:$0xf]
      %v920 = vld [vmem:[%s1 + $0x78] sm:$0xf]
      %v921 = vld [vmem:[%s1 + $0x7c] sm:$0xf]
      %v922 = vld [vmem:[%s1 + $0x80] sm:$0xf]
      %v923 = vld [vmem:[%s1 + $0x84] sm:$0xf]
      %v924 = vld [vmem:[%s1 + $0x88] sm:$0xf]
      %v925 = vld [vmem:[%s1 + $0x8c] sm:$0xf]
      %v926 = vld [vmem:[%s1 + $0x90] sm:$0xf]
      %v927 = vld [vmem:[%s1 + $0x94] sm:$0xf]
      %v928 = vld [vmem:[%s1 + $0x98] sm:$0xf]
      %v929 = vld [vmem:[%s1 + $0x9c] sm:$0xf]
      %v930 = vld [vmem:[%s1 + $0xa0] sm:$0xf]
      %v931 = vld [vmem:[%s1 + $0xa4] sm:$0xf]
      %v932 = vld [vmem:[%s1 + $0xa8] sm:$0xf]
      %v933 = vld [vmem:[%s1 + $0xac] sm:$0xf]
      %v934 = vld [vmem:[%s1 + $0xb0] sm:$0xf]
      %v935 = vld [vmem:[%s1 + $0xb4] sm:$0xf]
      %v936 = vld [vmem:[%s1 + $0xb8] sm:$0xf]
      %v937 = vld [vmem:[%s1 + $0xbc] sm:$0xf]
      %s938 = scalar_lea.vmem %s1, 192
      %v939 = vld [vmem:[%s938] sm:$0xf]
      %v940 = vld [vmem:[%s938 + $0x4] sm:$0xf]
      %v941 = vld [vmem:[%s938 + $0x8] sm:$0xf]
      %v942 = vld [vmem:[%s938 + $0xc] sm:$0xf]
      %v943 = vld [vmem:[%s938 + $0x10] sm:$0xf]
      %v944 = vld [vmem:[%s938 + $0x14] sm:$0xf]
      %v945 = vld [vmem:[%s938 + $0x18] sm:$0xf]
      %v946 = vld [vmem:[%s938 + $0x1c] sm:$0xf]
      %v947 = vld [vmem:[%s938 + $0x20] sm:$0xf]
      %v948 = vld [vmem:[%s938 + $0x24] sm:$0xf]
      %v949 = vld [vmem:[%s938 + $0x28] sm:$0xf]
      %v950 = vld [vmem:[%s938 + $0x2c] sm:$0xf]
      %v951 = vld [vmem:[%s938 + $0x30] sm:$0xf]
      %v952 = vld [vmem:[%s938 + $0x34] sm:$0xf]
      %v953 = vld [vmem:[%s938 + $0x38] sm:$0xf]
      %v954 = vld [vmem:[%s938 + $0x3c] sm:$0xf]
      %v955 = vld [vmem:[%s938 + $0x40] sm:$0xf]
      %v956 = vld [vmem:[%s938 + $0x44] sm:$0xf]
      %v957 = vld [vmem:[%s938 + $0x48] sm:$0xf]
      %v958 = vld [vmem:[%s938 + $0x4c] sm:$0xf]
      %v959 = vld [vmem:[%s938 + $0x50] sm:$0xf]
      %v960 = vld [vmem:[%s938 + $0x54] sm:$0xf]
      %v961 = vld [vmem:[%s938 + $0x58] sm:$0xf]
      %v962 = vld [vmem:[%s938 + $0x5c] sm:$0xf]
      %v963 = vld [vmem:[%s938 + $0x60] sm:$0xf]
      %v964 = vld [vmem:[%s938 + $0x64] sm:$0xf]
      %v965 = vld [vmem:[%s938 + $0x68] sm:$0xf]
      %v966 = vld [vmem:[%s938 + $0x6c] sm:$0xf]
      %v967 = vld [vmem:[%s938 + $0x70] sm:$0xf]
      %v968 = vld [vmem:[%s938 + $0x74] sm:$0xf]
      %v969 = vld [vmem:[%s938 + $0x78] sm:$0xf]
      %v970 = vld [vmem:[%s938 + $0x7c] sm:$0xf]
      %v971 = vld [vmem:[%s938 + $0x80] sm:$0xf]
      %v972 = vld [vmem:[%s938 + $0x84] sm:$0xf]
      %v973 = vld [vmem:[%s938 + $0x88] sm:$0xf]
      %v974 = vld [vmem:[%s938 + $0x8c] sm:$0xf]
      %v975 = vld [vmem:[%s938 + $0x90] sm:$0xf]
      %v976 = vld [vmem:[%s938 + $0x94] sm:$0xf]
      %v977 = vld [vmem:[%s938 + $0x98] sm:$0xf]
      %v978 = vld [vmem:[%s938 + $0x9c] sm:$0xf]
      %v979 = vld [vmem:[%s938 + $0xa0] sm:$0xf]
      %v980 = vld [vmem:[%s938 + $0xa4] sm:$0xf]
      %v981 = vld [vmem:[%s938 + $0xa8] sm:$0xf]
      %v982 = vld [vmem:[%s938 + $0xac] sm:$0xf]
      %v983 = vld [vmem:[%s938 + $0xb0] sm:$0xf]
      %v984 = vld [vmem:[%s938 + $0xb4] sm:$0xf]
      %v985 = vld [vmem:[%s938 + $0xb8] sm:$0xf]
      %v986 = vld [vmem:[%s938 + $0xbc] sm:$0xf]
      %v1035 = vunpack.c.l.b16 %v939
      %v1036 = vunpack.c.l.b16 %v940
      %v1037 = vunpack.c.l.b16 %v941
      %v1038 = vunpack.c.l.b16 %v942
      %v1039 = vunpack.c.l.b16 %v943
      %v1040 = vunpack.c.l.b16 %v944
      %v1041 = vunpack.c.l.b16 %v945
      %v1042 = vunpack.c.l.b16 %v946
      %v1043 = vunpack.c.l.b16 %v947
      %v1044 = vunpack.c.l.b16 %v948
      %v1045 = vunpack.c.l.b16 %v949
      %v1046 = vunpack.c.l.b16 %v950
      %v1047 = vunpack.c.l.b16 %v951
      %v1048 = vunpack.c.l.b16 %v952
      %v1049 = vunpack.c.l.b16 %v953
      %v1050 = vunpack.c.l.b16 %v954
      %v1051 = vunpack.c.l.b16 %v955
      %v1052 = vunpack.c.l.b16 %v956
      %v1053 = vunpack.c.l.b16 %v957
      %v1054 = vunpack.c.l.b16 %v958
      %v1055 = vunpack.c.l.b16 %v959
      %v1056 = vunpack.c.l.b16 %v960
      %v1057 = vunpack.c.l.b16 %v961
      %v1058 = vunpack.c.l.b16 %v962
      %v1059 = vunpack.c.l.b16 %v963
      %v1060 = vunpack.c.l.b16 %v964
      %v1061 = vunpack.c.l.b16 %v965
      %v1062 = vunpack.c.l.b16 %v966
      %v1063 = vunpack.c.l.b16 %v967
      %v1064 = vunpack.c.l.b16 %v968
      %v1065 = vunpack.c.l.b16 %v969
      %v1066 = vunpack.c.l.b16 %v970
      %v1067 = vunpack.c.l.b16 %v971
      %v1068 = vunpack.c.l.b16 %v972
      %v1069 = vunpack.c.l.b16 %v973
      %v1070 = vunpack.c.l.b16 %v974
      %v1071 = vunpack.c.l.b16 %v975
      %v1072 = vunpack.c.l.b16 %v976
      %v1073 = vunpack.c.l.b16 %v977
      %v1074 = vunpack.c.l.b16 %v978
      %v1075 = vunpack.c.l.b16 %v979
      %v1076 = vunpack.c.l.b16 %v980
      %v1077 = vunpack.c.l.b16 %v981
      %v1078 = vunpack.c.l.b16 %v982
      %v1079 = vunpack.c.l.b16 %v983
      %v1080 = vunpack.c.l.b16 %v984
      %v1081 = vunpack.c.l.b16 %v985
      %v1082 = vunpack.c.l.b16 %v986
      %v1083 = vpack.c.b16 %v1036, %v1035
      %v1084 = vpack.c.b16 %v1038, %v1037
      %v1085 = vpack.c.b16 %v1040, %v1039
      %v1086 = vpack.c.b16 %v1042, %v1041
      %v1087 = vpack.c.b16 %v1044, %v1043
      %v1088 = vpack.c.b16 %v1046, %v1045
      %v1089 = vpack.c.b16 %v1048, %v1047
      %v1090 = vpack.c.b16 %v1050, %v1049
      %v1091 = vpack.c.b16 %v1052, %v1051
      %v1092 = vpack.c.b16 %v1054, %v1053
      %v1093 = vpack.c.b16 %v1056, %v1055
      %v1094 = vpack.c.b16 %v1058, %v1057
      %v1095 = vpack.c.b16 %v1060, %v1059
      %v1096 = vpack.c.b16 %v1062, %v1061
      %v1097 = vpack.c.b16 %v1064, %v1063
      %v1098 = vpack.c.b16 %v1066, %v1065
      %v1099 = vpack.c.b16 %v1068, %v1067
      %v1100 = vpack.c.b16 %v1070, %v1069
      %v1101 = vpack.c.b16 %v1072, %v1071
      %v1102 = vpack.c.b16 %v1074, %v1073
      %v1103 = vpack.c.b16 %v1076, %v1075
      %v1104 = vpack.c.b16 %v1078, %v1077
      %v1105 = vpack.c.b16 %v1080, %v1079
      %v1106 = vpack.c.b16 %v1082, %v1081
      %1131 = vmatpush.bf16.msra.mxu0 %v1090
      %1132 = vmatpush.bf16.msra.mxu0 %v1089
      %1133 = vmatpush.bf16.msra.mxu0 %v1088
      %1134 = vmatpush.bf16.msra.mxu0 %v1087
      %1135 = vmatpush.bf16.msra.mxu0 %v1086
      %1136 = vmatpush.bf16.msra.mxu0 %v1085
      %1137 = vmatpush.bf16.msra.mxu0 %v1084
      %1138 = vmatpush.bf16.msra.mxu0 %v1083
      %1139 = vmatmul.bf16.gmra.mxu0 %v539
      %v1140 = vpop.f32.mrf.mxu0
      %v1141 = vadd.f32 0.0, %v1140
      %v1142 = vpop.f32.mrf.mxu0
      %v1143 = vadd.f32 0.0, %v1142
      %1144 = vmatmul.bf16.gmra.mxu0 %v540
      %v1145 = vpop.f32.mrf.mxu0
      %v1146 = vadd.f32 0.0, %v1145
      %v1147 = vpop.f32.mrf.mxu0
      %v1148 = vadd.f32 0.0, %v1147
      %1149 = vmatmul.bf16.gmra.mxu0 %v541
      %v1150 = vpop.f32.mrf.mxu0
      %v1151 = vadd.f32 0.0, %v1150
      %v1152 = vpop.f32.mrf.mxu0
      %v1153 = vadd.f32 0.0, %v1152
      %1154 = vmatmul.bf16.gmra.mxu0 %v542
      %v1155 = vpop.f32.mrf.mxu0
      %v1156 = vadd.f32 0.0, %v1155
      %v1157 = vpop.f32.mrf.mxu0
      %v1158 = vadd.f32 0.0, %v1157
      %1159 = vmatmul.bf16.gmra.mxu0 %v543
      %v1160 = vpop.f32.mrf.mxu0
      %v1161 = vadd.f32 0.0, %v1160
      %v1162 = vpop.f32.mrf.mxu0
      %v1163 = vadd.f32 0.0, %v1162
      %1164 = vmatmul.bf16.gmra.mxu0 %v544
      %v1165 = vpop.f32.mrf.mxu0
      %v1166 = vadd.f32 0.0, %v1165
      %v1167 = vpop.f32.mrf.mxu0
      %v1168 = vadd.f32 0.0, %v1167
      %1169 = vmatmul.bf16.gmra.mxu0 %v545
      %v1170 = vpop.f32.mrf.mxu0
      %v1171 = vadd.f32 0.0, %v1170
      %v1172 = vpop.f32.mrf.mxu0
      %v1173 = vadd.f32 0.0, %v1172
      %1174 = vmatmul.bf16.gmra.mxu0 %v546
      %v1175 = vpop.f32.mrf.mxu0
      %v1176 = vadd.f32 0.0, %v1175
      %v1177 = vpop.f32.mrf.mxu0
      %v1178 = vadd.f32 0.0, %v1177
      %1179 = vmatmul.bf16.gmra.mxu0 %v547
      %v1180 = vpop.f32.mrf.mxu0
      %v1181 = vadd.f32 0.0, %v1180
      %v1182 = vpop.f32.mrf.mxu0
      %v1183 = vadd.f32 0.0, %v1182
      %1184 = vmatmul.bf16.gmra.mxu0 %v548
      %v1185 = vpop.f32.mrf.mxu0
      %v1186 = vadd.f32 0.0, %v1185
      %v1187 = vpop.f32.mrf.mxu0
      %v1188 = vadd.f32 0.0, %v1187
      %1189 = vmatmul.bf16.gmra.mxu0 %v549
      %v1190 = vpop.f32.mrf.mxu0
      %v1191 = vadd.f32 0.0, %v1190
      %v1192 = vpop.f32.mrf.mxu0
      %v1193 = vadd.f32 0.0, %v1192
      %1194 = vmatmul.bf16.gmra.mxu0 %v550
      %v1195 = vpop.f32.mrf.mxu0
      %v1196 = vadd.f32 0.0, %v1195
      %v1197 = vpop.f32.mrf.mxu0
      %v1198 = vadd.f32 0.0, %v1197
      %1199 = vmatmul.bf16.gmra.mxu0 %v551
      %v1200 = vpop.f32.mrf.mxu0
      %v1201 = vadd.f32 0.0, %v1200
      %v1202 = vpop.f32.mrf.mxu0
      %v1203 = vadd.f32 0.0, %v1202
      %1204 = vmatmul.bf16.gmra.mxu0 %v552
      %v1205 = vpop.f32.mrf.mxu0
      %v1206 = vadd.f32 0.0, %v1205
      %v1207 = vpop.f32.mrf.mxu0
      %v1208 = vadd.f32 0.0, %v1207
      %1209 = vmatmul.bf16.gmra.mxu0 %v553
      %v1210 = vpop.f32.mrf.mxu0
      %v1211 = vadd.f32 0.0, %v1210
      %v1212 = vpop.f32.mrf.mxu0
      %v1213 = vadd.f32 0.0, %v1212
      %1214 = vmatmul.bf16.gmra.mxu0 %v554
      %v1215 = vpop.f32.mrf.mxu0
      %v1216 = vadd.f32 0.0, %v1215
      %v1217 = vpop.f32.mrf.mxu0
      %v1218 = vadd.f32 0.0, %v1217
      %1219 = vdwg.mxu0
      %1220 = vmatpush.bf16.msra.mxu0 %v1098
      %1221 = vmatpush.bf16.msra.mxu0 %v1097
      %1222 = vmatpush.bf16.msra.mxu0 %v1096
      %1223 = vmatpush.bf16.msra.mxu0 %v1095
      %1224 = vmatpush.bf16.msra.mxu0 %v1094
      %1225 = vmatpush.bf16.msra.mxu0 %v1093
      %1226 = vmatpush.bf16.msra.mxu0 %v1092
      %1227 = vmatpush.bf16.msra.mxu0 %v1091
      %1228 = vmatmul.bf16.gmra.mxu0 %v591
      %v1229 = vpop.f32.mrf.mxu0
      %v1230 = vadd.f32 %v1141, %v1229
      %v1231 = vpop.f32.mrf.mxu0
      %v1232 = vadd.f32 %v1143, %v1231
      %1233 = vmatmul.bf16.gmra.mxu0 %v603
      %v1234 = vpop.f32.mrf.mxu0
      %v1235 = vadd.f32 %v1146, %v1234
      %v1236 = vpop.f32.mrf.mxu0
      %v1237 = vadd.f32 %v1148, %v1236
      %1238 = vmatmul.bf16.gmra.mxu0 %v615
      %v1239 = vpop.f32.mrf.mxu0
      %v1240 = vadd.f32 %v1151, %v1239
      %v1241 = vpop.f32.mrf.mxu0
      %v1242 = vadd.f32 %v1153, %v1241
      %1243 = vmatmul.bf16.gmra.mxu0 %v627
      %v1244 = vpop.f32.mrf.mxu0
      %v1245 = vadd.f32 %v1156, %v1244
      %v1246 = vpop.f32.mrf.mxu0
      %v1247 = vadd.f32 %v1158, %v1246
      %1248 = vmatmul.bf16.gmra.mxu0 %v639
      %v1249 = vpop.f32.mrf.mxu0
      %v1250 = vadd.f32 %v1161, %v1249
      %v1251 = vpop.f32.mrf.mxu0
      %v1252 = vadd.f32 %v1163, %v1251
      %1253 = vmatmul.bf16.gmra.mxu0 %v651
      %v1254 = vpop.f32.mrf.mxu0
      %v1255 = vadd.f32 %v1166, %v1254
      %v1256 = vpop.f32.mrf.mxu0
      %v1257 = vadd.f32 %v1168, %v1256
      %1258 = vmatmul.bf16.gmra.mxu0 %v663
      %v1259 = vpop.f32.mrf.mxu0
      %v1260 = vadd.f32 %v1171, %v1259
      %v1261 = vpop.f32.mrf.mxu0
      %v1262 = vadd.f32 %v1173, %v1261
      %1263 = vmatmul.bf16.gmra.mxu0 %v675
      %v1264 = vpop.f32.mrf.mxu0
      %v1265 = vadd.f32 %v1176, %v1264
      %v1266 = vpop.f32.mrf.mxu0
      %v1267 = vadd.f32 %v1178, %v1266
      %1268 = vmatmul.bf16.gmra.mxu0 %v687
      %v1269 = vpop.f32.mrf.mxu0
      %v1270 = vadd.f32 %v1181, %v1269
      %v1271 = vpop.f32.mrf.mxu0
      %v1272 = vadd.f32 %v1183, %v1271
      %1273 = vmatmul.bf16.gmra.mxu0 %v699
      %v1274 = vpop.f32.mrf.mxu0
      %v1275 = vadd.f32 %v1186, %v1274
      %v1276 = vpop.f32.mrf.mxu0
      %v1277 = vadd.f32 %v1188, %v1276
      %1278 = vmatmul.bf16.gmra.mxu0 %v711
      %v1279 = vpop.f32.mrf.mxu0
      %v1280 = vadd.f32 %v1191, %v1279
      %v1281 = vpop.f32.mrf.mxu0
      %v1282 = vadd.f32 %v1193, %v1281
      %1283 = vmatmul.bf16.gmra.mxu0 %v723
      %v1284 = vpop.f32.mrf.mxu0
      %v1285 = vadd.f32 %v1196, %v1284
      %v1286 = vpop.f32.mrf.mxu0
      %v1287 = vadd.f32 %v1198, %v1286
      %1288 = vmatmul.bf16.gmra.mxu0 %v735
      %v1289 = vpop.f32.mrf.mxu0
      %v1290 = vadd.f32 %v1201, %v1289
      %v1291 = vpop.f32.mrf.mxu0
      %v1292 = vadd.f32 %v1203, %v1291
      %1293 = vmatmul.bf16.gmra.mxu0 %v747
      %v1294 = vpop.f32.mrf.mxu0
      %v1295 = vadd.f32 %v1206, %v1294
      %v1296 = vpop.f32.mrf.mxu0
      %v1297 = vadd.f32 %v1208, %v1296
      %1298 = vmatmul.bf16.gmra.mxu0 %v759
      %v1299 = vpop.f32.mrf.mxu0
      %v1300 = vadd.f32 %v1211, %v1299
      %v1301 = vpop.f32.mrf.mxu0
      %v1302 = vadd.f32 %v1213, %v1301
      %1303 = vmatmul.bf16.gmra.mxu0 %v771
      %v1304 = vpop.f32.mrf.mxu0
      %v1305 = vadd.f32 %v1216, %v1304
      %v1306 = vpop.f32.mrf.mxu0
      %v1307 = vadd.f32 %v1218, %v1306
      %1308 = vdwg.mxu0
      %1309 = vmatpush.bf16.msra.mxu0 %v1106
      %1310 = vmatpush.bf16.msra.mxu0 %v1105
      %1311 = vmatpush.bf16.msra.mxu0 %v1104
      %1312 = vmatpush.bf16.msra.mxu0 %v1103
      %1313 = vmatpush.bf16.msra.mxu0 %v1102
      %1314 = vmatpush.bf16.msra.mxu0 %v1101
      %1315 = vmatpush.bf16.msra.mxu0 %v1100
      %1316 = vmatpush.bf16.msra.mxu0 %v1099
      %1317 = vmatmul.bf16.gmra.mxu0 %v827
      %v1318 = vpop.f32.mrf.mxu0
      %v1319 = vadd.f32 %v1230, %v1318
      %v1320 = vpop.f32.mrf.mxu0
      %v1321 = vadd.f32 %v1232, %v1320
      %1322 = vmatmul.bf16.gmra.mxu0 %v830
      %v1323 = vpop.f32.mrf.mxu0
      %v1324 = vadd.f32 %v1235, %v1323
      %v1325 = vpop.f32.mrf.mxu0
      %v1326 = vadd.f32 %v1237, %v1325
      %1327 = vmatmul.bf16.gmra.mxu0 %v833
      %v1328 = vpop.f32.mrf.mxu0
      %v1329 = vadd.f32 %v1240, %v1328
      %v1330 = vpop.f32.mrf.mxu0
      %v1331 = vadd.f32 %v1242, %v1330
      %1332 = vmatmul.bf16.gmra.mxu0 %v836
      %v1333 = vpop.f32.mrf.mxu0
      %v1334 = vadd.f32 %v1245, %v1333
      %v1335 = vpop.f32.mrf.mxu0
      %v1336 = vadd.f32 %v1247, %v1335
      %1337 = vmatmul.bf16.gmra.mxu0 %v839
      %v1338 = vpop.f32.mrf.mxu0
      %v1339 = vadd.f32 %v1250, %v1338
      %v1340 = vpop.f32.mrf.mxu0
      %v1341 = vadd.f32 %v1252, %v1340
      %1342 = vmatmul.bf16.gmra.mxu0 %v842
      %v1343 = vpop.f32.mrf.mxu0
      %v1344 = vadd.f32 %v1255, %v1343
      %v1345 = vpop.f32.mrf.mxu0
      %v1346 = vadd.f32 %v1257, %v1345
      %1347 = vmatmul.bf16.gmra.mxu0 %v845
      %v1348 = vpop.f32.mrf.mxu0
      %v1349 = vadd.f32 %v1260, %v1348
      %v1350 = vpop.f32.mrf.mxu0
      %v1351 = vadd.f32 %v1262, %v1350
      %1352 = vmatmul.bf16.gmra.mxu0 %v848
      %v1353 = vpop.f32.mrf.mxu0
      %v1354 = vadd.f32 %v1265, %v1353
      %v1355 = vpop.f32.mrf.mxu0
      %v1356 = vadd.f32 %v1267, %v1355
      %1357 = vmatmul.bf16.gmra.mxu0 %v851
      %v1358 = vpop.f32.mrf.mxu0
      %v1359 = vadd.f32 %v1270, %v1358
      %v1360 = vpop.f32.mrf.mxu0
      %v1361 = vadd.f32 %v1272, %v1360
      %1362 = vmatmul.bf16.gmra.mxu0 %v854
      %v1363 = vpop.f32.mrf.mxu0
      %v1364 = vadd.f32 %v1275, %v1363
      %v1365 = vpop.f32.mrf.mxu0
      %v1366 = vadd.f32 %v1277, %v1365
      %1367 = vmatmul.bf16.gmra.mxu0 %v857
      %v1368 = vpop.f32.mrf.mxu0
      %v1369 = vadd.f32 %v1280, %v1368
      %v1370 = vpop.f32.mrf.mxu0
      %v1371 = vadd.f32 %v1282, %v1370
      %1372 = vmatmul.bf16.gmra.mxu0 %v860
      %v1373 = vpop.f32.mrf.mxu0
      %v1374 = vadd.f32 %v1285, %v1373
      %v1375 = vpop.f32.mrf.mxu0
      %v1376 = vadd.f32 %v1287, %v1375
      %1377 = vmatmul.bf16.gmra.mxu0 %v863
      %v1378 = vpop.f32.mrf.mxu0
      %v1379 = vadd.f32 %v1290, %v1378
      %v1380 = vpop.f32.mrf.mxu0
      %v1381 = vadd.f32 %v1292, %v1380
      %1382 = vmatmul.bf16.gmra.mxu0 %v866
      %v1383 = vpop.f32.mrf.mxu0
      %v1384 = vadd.f32 %v1295, %v1383
      %v1385 = vpop.f32.mrf.mxu0
      %v1386 = vadd.f32 %v1297, %v1385
      %1387 = vmatmul.bf16.gmra.mxu0 %v869
      %v1388 = vpop.f32.mrf.mxu0
      %v1389 = vadd.f32 %v1300, %v1388
      %v1390 = vpop.f32.mrf.mxu0
      %v1391 = vadd.f32 %v1302, %v1390
      %1392 = vmatmul.bf16.gmra.mxu0 %v872
      %v1393 = vpop.f32.mrf.mxu0
      %v1394 = vadd.f32 %v1305, %v1393
      %v1395 = vpop.f32.mrf.mxu0
      %v1396 = vadd.f32 %v1307, %v1395
      %1397 = vdwg.mxu0
      %v1446 = vunpack.c.l.b16 %v890
      %v1447 = vunpack.c.l.b16 %v891
      %v1448 = vunpack.c.l.b16 %v892
      %v1449 = vunpack.c.l.b16 %v893
      %v1450 = vunpack.c.l.b16 %v894
      %v1451 = vunpack.c.l.b16 %v895
      %v1452 = vunpack.c.l.b16 %v896
      %v1453 = vunpack.c.l.b16 %v897
      %v1454 = vunpack.c.l.b16 %v898
      %v1455 = vunpack.c.l.b16 %v899
      %v1456 = vunpack.c.l.b16 %v900
      %v1457 = vunpack.c.l.b16 %v901
      %v1458 = vunpack.c.l.b16 %v902
      %v1459 = vunpack.c.l.b16 %v903
      %v1460 = vunpack.c.l.b16 %v904
      %v1461 = vunpack.c.l.b16 %v905
      %v1462 = vunpack.c.l.b16 %v906
      %v1463 = vunpack.c.l.b16 %v907
      %v1464 = vunpack.c.l.b16 %v908
      %v1465 = vunpack.c.l.b16 %v909
      %v1466 = vunpack.c.l.b16 %v910
      %v1467 = vunpack.c.l.b16 %v911
      %v1468 = vunpack.c.l.b16 %v912
      %v1469 = vunpack.c.l.b16 %v913
      %v1470 = vunpack.c.l.b16 %v914
      %v1471 = vunpack.c.l.b16 %v915
      %v1472 = vunpack.c.l.b16 %v916
      %v1473 = vunpack.c.l.b16 %v917
      %v1474 = vunpack.c.l.b16 %v918
      %v1475 = vunpack.c.l.b16 %v919
      %v1476 = vunpack.c.l.b16 %v920
      %v1477 = vunpack.c.l.b16 %v921
      %v1478 = vunpack.c.l.b16 %v922
      %v1479 = vunpack.c.l.b16 %v923
      %v1480 = vunpack.c.l.b16 %v924
      %v1481 = vunpack.c.l.b16 %v925
      %v1482 = vunpack.c.l.b16 %v926
      %v1483 = vunpack.c.l.b16 %v927
      %v1484 = vunpack.c.l.b16 %v928
      %v1485 = vunpack.c.l.b16 %v929
      %v1486 = vunpack.c.l.b16 %v930
      %v1487 = vunpack.c.l.b16 %v931
      %v1488 = vunpack.c.l.b16 %v932
      %v1489 = vunpack.c.l.b16 %v933
      %v1490 = vunpack.c.l.b16 %v934
      %v1491 = vunpack.c.l.b16 %v935
      %v1492 = vunpack.c.l.b16 %v936
      %v1493 = vunpack.c.l.b16 %v937
      %v1494 = vpack.c.b16 %v1447, %v1446
      %v1495 = vpack.c.b16 %v1449, %v1448
      %v1496 = vpack.c.b16 %v1451, %v1450
      %v1497 = vpack.c.b16 %v1453, %v1452
      %v1498 = vpack.c.b16 %v1455, %v1454
      %v1499 = vpack.c.b16 %v1457, %v1456
      %v1500 = vpack.c.b16 %v1459, %v1458
      %v1501 = vpack.c.b16 %v1461, %v1460
      %v1502 = vpack.c.b16 %v1463, %v1462
      %v1503 = vpack.c.b16 %v1465, %v1464
      %v1504 = vpack.c.b16 %v1467, %v1466
      %v1505 = vpack.c.b16 %v1469, %v1468
      %v1506 = vpack.c.b16 %v1471, %v1470
      %v1507 = vpack.c.b16 %v1473, %v1472
      %v1508 = vpack.c.b16 %v1475, %v1474
      %v1509 = vpack.c.b16 %v1477, %v1476
      %v1510 = vpack.c.b16 %v1479, %v1478
      %v1511 = vpack.c.b16 %v1481, %v1480
      %v1512 = vpack.c.b16 %v1483, %v1482
      %v1513 = vpack.c.b16 %v1485, %v1484
      %v1514 = vpack.c.b16 %v1487, %v1486
      %v1515 = vpack.c.b16 %v1489, %v1488
      %v1516 = vpack.c.b16 %v1491, %v1490
      %v1517 = vpack.c.b16 %v1493, %v1492
      %1542 = vmatpush.bf16.msra.mxu0 %v1501
      %1543 = vmatpush.bf16.msra.mxu0 %v1500
      %1544 = vmatpush.bf16.msra.mxu0 %v1499
      %1545 = vmatpush.bf16.msra.mxu0 %v1498
      %1546 = vmatpush.bf16.msra.mxu0 %v1497
      %1547 = vmatpush.bf16.msra.mxu0 %v1496
      %1548 = vmatpush.bf16.msra.mxu0 %v1495
      %1549 = vmatpush.bf16.msra.mxu0 %v1494
      %1550 = vmatmul.bf16.gmra.mxu0 0
      %v1551 = vpop.f32.mrf.mxu0
      %v1552 = vadd.f32 %v1319, %v1551
      %v1553 = vpop.f32.mrf.mxu0
      %v1554 = vadd.f32 %v1321, %v1553
      %1555 = vmatmul.bf16.gmra.mxu0 %v539
      %v1556 = vpop.f32.mrf.mxu0
      %v1557 = vadd.f32 %v1324, %v1556
      %v1558 = vpop.f32.mrf.mxu0
      %v1559 = vadd.f32 %v1326, %v1558
      %1560 = vmatmul.bf16.gmra.mxu0 %v540
      %v1561 = vpop.f32.mrf.mxu0
      %v1562 = vadd.f32 %v1329, %v1561
      %v1563 = vpop.f32.mrf.mxu0
      %v1564 = vadd.f32 %v1331, %v1563
      %1565 = vmatmul.bf16.gmra.mxu0 %v541
      %v1566 = vpop.f32.mrf.mxu0
      %v1567 = vadd.f32 %v1334, %v1566
      %v1568 = vpop.f32.mrf.mxu0
      %v1569 = vadd.f32 %v1336, %v1568
      %1570 = vmatmul.bf16.gmra.mxu0 %v542
      %v1571 = vpop.f32.mrf.mxu0
      %v1572 = vadd.f32 %v1339, %v1571
      %v1573 = vpop.f32.mrf.mxu0
      %v1574 = vadd.f32 %v1341, %v1573
      %1575 = vmatmul.bf16.gmra.mxu0 %v543
      %v1576 = vpop.f32.mrf.mxu0
      %v1577 = vadd.f32 %v1344, %v1576
      %v1578 = vpop.f32.mrf.mxu0
      %v1579 = vadd.f32 %v1346, %v1578
      %1580 = vmatmul.bf16.gmra.mxu0 %v544
      %v1581 = vpop.f32.mrf.mxu0
      %v1582 = vadd.f32 %v1349, %v1581
      %v1583 = vpop.f32.mrf.mxu0
      %v1584 = vadd.f32 %v1351, %v1583
      %1585 = vmatmul.bf16.gmra.mxu0 %v545
      %v1586 = vpop.f32.mrf.mxu0
      %v1587 = vadd.f32 %v1354, %v1586
      %v1588 = vpop.f32.mrf.mxu0
      %v1589 = vadd.f32 %v1356, %v1588
      %1590 = vmatmul.bf16.gmra.mxu0 %v546
      %v1591 = vpop.f32.mrf.mxu0
      %v1592 = vadd.f32 %v1359, %v1591
      %v1593 = vpop.f32.mrf.mxu0
      %v1594 = vadd.f32 %v1361, %v1593
      %1595 = vmatmul.bf16.gmra.mxu0 %v547
      %v1596 = vpop.f32.mrf.mxu0
      %v1597 = vadd.f32 %v1364, %v1596
      %v1598 = vpop.f32.mrf.mxu0
      %v1599 = vadd.f32 %v1366, %v1598
      %1600 = vmatmul.bf16.gmra.mxu0 %v548
      %v1601 = vpop.f32.mrf.mxu0
      %v1602 = vadd.f32 %v1369, %v1601
      %v1603 = vpop.f32.mrf.mxu0
      %v1604 = vadd.f32 %v1371, %v1603
      %1605 = vmatmul.bf16.gmra.mxu0 %v549
      %v1606 = vpop.f32.mrf.mxu0
      %v1607 = vadd.f32 %v1374, %v1606
      %v1608 = vpop.f32.mrf.mxu0
      %v1609 = vadd.f32 %v1376, %v1608
      %1610 = vmatmul.bf16.gmra.mxu0 %v550
      %v1611 = vpop.f32.mrf.mxu0
      %v1612 = vadd.f32 %v1379, %v1611
      %v1613 = vpop.f32.mrf.mxu0
      %v1614 = vadd.f32 %v1381, %v1613
      %1615 = vmatmul.bf16.gmra.mxu0 %v551
      %v1616 = vpop.f32.mrf.mxu0
      %v1617 = vadd.f32 %v1384, %v1616
      %v1618 = vpop.f32.mrf.mxu0
      %v1619 = vadd.f32 %v1386, %v1618
      %1620 = vmatmul.bf16.gmra.mxu0 %v552
      %v1621 = vpop.f32.mrf.mxu0
      %v1622 = vadd.f32 %v1389, %v1621
      %v1623 = vpop.f32.mrf.mxu0
      %v1624 = vadd.f32 %v1391, %v1623
      %1625 = vmatmul.bf16.gmra.mxu0 %v553
      %v1626 = vpop.f32.mrf.mxu0
      %v1627 = vadd.f32 %v1394, %v1626
      %v1628 = vpop.f32.mrf.mxu0
      %v1629 = vadd.f32 %v1396, %v1628
      %1630 = vdwg.mxu0
      %1631 = vmatpush.bf16.msra.mxu0 %v1509
      %1632 = vmatpush.bf16.msra.mxu0 %v1508
      %1633 = vmatpush.bf16.msra.mxu0 %v1507
      %1634 = vmatpush.bf16.msra.mxu0 %v1506
      %1635 = vmatpush.bf16.msra.mxu0 %v1505
      %1636 = vmatpush.bf16.msra.mxu0 %v1504
      %1637 = vmatpush.bf16.msra.mxu0 %v1503
      %1638 = vmatpush.bf16.msra.mxu0 %v1502
      %1639 = vmatmul.bf16.gmra.mxu0 %v579
      %v1640 = vpop.f32.mrf.mxu0
      %v1641 = vadd.f32 %v1552, %v1640
      %v1642 = vpop.f32.mrf.mxu0
      %v1643 = vadd.f32 %v1554, %v1642
      %1644 = vmatmul.bf16.gmra.mxu0 %v591
      %v1645 = vpop.f32.mrf.mxu0
      %v1646 = vadd.f32 %v1557, %v1645
      %v1647 = vpop.f32.mrf.mxu0
      %v1648 = vadd.f32 %v1559, %v1647
      %1649 = vmatmul.bf16.gmra.mxu0 %v603
      %v1650 = vpop.f32.mrf.mxu0
      %v1651 = vadd.f32 %v1562, %v1650
      %v1652 = vpop.f32.mrf.mxu0
      %v1653 = vadd.f32 %v1564, %v1652
      %1654 = vmatmul.bf16.gmra.mxu0 %v615
      %v1655 = vpop.f32.mrf.mxu0
      %v1656 = vadd.f32 %v1567, %v1655
      %v1657 = vpop.f32.mrf.mxu0
      %v1658 = vadd.f32 %v1569, %v1657
      %1659 = vmatmul.bf16.gmra.mxu0 %v627
      %v1660 = vpop.f32.mrf.mxu0
      %v1661 = vadd.f32 %v1572, %v1660
      %v1662 = vpop.f32.mrf.mxu0
      %v1663 = vadd.f32 %v1574, %v1662
      %1664 = vmatmul.bf16.gmra.mxu0 %v639
      %v1665 = vpop.f32.mrf.mxu0
      %v1666 = vadd.f32 %v1577, %v1665
      %v1667 = vpop.f32.mrf.mxu0
      %v1668 = vadd.f32 %v1579, %v1667
      %1669 = vmatmul.bf16.gmra.mxu0 %v651
      %v1670 = vpop.f32.mrf.mxu0
      %v1671 = vadd.f32 %v1582, %v1670
      %v1672 = vpop.f32.mrf.mxu0
      %v1673 = vadd.f32 %v1584, %v1672
      %1674 = vmatmul.bf16.gmra.mxu0 %v663
      %v1675 = vpop.f32.mrf.mxu0
      %v1676 = vadd.f32 %v1587, %v1675
      %v1677 = vpop.f32.mrf.mxu0
      %v1678 = vadd.f32 %v1589, %v1677
      %1679 = vmatmul.bf16.gmra.mxu0 %v675
      %v1680 = vpop.f32.mrf.mxu0
      %v1681 = vadd.f32 %v1592, %v1680
      %v1682 = vpop.f32.mrf.mxu0
      %v1683 = vadd.f32 %v1594, %v1682
      %1684 = vmatmul.bf16.gmra.mxu0 %v687
      %v1685 = vpop.f32.mrf.mxu0
      %v1686 = vadd.f32 %v1597, %v1685
      %v1687 = vpop.f32.mrf.mxu0
      %v1688 = vadd.f32 %v1599, %v1687
      %1689 = vmatmul.bf16.gmra.mxu0 %v699
      %v1690 = vpop.f32.mrf.mxu0
      %v1691 = vadd.f32 %v1602, %v1690
      %v1692 = vpop.f32.mrf.mxu0
      %v1693 = vadd.f32 %v1604, %v1692
      %1694 = vmatmul.bf16.gmra.mxu0 %v711
      %v1695 = vpop.f32.mrf.mxu0
      %v1696 = vadd.f32 %v1607, %v1695
      %v1697 = vpop.f32.mrf.mxu0
      %v1698 = vadd.f32 %v1609, %v1697
      %1699 = vmatmul.bf16.gmra.mxu0 %v723
      %v1700 = vpop.f32.mrf.mxu0
      %v1701 = vadd.f32 %v1612, %v1700
      %v1702 = vpop.f32.mrf.mxu0
      %v1703 = vadd.f32 %v1614, %v1702
      %1704 = vmatmul.bf16.gmra.mxu0 %v735
      %v1705 = vpop.f32.mrf.mxu0
      %v1706 = vadd.f32 %v1617, %v1705
      %v1707 = vpop.f32.mrf.mxu0
      %v1708 = vadd.f32 %v1619, %v1707
      %1709 = vmatmul.bf16.gmra.mxu0 %v747
      %v1710 = vpop.f32.mrf.mxu0
      %v1711 = vadd.f32 %v1622, %v1710
      %v1712 = vpop.f32.mrf.mxu0
      %v1713 = vadd.f32 %v1624, %v1712
      %1714 = vmatmul.bf16.gmra.mxu0 %v759
      %v1715 = vpop.f32.mrf.mxu0
      %v1716 = vadd.f32 %v1627, %v1715
      %v1717 = vpop.f32.mrf.mxu0
      %v1718 = vadd.f32 %v1629, %v1717
      %1719 = vdwg.mxu0
      %1720 = vmatpush.bf16.msra.mxu0 %v1517
      %1721 = vmatpush.bf16.msra.mxu0 %v1516
      %1722 = vmatpush.bf16.msra.mxu0 %v1515
      %1723 = vmatpush.bf16.msra.mxu0 %v1514
      %1724 = vmatpush.bf16.msra.mxu0 %v1513
      %1725 = vmatpush.bf16.msra.mxu0 %v1512
      %1726 = vmatpush.bf16.msra.mxu0 %v1511
      %1727 = vmatpush.bf16.msra.mxu0 %v1510
      %1728 = vmatmul.bf16.gmra.mxu0 %v824
      %v1729 = vpop.f32.mrf.mxu0
      %v1730 = vadd.f32 %v1641, %v1729
      %v1731 = vpop.f32.mrf.mxu0
      %v1732 = vadd.f32 %v1643, %v1731
      %1733 = vmatmul.bf16.gmra.mxu0 %v827
      %v1734 = vpop.f32.mrf.mxu0
      %v1735 = vadd.f32 %v1646, %v1734
      %v1736 = vpop.f32.mrf.mxu0
      %v1737 = vadd.f32 %v1648, %v1736
      %1738 = vmatmul.bf16.gmra.mxu0 %v830
      %v1739 = vpop.f32.mrf.mxu0
      %v1740 = vadd.f32 %v1651, %v1739
      %v1741 = vpop.f32.mrf.mxu0
      %v1742 = vadd.f32 %v1653, %v1741
      %1743 = vmatmul.bf16.gmra.mxu0 %v833
      %v1744 = vpop.f32.mrf.mxu0
      %v1745 = vadd.f32 %v1656, %v1744
      %v1746 = vpop.f32.mrf.mxu0
      %v1747 = vadd.f32 %v1658, %v1746
      %1748 = vmatmul.bf16.gmra.mxu0 %v836
      %v1749 = vpop.f32.mrf.mxu0
      %v1750 = vadd.f32 %v1661, %v1749
      %v1751 = vpop.f32.mrf.mxu0
      %v1752 = vadd.f32 %v1663, %v1751
      %1753 = vmatmul.bf16.gmra.mxu0 %v839
      %v1754 = vpop.f32.mrf.mxu0
      %v1755 = vadd.f32 %v1666, %v1754
      %v1756 = vpop.f32.mrf.mxu0
      %v1757 = vadd.f32 %v1668, %v1756
      %1758 = vmatmul.bf16.gmra.mxu0 %v842
      %v1759 = vpop.f32.mrf.mxu0
      %v1760 = vadd.f32 %v1671, %v1759
      %v1761 = vpop.f32.mrf.mxu0
      %v1762 = vadd.f32 %v1673, %v1761
      %1763 = vmatmul.bf16.gmra.mxu0 %v845
      %v1764 = vpop.f32.mrf.mxu0
      %v1765 = vadd.f32 %v1676, %v1764
      %v1766 = vpop.f32.mrf.mxu0
      %v1767 = vadd.f32 %v1678, %v1766
      %1768 = vmatmul.bf16.gmra.mxu0 %v848
      %v1769 = vpop.f32.mrf.mxu0
      %v1770 = vadd.f32 %v1681, %v1769
      %v1771 = vpop.f32.mrf.mxu0
      %v1772 = vadd.f32 %v1683, %v1771
      %1773 = vmatmul.bf16.gmra.mxu0 %v851
      %v1774 = vpop.f32.mrf.mxu0
      %v1775 = vadd.f32 %v1686, %v1774
      %v1776 = vpop.f32.mrf.mxu0
      %v1777 = vadd.f32 %v1688, %v1776
      %1778 = vmatmul.bf16.gmra.mxu0 %v854
      %v1779 = vpop.f32.mrf.mxu0
      %v1780 = vadd.f32 %v1691, %v1779
      %v1781 = vpop.f32.mrf.mxu0
      %v1782 = vadd.f32 %v1693, %v1781
      %1783 = vmatmul.bf16.gmra.mxu0 %v857
      %v1784 = vpop.f32.mrf.mxu0
      %v1785 = vadd.f32 %v1696, %v1784
      %v1786 = vpop.f32.mrf.mxu0
      %v1787 = vadd.f32 %v1698, %v1786
      %1788 = vmatmul.bf16.gmra.mxu0 %v860
      %v1789 = vpop.f32.mrf.mxu0
      %v1790 = vadd.f32 %v1701, %v1789
      %v1791 = vpop.f32.mrf.mxu0
      %v1792 = vadd.f32 %v1703, %v1791
      %1793 = vmatmul.bf16.gmra.mxu0 %v863
      %v1794 = vpop.f32.mrf.mxu0
      %v1795 = vadd.f32 %v1706, %v1794
      %v1796 = vpop.f32.mrf.mxu0
      %v1797 = vadd.f32 %v1708, %v1796
      %1798 = vmatmul.bf16.gmra.mxu0 %v866
      %v1799 = vpop.f32.mrf.mxu0
      %v1800 = vadd.f32 %v1711, %v1799
      %v1801 = vpop.f32.mrf.mxu0
      %v1802 = vadd.f32 %v1713, %v1801
      %1803 = vmatmul.bf16.gmra.mxu0 %v869
      %v1804 = vpop.f32.mrf.mxu0
      %v1805 = vadd.f32 %v1716, %v1804
      %v1806 = vpop.f32.mrf.mxu0
      %v1807 = vadd.f32 %v1718, %v1806
      %1808 = vdwg.mxu0
      %s1809 = scalar_lea.vmem %s1, 384
      %v1810 = vld [vmem:[%s1809] sm:$0xf]
      %v1811 = vld [vmem:[%s1809 + $0x4] sm:$0xf]
      %v1812 = vld [vmem:[%s1809 + $0x8] sm:$0xf]
      %v1813 = vld [vmem:[%s1809 + $0xc] sm:$0xf]
      %v1814 = vld [vmem:[%s1809 + $0x10] sm:$0xf]
      %v1815 = vld [vmem:[%s1809 + $0x14] sm:$0xf]
      %v1816 = vld [vmem:[%s1809 + $0x18] sm:$0xf]
      %v1817 = vld [vmem:[%s1809 + $0x1c] sm:$0xf]
      %v1818 = vld [vmem:[%s1809 + $0x20] sm:$0xf]
      %v1819 = vld [vmem:[%s1809 + $0x24] sm:$0xf]
      %v1820 = vld [vmem:[%s1809 + $0x28] sm:$0xf]
      %v1821 = vld [vmem:[%s1809 + $0x2c] sm:$0xf]
      %v1822 = vld [vmem:[%s1809 + $0x30] sm:$0xf]
      %v1823 = vld [vmem:[%s1809 + $0x34] sm:$0xf]
      %v1824 = vld [vmem:[%s1809 + $0x38] sm:$0xf]
      %v1825 = vld [vmem:[%s1809 + $0x3c] sm:$0xf]
      %v1826 = vld [vmem:[%s1809 + $0x40] sm:$0xf]
      %v1827 = vld [vmem:[%s1809 + $0x44] sm:$0xf]
      %v1828 = vld [vmem:[%s1809 + $0x48] sm:$0xf]
      %v1829 = vld [vmem:[%s1809 + $0x4c] sm:$0xf]
      %v1830 = vld [vmem:[%s1809 + $0x50] sm:$0xf]
      %v1831 = vld [vmem:[%s1809 + $0x54] sm:$0xf]
      %v1832 = vld [vmem:[%s1809 + $0x58] sm:$0xf]
      %v1833 = vld [vmem:[%s1809 + $0x5c] sm:$0xf]
      %v1834 = vld [vmem:[%s1809 + $0x60] sm:$0xf]
      %v1835 = vld [vmem:[%s1809 + $0x64] sm:$0xf]
      %v1836 = vld [vmem:[%s1809 + $0x68] sm:$0xf]
      %v1837 = vld [vmem:[%s1809 + $0x6c] sm:$0xf]
      %v1838 = vld [vmem:[%s1809 + $0x70] sm:$0xf]
      %v1839 = vld [vmem:[%s1809 + $0x74] sm:$0xf]
      %v1840 = vld [vmem:[%s1809 + $0x78] sm:$0xf]
      %v1841 = vld [vmem:[%s1809 + $0x7c] sm:$0xf]
      %v1842 = vld [vmem:[%s1809 + $0x80] sm:$0xf]
      %v1843 = vld [vmem:[%s1809 + $0x84] sm:$0xf]
      %v1844 = vld [vmem:[%s1809 + $0x88] sm:$0xf]
      %v1845 = vld [vmem:[%s1809 + $0x8c] sm:$0xf]
      %v1846 = vld [vmem:[%s1809 + $0x90] sm:$0xf]
      %v1847 = vld [vmem:[%s1809 + $0x94] sm:$0xf]
      %v1848 = vld [vmem:[%s1809 + $0x98] sm:$0xf]
      %v1849 = vld [vmem:[%s1809 + $0x9c] sm:$0xf]
      %v1850 = vld [vmem:[%s1809 + $0xa0] sm:$0xf]
      %v1851 = vld [vmem:[%s1809 + $0xa4] sm:$0xf]
      %v1852 = vld [vmem:[%s1809 + $0xa8] sm:$0xf]
      %v1853 = vld [vmem:[%s1809 + $0xac] sm:$0xf]
      %v1854 = vld [vmem:[%s1809 + $0xb0] sm:$0xf]
      %v1855 = vld [vmem:[%s1809 + $0xb4] sm:$0xf]
      %v1856 = vld [vmem:[%s1809 + $0xb8] sm:$0xf]
      %v1857 = vld [vmem:[%s1809 + $0xbc] sm:$0xf]
      %v1906 = vunpack.c.l.b16 %v1810
      %v1907 = vunpack.c.l.b16 %v1811
      %v1908 = vunpack.c.l.b16 %v1812
      %v1909 = vunpack.c.l.b16 %v1813
      %v1910 = vunpack.c.l.b16 %v1814
      %v1911 = vunpack.c.l.b16 %v1815
      %v1912 = vunpack.c.l.b16 %v1816
      %v1913 = vunpack.c.l.b16 %v1817
      %v1914 = vunpack.c.l.b16 %v1818
      %v1915 = vunpack.c.l.b16 %v1819
      %v1916 = vunpack.c.l.b16 %v1820
      %v1917 = vunpack.c.l.b16 %v1821
      %v1918 = vunpack.c.l.b16 %v1822
      %v1919 = vunpack.c.l.b16 %v1823
      %v1920 = vunpack.c.l.b16 %v1824
      %v1921 = vunpack.c.l.b16 %v1825
      %v1922 = vunpack.c.l.b16 %v1826
      %v1923 = vunpack.c.l.b16 %v1827
      %v1924 = vunpack.c.l.b16 %v1828
      %v1925 = vunpack.c.l.b16 %v1829
      %v1926 = vunpack.c.l.b16 %v1830
      %v1927 = vunpack.c.l.b16 %v1831
      %v1928 = vunpack.c.l.b16 %v1832
      %v1929 = vunpack.c.l.b16 %v1833
      %v1930 = vunpack.c.l.b16 %v1834
      %v1931 = vunpack.c.l.b16 %v1835
      %v1932 = vunpack.c.l.b16 %v1836
      %v1933 = vunpack.c.l.b16 %v1837
      %v1934 = vunpack.c.l.b16 %v1838
      %v1935 = vunpack.c.l.b16 %v1839
      %v1936 = vunpack.c.l.b16 %v1840
      %v1937 = vunpack.c.l.b16 %v1841
      %v1938 = vunpack.c.l.b16 %v1842
      %v1939 = vunpack.c.l.b16 %v1843
      %v1940 = vunpack.c.l.b16 %v1844
      %v1941 = vunpack.c.l.b16 %v1845
      %v1942 = vunpack.c.l.b16 %v1846
      %v1943 = vunpack.c.l.b16 %v1847
      %v1944 = vunpack.c.l.b16 %v1848
      %v1945 = vunpack.c.l.b16 %v1849
      %v1946 = vunpack.c.l.b16 %v1850
      %v1947 = vunpack.c.l.b16 %v1851
      %v1948 = vunpack.c.l.b16 %v1852
      %v1949 = vunpack.c.l.b16 %v1853
      %v1950 = vunpack.c.l.b16 %v1854
      %v1951 = vunpack.c.l.b16 %v1855
      %v1952 = vunpack.c.l.b16 %v1856
      %v1953 = vunpack.c.l.b16 %v1857
      %v1954 = vpack.c.b16 %v1907, %v1906
      %v1955 = vpack.c.b16 %v1909, %v1908
      %v1956 = vpack.c.b16 %v1911, %v1910
      %v1957 = vpack.c.b16 %v1913, %v1912
      %v1958 = vpack.c.b16 %v1915, %v1914
      %v1959 = vpack.c.b16 %v1917, %v1916
      %v1960 = vpack.c.b16 %v1919, %v1918
      %v1961 = vpack.c.b16 %v1921, %v1920
      %v1962 = vpack.c.b16 %v1923, %v1922
      %v1963 = vpack.c.b16 %v1925, %v1924
      %v1964 = vpack.c.b16 %v1927, %v1926
      %v1965 = vpack.c.b16 %v1929, %v1928
      %v1966 = vpack.c.b16 %v1931, %v1930
      %v1967 = vpack.c.b16 %v1933, %v1932
      %v1968 = vpack.c.b16 %v1935, %v1934
      %v1969 = vpack.c.b16 %v1937, %v1936
      %v1970 = vpack.c.b16 %v1939, %v1938
      %v1971 = vpack.c.b16 %v1941, %v1940
      %v1972 = vpack.c.b16 %v1943, %v1942
      %v1973 = vpack.c.b16 %v1945, %v1944
      %v1974 = vpack.c.b16 %v1947, %v1946
      %v1975 = vpack.c.b16 %v1949, %v1948
      %v1976 = vpack.c.b16 %v1951, %v1950
      %v1977 = vpack.c.b16 %v1953, %v1952
      %2002 = vmatpush.bf16.msra.mxu0 %v1961
      %2003 = vmatpush.bf16.msra.mxu0 %v1960
      %2004 = vmatpush.bf16.msra.mxu0 %v1959
      %2005 = vmatpush.bf16.msra.mxu0 %v1958
      %2006 = vmatpush.bf16.msra.mxu0 %v1957
      %2007 = vmatpush.bf16.msra.mxu0 %v1956
      %2008 = vmatpush.bf16.msra.mxu0 %v1955
      %2009 = vmatpush.bf16.msra.mxu0 %v1954
      %2010 = vmatmul.bf16.gmra.mxu0 %v540
      %v2011 = vpop.f32.mrf.mxu0
      %v2012 = vadd.f32 0.0, %v2011
      %v2013 = vpop.f32.mrf.mxu0
      %v2014 = vadd.f32 0.0, %v2013
      %2015 = vmatmul.bf16.gmra.mxu0 %v541
      %v2016 = vpop.f32.mrf.mxu0
      %v2017 = vadd.f32 0.0, %v2016
      %v2018 = vpop.f32.mrf.mxu0
      %v2019 = vadd.f32 0.0, %v2018
      %2020 = vmatmul.bf16.gmra.mxu0 %v542
      %v2021 = vpop.f32.mrf.mxu0
      %v2022 = vadd.f32 0.0, %v2021
      %v2023 = vpop.f32.mrf.mxu0
      %v2024 = vadd.f32 0.0, %v2023
      %2025 = vmatmul.bf16.gmra.mxu0 %v543
      %v2026 = vpop.f32.mrf.mxu0
      %v2027 = vadd.f32 0.0, %v2026
      %v2028 = vpop.f32.mrf.mxu0
      %v2029 = vadd.f32 0.0, %v2028
      %2030 = vmatmul.bf16.gmra.mxu0 %v544
      %v2031 = vpop.f32.mrf.mxu0
      %v2032 = vadd.f32 0.0, %v2031
      %v2033 = vpop.f32.mrf.mxu0
      %v2034 = vadd.f32 0.0, %v2033
      %2035 = vmatmul.bf16.gmra.mxu0 %v545
      %v2036 = vpop.f32.mrf.mxu0
      %v2037 = vadd.f32 0.0, %v2036
      %v2038 = vpop.f32.mrf.mxu0
      %v2039 = vadd.f32 0.0, %v2038
      %2040 = vmatmul.bf16.gmra.mxu0 %v546
      %v2041 = vpop.f32.mrf.mxu0
      %v2042 = vadd.f32 0.0, %v2041
      %v2043 = vpop.f32.mrf.mxu0
      %v2044 = vadd.f32 0.0, %v2043
      %2045 = vmatmul.bf16.gmra.mxu0 %v547
      %v2046 = vpop.f32.mrf.mxu0
      %v2047 = vadd.f32 0.0, %v2046
      %v2048 = vpop.f32.mrf.mxu0
      %v2049 = vadd.f32 0.0, %v2048
      %2050 = vmatmul.bf16.gmra.mxu0 %v548
      %v2051 = vpop.f32.mrf.mxu0
      %v2052 = vadd.f32 0.0, %v2051
      %v2053 = vpop.f32.mrf.mxu0
      %v2054 = vadd.f32 0.0, %v2053
      %2055 = vmatmul.bf16.gmra.mxu0 %v549
      %v2056 = vpop.f32.mrf.mxu0
      %v2057 = vadd.f32 0.0, %v2056
      %v2058 = vpop.f32.mrf.mxu0
      %v2059 = vadd.f32 0.0, %v2058
      %2060 = vmatmul.bf16.gmra.mxu0 %v550
      %v2061 = vpop.f32.mrf.mxu0
      %v2062 = vadd.f32 0.0, %v2061
      %v2063 = vpop.f32.mrf.mxu0
      %v2064 = vadd.f32 0.0, %v2063
      %2065 = vmatmul.bf16.gmra.mxu0 %v551
      %v2066 = vpop.f32.mrf.mxu0
      %v2067 = vadd.f32 0.0, %v2066
      %v2068 = vpop.f32.mrf.mxu0
      %v2069 = vadd.f32 0.0, %v2068
      %2070 = vmatmul.bf16.gmra.mxu0 %v552
      %v2071 = vpop.f32.mrf.mxu0
      %v2072 = vadd.f32 0.0, %v2071
      %v2073 = vpop.f32.mrf.mxu0
      %v2074 = vadd.f32 0.0, %v2073
      %2075 = vmatmul.bf16.gmra.mxu0 %v553
      %v2076 = vpop.f32.mrf.mxu0
      %v2077 = vadd.f32 0.0, %v2076
      %v2078 = vpop.f32.mrf.mxu0
      %v2079 = vadd.f32 0.0, %v2078
      %2080 = vmatmul.bf16.gmra.mxu0 %v554
      %v2081 = vpop.f32.mrf.mxu0
      %v2082 = vadd.f32 0.0, %v2081
      %v2083 = vpop.f32.mrf.mxu0
      %v2084 = vadd.f32 0.0, %v2083
      %2085 = vmatmul.bf16.gmra.mxu0 0
      %v2086 = vpop.f32.mrf.mxu0
      %v2087 = vadd.f32 0.0, %v2086
      %v2088 = vpop.f32.mrf.mxu0
      %v2089 = vadd.f32 0.0, %v2088
      %2090 = vdwg.mxu0
      %2091 = vmatpush.bf16.msra.mxu0 %v1969
      %2092 = vmatpush.bf16.msra.mxu0 %v1968
      %2093 = vmatpush.bf16.msra.mxu0 %v1967
      %2094 = vmatpush.bf16.msra.mxu0 %v1966
      %2095 = vmatpush.bf16.msra.mxu0 %v1965
      %2096 = vmatpush.bf16.msra.mxu0 %v1964
      %2097 = vmatpush.bf16.msra.mxu0 %v1963
      %2098 = vmatpush.bf16.msra.mxu0 %v1962
      %2099 = vmatmul.bf16.gmra.mxu0 %v603
      %v2100 = vpop.f32.mrf.mxu0
      %v2101 = vadd.f32 %v2012, %v2100
      %v2102 = vpop.f32.mrf.mxu0
      %v2103 = vadd.f32 %v2014, %v2102
      %2104 = vmatmul.bf16.gmra.mxu0 %v615
      %v2105 = vpop.f32.mrf.mxu0
      %v2106 = vadd.f32 %v2017, %v2105
      %v2107 = vpop.f32.mrf.mxu0
      %v2108 = vadd.f32 %v2019, %v2107
      %2109 = vmatmul.bf16.gmra.mxu0 %v627
      %v2110 = vpop.f32.mrf.mxu0
      %v2111 = vadd.f32 %v2022, %v2110
      %v2112 = vpop.f32.mrf.mxu0
      %v2113 = vadd.f32 %v2024, %v2112
      %2114 = vmatmul.bf16.gmra.mxu0 %v639
      %v2115 = vpop.f32.mrf.mxu0
      %v2116 = vadd.f32 %v2027, %v2115
      %v2117 = vpop.f32.mrf.mxu0
      %v2118 = vadd.f32 %v2029, %v2117
      %2119 = vmatmul.bf16.gmra.mxu0 %v651
      %v2120 = vpop.f32.mrf.mxu0
      %v2121 = vadd.f32 %v2032, %v2120
      %v2122 = vpop.f32.mrf.mxu0
      %v2123 = vadd.f32 %v2034, %v2122
      %2124 = vmatmul.bf16.gmra.mxu0 %v663
      %v2125 = vpop.f32.mrf.mxu0
      %v2126 = vadd.f32 %v2037, %v2125
      %v2127 = vpop.f32.mrf.mxu0
      %v2128 = vadd.f32 %v2039, %v2127
      %2129 = vmatmul.bf16.gmra.mxu0 %v675
      %v2130 = vpop.f32.mrf.mxu0
      %v2131 = vadd.f32 %v2042, %v2130
      %v2132 = vpop.f32.mrf.mxu0
      %v2133 = vadd.f32 %v2044, %v2132
      %2134 = vmatmul.bf16.gmra.mxu0 %v687
      %v2135 = vpop.f32.mrf.mxu0
      %v2136 = vadd.f32 %v2047, %v2135
      %v2137 = vpop.f32.mrf.mxu0
      %v2138 = vadd.f32 %v2049, %v2137
      %2139 = vmatmul.bf16.gmra.mxu0 %v699
      %v2140 = vpop.f32.mrf.mxu0
      %v2141 = vadd.f32 %v2052, %v2140
      %v2142 = vpop.f32.mrf.mxu0
      %v2143 = vadd.f32 %v2054, %v2142
      %2144 = vmatmul.bf16.gmra.mxu0 %v711
      %v2145 = vpop.f32.mrf.mxu0
      %v2146 = vadd.f32 %v2057, %v2145
      %v2147 = vpop.f32.mrf.mxu0
      %v2148 = vadd.f32 %v2059, %v2147
      %2149 = vmatmul.bf16.gmra.mxu0 %v723
      %v2150 = vpop.f32.mrf.mxu0
      %v2151 = vadd.f32 %v2062, %v2150
      %v2152 = vpop.f32.mrf.mxu0
      %v2153 = vadd.f32 %v2064, %v2152
      %2154 = vmatmul.bf16.gmra.mxu0 %v735
      %v2155 = vpop.f32.mrf.mxu0
      %v2156 = vadd.f32 %v2067, %v2155
      %v2157 = vpop.f32.mrf.mxu0
      %v2158 = vadd.f32 %v2069, %v2157
      %2159 = vmatmul.bf16.gmra.mxu0 %v747
      %v2160 = vpop.f32.mrf.mxu0
      %v2161 = vadd.f32 %v2072, %v2160
      %v2162 = vpop.f32.mrf.mxu0
      %v2163 = vadd.f32 %v2074, %v2162
      %2164 = vmatmul.bf16.gmra.mxu0 %v759
      %v2165 = vpop.f32.mrf.mxu0
      %v2166 = vadd.f32 %v2077, %v2165
      %v2167 = vpop.f32.mrf.mxu0
      %v2168 = vadd.f32 %v2079, %v2167
      %2169 = vmatmul.bf16.gmra.mxu0 %v771
      %v2170 = vpop.f32.mrf.mxu0
      %v2171 = vadd.f32 %v2082, %v2170
      %v2172 = vpop.f32.mrf.mxu0
      %v2173 = vadd.f32 %v2084, %v2172
      %2174 = vmatmul.bf16.gmra.mxu0 %v579
      %v2175 = vpop.f32.mrf.mxu0
      %v2176 = vadd.f32 %v2087, %v2175
      %v2177 = vpop.f32.mrf.mxu0
      %v2178 = vadd.f32 %v2089, %v2177
      %2179 = vdwg.mxu0
      %2180 = vmatpush.bf16.msra.mxu0 %v1977
      %2181 = vmatpush.bf16.msra.mxu0 %v1976
      %2182 = vmatpush.bf16.msra.mxu0 %v1975
      %2183 = vmatpush.bf16.msra.mxu0 %v1974
      %2184 = vmatpush.bf16.msra.mxu0 %v1973
      %2185 = vmatpush.bf16.msra.mxu0 %v1972
      %2186 = vmatpush.bf16.msra.mxu0 %v1971
      %2187 = vmatpush.bf16.msra.mxu0 %v1970
      %2188 = vmatmul.bf16.gmra.mxu0 %v830
      %v2189 = vpop.f32.mrf.mxu0
      %v2190 = vadd.f32 %v2101, %v2189
      %v2191 = vpop.f32.mrf.mxu0
      %v2192 = vadd.f32 %v2103, %v2191
      %2193 = vmatmul.bf16.gmra.mxu0 %v833
      %v2194 = vpop.f32.mrf.mxu0
      %v2195 = vadd.f32 %v2106, %v2194
      %v2196 = vpop.f32.mrf.mxu0
      %v2197 = vadd.f32 %v2108, %v2196
      %2198 = vmatmul.bf16.gmra.mxu0 %v836
      %v2199 = vpop.f32.mrf.mxu0
      %v2200 = vadd.f32 %v2111, %v2199
      %v2201 = vpop.f32.mrf.mxu0
      %v2202 = vadd.f32 %v2113, %v2201
      %2203 = vmatmul.bf16.gmra.mxu0 %v839
      %v2204 = vpop.f32.mrf.mxu0
      %v2205 = vadd.f32 %v2116, %v2204
      %v2206 = vpop.f32.mrf.mxu0
      %v2207 = vadd.f32 %v2118, %v2206
      %2208 = vmatmul.bf16.gmra.mxu0 %v842
      %v2209 = vpop.f32.mrf.mxu0
      %v2210 = vadd.f32 %v2121, %v2209
      %v2211 = vpop.f32.mrf.mxu0
      %v2212 = vadd.f32 %v2123, %v2211
      %2213 = vmatmul.bf16.gmra.mxu0 %v845
      %v2214 = vpop.f32.mrf.mxu0
      %v2215 = vadd.f32 %v2126, %v2214
      %v2216 = vpop.f32.mrf.mxu0
      %v2217 = vadd.f32 %v2128, %v2216
      %2218 = vmatmul.bf16.gmra.mxu0 %v848
      %v2219 = vpop.f32.mrf.mxu0
      %v2220 = vadd.f32 %v2131, %v2219
      %v2221 = vpop.f32.mrf.mxu0
      %v2222 = vadd.f32 %v2133, %v2221
      %2223 = vmatmul.bf16.gmra.mxu0 %v851
      %v2224 = vpop.f32.mrf.mxu0
      %v2225 = vadd.f32 %v2136, %v2224
      %v2226 = vpop.f32.mrf.mxu0
      %v2227 = vadd.f32 %v2138, %v2226
      %2228 = vmatmul.bf16.gmra.mxu0 %v854
      %v2229 = vpop.f32.mrf.mxu0
      %v2230 = vadd.f32 %v2141, %v2229
      %v2231 = vpop.f32.mrf.mxu0
      %v2232 = vadd.f32 %v2143, %v2231
      %2233 = vmatmul.bf16.gmra.mxu0 %v857
      %v2234 = vpop.f32.mrf.mxu0
      %v2235 = vadd.f32 %v2146, %v2234
      %v2236 = vpop.f32.mrf.mxu0
      %v2237 = vadd.f32 %v2148, %v2236
      %2238 = vmatmul.bf16.gmra.mxu0 %v860
      %v2239 = vpop.f32.mrf.mxu0
      %v2240 = vadd.f32 %v2151, %v2239
      %v2241 = vpop.f32.mrf.mxu0
      %v2242 = vadd.f32 %v2153, %v2241
      %2243 = vmatmul.bf16.gmra.mxu0 %v863
      %v2244 = vpop.f32.mrf.mxu0
      %v2245 = vadd.f32 %v2156, %v2244
      %v2246 = vpop.f32.mrf.mxu0
      %v2247 = vadd.f32 %v2158, %v2246
      %2248 = vmatmul.bf16.gmra.mxu0 %v866
      %v2249 = vpop.f32.mrf.mxu0
      %v2250 = vadd.f32 %v2161, %v2249
      %v2251 = vpop.f32.mrf.mxu0
      %v2252 = vadd.f32 %v2163, %v2251
      %2253 = vmatmul.bf16.gmra.mxu0 %v869
      %v2254 = vpop.f32.mrf.mxu0
      %v2255 = vadd.f32 %v2166, %v2254
      %v2256 = vpop.f32.mrf.mxu0
      %v2257 = vadd.f32 %v2168, %v2256
      %2258 = vmatmul.bf16.gmra.mxu0 %v872
      %v2259 = vpop.f32.mrf.mxu0
      %v2260 = vadd.f32 %v2171, %v2259
      %v2261 = vpop.f32.mrf.mxu0
      %v2262 = vadd.f32 %v2173, %v2261
      %2263 = vmatmul.bf16.gmra.mxu0 %v824
      %v2264 = vpop.f32.mrf.mxu0
      %v2265 = vadd.f32 %v2176, %v2264
      %v2266 = vpop.f32.mrf.mxu0
      %v2267 = vadd.f32 %v2178, %v2266
      %2268 = vdwg.mxu0
      %v2269 = vadd.f32 %v1730, %v2190
      %v2270 = vadd.f32 %v1732, %v2192
      %v2271 = vadd.f32 %v1735, %v2195
      %v2272 = vadd.f32 %v1737, %v2197
      %v2273 = vadd.f32 %v1740, %v2200
      %v2274 = vadd.f32 %v1742, %v2202
      %v2275 = vadd.f32 %v1745, %v2205
      %v2276 = vadd.f32 %v1747, %v2207
      %v2277 = vadd.f32 %v1750, %v2210
      %v2278 = vadd.f32 %v1752, %v2212
      %v2279 = vadd.f32 %v1755, %v2215
      %v2280 = vadd.f32 %v1757, %v2217
      %v2281 = vadd.f32 %v1760, %v2220
      %v2282 = vadd.f32 %v1762, %v2222
      %v2283 = vadd.f32 %v1765, %v2225
      %v2284 = vadd.f32 %v1767, %v2227
      %v2285 = vadd.f32 %v1770, %v2230
      %v2286 = vadd.f32 %v1772, %v2232
      %v2287 = vadd.f32 %v1775, %v2235
      %v2288 = vadd.f32 %v1777, %v2237
      %v2289 = vadd.f32 %v1780, %v2240
      %v2290 = vadd.f32 %v1782, %v2242
      %v2291 = vadd.f32 %v1785, %v2245
      %v2292 = vadd.f32 %v1787, %v2247
      %v2293 = vadd.f32 %v1790, %v2250
      %v2294 = vadd.f32 %v1792, %v2252
      %v2295 = vadd.f32 %v1795, %v2255
      %v2296 = vadd.f32 %v1797, %v2257
      %v2297 = vadd.f32 %v1800, %v2260
      %v2298 = vadd.f32 %v1802, %v2262
      %v2299 = vadd.f32 %v1805, %v2265
      %v2300 = vadd.f32 %v1807, %v2267
      %v2301 = vld [vmem:[%s2] sm:$0x1]
      %v2303 = vperm.slane %v2301, 0
      %v2305 = vmul.f32 %v2269, %v2303
      %v2306 = vmul.f32 %v2270, %v2303
      %v2307 = vmul.f32 %v2271, %v2303
      %v2308 = vmul.f32 %v2272, %v2303
      %v2309 = vmul.f32 %v2273, %v2303
      %v2310 = vmul.f32 %v2274, %v2303
      %v2311 = vmul.f32 %v2275, %v2303
      %v2312 = vmul.f32 %v2276, %v2303
      %v2313 = vmul.f32 %v2277, %v2303
      %v2314 = vmul.f32 %v2278, %v2303
      %v2315 = vmul.f32 %v2279, %v2303
      %v2316 = vmul.f32 %v2280, %v2303
      %v2317 = vmul.f32 %v2281, %v2303
      %v2318 = vmul.f32 %v2282, %v2303
      %v2319 = vmul.f32 %v2283, %v2303
      %v2320 = vmul.f32 %v2284, %v2303
      %v2321 = vmul.f32 %v2285, %v2303
      %v2322 = vmul.f32 %v2286, %v2303
      %v2323 = vmul.f32 %v2287, %v2303
      %v2324 = vmul.f32 %v2288, %v2303
      %v2325 = vmul.f32 %v2289, %v2303
      %v2326 = vmul.f32 %v2290, %v2303
      %v2327 = vmul.f32 %v2291, %v2303
      %v2328 = vmul.f32 %v2292, %v2303
      %v2329 = vmul.f32 %v2293, %v2303
      %v2330 = vmul.f32 %v2294, %v2303
      %v2331 = vmul.f32 %v2295, %v2303
      %v2332 = vmul.f32 %v2296, %v2303
      %v2333 = vmul.f32 %v2297, %v2303
      %v2334 = vmul.f32 %v2298, %v2303
      %v2335 = vmul.f32 %v2299, %v2303
      %v2336 = vmul.f32 %v2300, %v2303
      %v2337 = vld [vmem:[%s3] sm:$0x1]
      %v2339 = vperm.slane %v2337, 0
      %v2341 = vadd.f32 %v2305, %v2339
      %v2342 = vadd.f32 %v2306, %v2339
      %v2343 = vadd.f32 %v2307, %v2339
      %v2344 = vadd.f32 %v2308, %v2339
      %v2345 = vadd.f32 %v2309, %v2339
      %v2346 = vadd.f32 %v2310, %v2339
      %v2347 = vadd.f32 %v2311, %v2339
      %v2348 = vadd.f32 %v2312, %v2339
      %v2349 = vadd.f32 %v2313, %v2339
      %v2350 = vadd.f32 %v2314, %v2339
      %v2351 = vadd.f32 %v2315, %v2339
      %v2352 = vadd.f32 %v2316, %v2339
      %v2353 = vadd.f32 %v2317, %v2339
      %v2354 = vadd.f32 %v2318, %v2339
      %v2355 = vadd.f32 %v2319, %v2339
      %v2356 = vadd.f32 %v2320, %v2339
      %v2357 = vadd.f32 %v2321, %v2339
      %v2358 = vadd.f32 %v2322, %v2339
      %v2359 = vadd.f32 %v2323, %v2339
      %v2360 = vadd.f32 %v2324, %v2339
      %v2361 = vadd.f32 %v2325, %v2339
      %v2362 = vadd.f32 %v2326, %v2339
      %v2363 = vadd.f32 %v2327, %v2339
      %v2364 = vadd.f32 %v2328, %v2339
      %v2365 = vadd.f32 %v2329, %v2339
      %v2366 = vadd.f32 %v2330, %v2339
      %v2367 = vadd.f32 %v2331, %v2339
      %v2368 = vadd.f32 %v2332, %v2339
      %v2369 = vadd.f32 %v2333, %v2339
      %v2370 = vadd.f32 %v2334, %v2339
      %v2371 = vadd.f32 %v2335, %v2339
      %v2372 = vadd.f32 %v2336, %v2339
      %v2373 = vmax.f32 %v2341, 0.0
      %v2374 = vmax.f32 %v2342, 0.0
      %v2375 = vmax.f32 %v2343, 0.0
      %v2376 = vmax.f32 %v2344, 0.0
      %v2377 = vmax.f32 %v2345, 0.0
      %v2378 = vmax.f32 %v2346, 0.0
      %v2379 = vmax.f32 %v2347, 0.0
      %v2380 = vmax.f32 %v2348, 0.0
      %v2381 = vmax.f32 %v2349, 0.0
      %v2382 = vmax.f32 %v2350, 0.0
      %v2383 = vmax.f32 %v2351, 0.0
      %v2384 = vmax.f32 %v2352, 0.0
      %v2385 = vmax.f32 %v2353, 0.0
      %v2386 = vmax.f32 %v2354, 0.0
      %v2387 = vmax.f32 %v2355, 0.0
      %v2388 = vmax.f32 %v2356, 0.0
      %v2389 = vmax.f32 %v2357, 0.0
      %v2390 = vmax.f32 %v2358, 0.0
      %v2391 = vmax.f32 %v2359, 0.0
      %v2392 = vmax.f32 %v2360, 0.0
      %v2393 = vmax.f32 %v2361, 0.0
      %v2394 = vmax.f32 %v2362, 0.0
      %v2395 = vmax.f32 %v2363, 0.0
      %v2396 = vmax.f32 %v2364, 0.0
      %v2397 = vmax.f32 %v2365, 0.0
      %v2398 = vmax.f32 %v2366, 0.0
      %v2399 = vmax.f32 %v2367, 0.0
      %v2400 = vmax.f32 %v2368, 0.0
      %v2401 = vmax.f32 %v2369, 0.0
      %v2402 = vmax.f32 %v2370, 0.0
      %v2403 = vmax.f32 %v2371, 0.0
      %v2404 = vmax.f32 %v2372, 0.0
      %v2405 = vpack.c.bf16 %v2373, %v2373
      %v2406 = vpack.c.bf16 %v2374, %v2374
      %v2407 = vpack.c.bf16 %v2375, %v2375
      %v2408 = vpack.c.bf16 %v2376, %v2376
      %v2409 = vpack.c.bf16 %v2377, %v2377
      %v2410 = vpack.c.bf16 %v2378, %v2378
      %v2411 = vpack.c.bf16 %v2379, %v2379
      %v2412 = vpack.c.bf16 %v2380, %v2380
      %v2413 = vpack.c.bf16 %v2381, %v2381
      %v2414 = vpack.c.bf16 %v2382, %v2382
      %v2415 = vpack.c.bf16 %v2383, %v2383
      %v2416 = vpack.c.bf16 %v2384, %v2384
      %v2417 = vpack.c.bf16 %v2385, %v2385
      %v2418 = vpack.c.bf16 %v2386, %v2386
      %v2419 = vpack.c.bf16 %v2387, %v2387
      %v2420 = vpack.c.bf16 %v2388, %v2388
      %v2421 = vpack.c.bf16 %v2389, %v2389
      %v2422 = vpack.c.bf16 %v2390, %v2390
      %v2423 = vpack.c.bf16 %v2391, %v2391
      %v2424 = vpack.c.bf16 %v2392, %v2392
      %v2425 = vpack.c.bf16 %v2393, %v2393
      %v2426 = vpack.c.bf16 %v2394, %v2394
      %v2427 = vpack.c.bf16 %v2395, %v2395
      %v2428 = vpack.c.bf16 %v2396, %v2396
      %v2429 = vpack.c.bf16 %v2397, %v2397
      %v2430 = vpack.c.bf16 %v2398, %v2398
      %v2431 = vpack.c.bf16 %v2399, %v2399
      %v2432 = vpack.c.bf16 %v2400, %v2400
      %v2433 = vpack.c.bf16 %v2401, %v2401
      %v2434 = vpack.c.bf16 %v2402, %v2402
      %v2435 = vpack.c.bf16 %v2403, %v2403
      %v2436 = vpack.c.bf16 %v2404, %v2404
      %v2469 = vunpack.c.l.b16 %v2405
      %v2470 = vunpack.c.l.b16 %v2406
      %v2471 = vunpack.c.l.b16 %v2407
      %v2472 = vunpack.c.l.b16 %v2408
      %v2473 = vunpack.c.l.b16 %v2409
      %v2474 = vunpack.c.l.b16 %v2410
      %v2475 = vunpack.c.l.b16 %v2411
      %v2476 = vunpack.c.l.b16 %v2412
      %v2477 = vunpack.c.l.b16 %v2413
      %v2478 = vunpack.c.l.b16 %v2414
      %v2479 = vunpack.c.l.b16 %v2415
      %v2480 = vunpack.c.l.b16 %v2416
      %v2481 = vunpack.c.l.b16 %v2417
      %v2482 = vunpack.c.l.b16 %v2418
      %v2483 = vunpack.c.l.b16 %v2419
      %v2484 = vunpack.c.l.b16 %v2420
      %v2485 = vunpack.c.l.b16 %v2421
      %v2486 = vunpack.c.l.b16 %v2422
      %v2487 = vunpack.c.l.b16 %v2423
      %v2488 = vunpack.c.l.b16 %v2424
      %v2489 = vunpack.c.l.b16 %v2425
      %v2490 = vunpack.c.l.b16 %v2426
      %v2491 = vunpack.c.l.b16 %v2427
      %v2492 = vunpack.c.l.b16 %v2428
      %v2493 = vunpack.c.l.b16 %v2429
      %v2494 = vunpack.c.l.b16 %v2430
      %v2495 = vunpack.c.l.b16 %v2431
      %v2496 = vunpack.c.l.b16 %v2432
      %v2497 = vunpack.c.l.b16 %v2433
      %v2498 = vunpack.c.l.b16 %v2434
      %v2499 = vunpack.c.l.b16 %v2435
      %v2500 = vunpack.c.l.b16 %v2436
      %v2501 = vpack.c.b16 %v2470, %v2469
      %v2502 = vpack.c.b16 %v2472, %v2471
      %v2503 = vpack.c.b16 %v2474, %v2473
      %v2504 = vpack.c.b16 %v2476, %v2475
      %v2505 = vpack.c.b16 %v2478, %v2477
      %v2506 = vpack.c.b16 %v2480, %v2479
      %v2507 = vpack.c.b16 %v2482, %v2481
      %v2508 = vpack.c.b16 %v2484, %v2483
      %v2509 = vpack.c.b16 %v2486, %v2485
      %v2510 = vpack.c.b16 %v2488, %v2487
      %v2511 = vpack.c.b16 %v2490, %v2489
      %v2512 = vpack.c.b16 %v2492, %v2491
      %v2513 = vpack.c.b16 %v2494, %v2493
      %v2514 = vpack.c.b16 %v2496, %v2495
      %v2515 = vpack.c.b16 %v2498, %v2497
      %v2516 = vpack.c.b16 %v2500, %v2499
      %v2518 = vshrl.u32 %v2501, 16
      %v2520 = vrot.slane %v2518, 7
      %v2521 = vshll.u32 %v2501, 16
      %v2523 = vor.u32 %v2520, %v2521
      %v2525 = vshrl.u32 %v2502, 16
      %v2527 = vrot.slane %v2525, 7
      %v2528 = vshll.u32 %v2502, 16
      %v2530 = vor.u32 %v2527, %v2528
      %v2532 = vshrl.u32 %v2503, 16
      %v2534 = vrot.slane %v2532, 7
      %v2535 = vshll.u32 %v2503, 16
      %v2537 = vor.u32 %v2534, %v2535
      %v2539 = vshrl.u32 %v2504, 16
      %v2541 = vrot.slane %v2539, 7
      %v2542 = vshll.u32 %v2504, 16
      %v2544 = vor.u32 %v2541, %v2542
      %v2546 = vshrl.u32 %v2505, 16
      %v2548 = vrot.slane %v2546, 7
      %v2549 = vshll.u32 %v2505, 16
      %v2551 = vor.u32 %v2548, %v2549
      %v2553 = vshrl.u32 %v2506, 16
      %v2555 = vrot.slane %v2553, 7
      %v2556 = vshll.u32 %v2506, 16
      %v2558 = vor.u32 %v2555, %v2556
      %v2560 = vshrl.u32 %v2507, 16
      %v2562 = vrot.slane %v2560, 7
      %v2563 = vshll.u32 %v2507, 16
      %v2565 = vor.u32 %v2562, %v2563
      %v2567 = vshrl.u32 %v2508, 16
      %v2569 = vrot.slane %v2567, 7
      %v2570 = vshll.u32 %v2508, 16
      %v2572 = vor.u32 %v2569, %v2570
      %v2574 = vshrl.u32 %v2509, 16
      %v2576 = vrot.slane %v2574, 7
      %v2577 = vshll.u32 %v2509, 16
      %v2579 = vor.u32 %v2576, %v2577
      %v2581 = vshrl.u32 %v2510, 16
      %v2583 = vrot.slane %v2581, 7
      %v2584 = vshll.u32 %v2510, 16
      %v2586 = vor.u32 %v2583, %v2584
      %v2588 = vshrl.u32 %v2511, 16
      %v2590 = vrot.slane %v2588, 7
      %v2591 = vshll.u32 %v2511, 16
      %v2593 = vor.u32 %v2590, %v2591
      %v2595 = vshrl.u32 %v2512, 16
      %v2597 = vrot.slane %v2595, 7
      %v2598 = vshll.u32 %v2512, 16
      %v2600 = vor.u32 %v2597, %v2598
      %v2602 = vshrl.u32 %v2513, 16
      %v2604 = vrot.slane %v2602, 7
      %v2605 = vshll.u32 %v2513, 16
      %v2607 = vor.u32 %v2604, %v2605
      %v2609 = vshrl.u32 %v2514, 16
      %v2611 = vrot.slane %v2609, 7
      %v2612 = vshll.u32 %v2514, 16
      %v2614 = vor.u32 %v2611, %v2612
      %v2616 = vshrl.u32 %v2515, 16
      %v2618 = vrot.slane %v2616, 7
      %v2619 = vshll.u32 %v2515, 16
      %v2621 = vor.u32 %v2618, %v2619
      %v2623 = vshrl.u32 %v2516, 16
      %v2625 = vrot.slane %v2623, 7
      %v2626 = vshll.u32 %v2516, 16
      %v2628 = vor.u32 %v2625, %v2626
      %v2661 = vsel %vm538, 0, %v2523
      %v2662 = vsel %vm538, 0, %v2530
      %v2663 = vsel %vm538, 0, %v2537
      %v2664 = vsel %vm538, 0, %v2544
      %v2665 = vsel %vm538, 0, %v2551
      %v2666 = vsel %vm538, 0, %v2558
      %v2667 = vsel %vm538, 0, %v2565
      %v2668 = vsel %vm538, 0, %v2572
      %v2669 = vsel %vm538, 0, %v2579
      %v2670 = vsel %vm538, 0, %v2586
      %v2671 = vsel %vm538, 0, %v2593
      %v2672 = vsel %vm538, 0, %v2600
      %v2673 = vsel %vm538, 0, %v2607
      %v2674 = vsel %vm538, 0, %v2614
      %v2675 = vsel %vm538, 0, %v2621
      %v2676 = vsel %vm538, 0, %v2628
      %v2677 = vsel %vm538, %v2520, 0
      %v2678 = vsel %vm538, %v2527, 0
      %v2679 = vsel %vm538, %v2534, 0
      %v2680 = vsel %vm538, %v2541, 0
      %v2681 = vsel %vm538, %v2548, 0
      %v2682 = vsel %vm538, %v2555, 0
      %v2683 = vsel %vm538, %v2562, 0
      %v2684 = vsel %vm538, %v2569, 0
      %v2685 = vsel %vm538, %v2576, 0
      %v2686 = vsel %vm538, %v2583, 0
      %v2687 = vsel %vm538, %v2590, 0
      %v2688 = vsel %vm538, %v2597, 0
      %v2689 = vsel %vm538, %v2604, 0
      %v2690 = vsel %vm538, %v2611, 0
      %v2691 = vsel %vm538, %v2618, 0
      %v2692 = vsel %vm538, %v2625, 0
      %v2694 = vshrl.u32 %v2661, 16
      %v2696 = vshll.u32 %v2661, 16
      %v2698 = vrot.slane %v2696, 1
      %v2699 = vor.u32 %v2694, %v2698
      %v2701 = vshll.u32 %v2677, 16
      %v2703 = vrot.slane %v2701, 1
      %v2704 = vsel %vm571, %v2699, %v2703
      %v2706 = vshrl.u32 %v2662, 16
      %v2708 = vshll.u32 %v2662, 16
      %v2710 = vrot.slane %v2708, 1
      %v2711 = vor.u32 %v2706, %v2710
      %v2713 = vshll.u32 %v2678, 16
      %v2715 = vrot.slane %v2713, 1
      %v2716 = vsel %vm571, %v2711, %v2715
      %v2718 = vshrl.u32 %v2663, 16
      %v2720 = vshll.u32 %v2663, 16
      %v2722 = vrot.slane %v2720, 1
      %v2723 = vor.u32 %v2718, %v2722
      %v2725 = vshll.u32 %v2679, 16
      %v2727 = vrot.slane %v2725, 1
      %v2728 = vsel %vm571, %v2723, %v2727
      %v2730 = vshrl.u32 %v2664, 16
      %v2732 = vshll.u32 %v2664, 16
      %v2734 = vrot.slane %v2732, 1
      %v2735 = vor.u32 %v2730, %v2734
      %v2737 = vshll.u32 %v2680, 16
      %v2739 = vrot.slane %v2737, 1
      %v2740 = vsel %vm571, %v2735, %v2739
      %v2742 = vshrl.u32 %v2665, 16
      %v2744 = vshll.u32 %v2665, 16
      %v2746 = vrot.slane %v2744, 1
      %v2747 = vor.u32 %v2742, %v2746
      %v2749 = vshll.u32 %v2681, 16
      %v2751 = vrot.slane %v2749, 1
      %v2752 = vsel %vm571, %v2747, %v2751
      %v2754 = vshrl.u32 %v2666, 16
      %v2756 = vshll.u32 %v2666, 16
      %v2758 = vrot.slane %v2756, 1
      %v2759 = vor.u32 %v2754, %v2758
      %v2761 = vshll.u32 %v2682, 16
      %v2763 = vrot.slane %v2761, 1
      %v2764 = vsel %vm571, %v2759, %v2763
      %v2766 = vshrl.u32 %v2667, 16
      %v2768 = vshll.u32 %v2667, 16
      %v2770 = vrot.slane %v2768, 1
      %v2771 = vor.u32 %v2766, %v2770
      %v2773 = vshll.u32 %v2683, 16
      %v2775 = vrot.slane %v2773, 1
      %v2776 = vsel %vm571, %v2771, %v2775
      %v2778 = vshrl.u32 %v2668, 16
      %v2780 = vshll.u32 %v2668, 16
      %v2782 = vrot.slane %v2780, 1
      %v2783 = vor.u32 %v2778, %v2782
      %v2785 = vshll.u32 %v2684, 16
      %v2787 = vrot.slane %v2785, 1
      %v2788 = vsel %vm571, %v2783, %v2787
      %v2790 = vshrl.u32 %v2669, 16
      %v2792 = vshll.u32 %v2669, 16
      %v2794 = vrot.slane %v2792, 1
      %v2795 = vor.u32 %v2790, %v2794
      %v2797 = vshll.u32 %v2685, 16
      %v2799 = vrot.slane %v2797, 1
      %v2800 = vsel %vm571, %v2795, %v2799
      %v2802 = vshrl.u32 %v2670, 16
      %v2804 = vshll.u32 %v2670, 16
      %v2806 = vrot.slane %v2804, 1
      %v2807 = vor.u32 %v2802, %v2806
      %v2809 = vshll.u32 %v2686, 16
      %v2811 = vrot.slane %v2809, 1
      %v2812 = vsel %vm571, %v2807, %v2811
      %v2814 = vshrl.u32 %v2671, 16
      %v2816 = vshll.u32 %v2671, 16
      %v2818 = vrot.slane %v2816, 1
      %v2819 = vor.u32 %v2814, %v2818
      %v2821 = vshll.u32 %v2687, 16
      %v2823 = vrot.slane %v2821, 1
      %v2824 = vsel %vm571, %v2819, %v2823
      %v2826 = vshrl.u32 %v2672, 16
      %v2828 = vshll.u32 %v2672, 16
      %v2830 = vrot.slane %v2828, 1
      %v2831 = vor.u32 %v2826, %v2830
      %v2833 = vshll.u32 %v2688, 16
      %v2835 = vrot.slane %v2833, 1
      %v2836 = vsel %vm571, %v2831, %v2835
      %v2838 = vshrl.u32 %v2673, 16
      %v2840 = vshll.u32 %v2673, 16
      %v2842 = vrot.slane %v2840, 1
      %v2843 = vor.u32 %v2838, %v2842
      %v2845 = vshll.u32 %v2689, 16
      %v2847 = vrot.slane %v2845, 1
      %v2848 = vsel %vm571, %v2843, %v2847
      %v2850 = vshrl.u32 %v2674, 16
      %v2852 = vshll.u32 %v2674, 16
      %v2854 = vrot.slane %v2852, 1
      %v2855 = vor.u32 %v2850, %v2854
      %v2857 = vshll.u32 %v2690, 16
      %v2859 = vrot.slane %v2857, 1
      %v2860 = vsel %vm571, %v2855, %v2859
      %v2862 = vshrl.u32 %v2675, 16
      %v2864 = vshll.u32 %v2675, 16
      %v2866 = vrot.slane %v2864, 1
      %v2867 = vor.u32 %v2862, %v2866
      %v2869 = vshll.u32 %v2691, 16
      %v2871 = vrot.slane %v2869, 1
      %v2872 = vsel %vm571, %v2867, %v2871
      %v2874 = vshrl.u32 %v2676, 16
      %v2876 = vshll.u32 %v2676, 16
      %v2878 = vrot.slane %v2876, 1
      %v2879 = vor.u32 %v2874, %v2878
      %v2881 = vshll.u32 %v2692, 16
      %v2883 = vrot.slane %v2881, 1
      %v2884 = vsel %vm571, %v2879, %v2883
      %v2933 = vrot.slane %v2661, 1
      %v2934 = vrot.slane %v2677, 1
      %v2935 = vsel %vm822, %v2933, %v2934
      %v2936 = vrot.slane %v2662, 1
      %v2937 = vrot.slane %v2678, 1
      %v2938 = vsel %vm822, %v2936, %v2937
      %v2939 = vrot.slane %v2663, 1
      %v2940 = vrot.slane %v2679, 1
      %v2941 = vsel %vm822, %v2939, %v2940
      %v2942 = vrot.slane %v2664, 1
      %v2943 = vrot.slane %v2680, 1
      %v2944 = vsel %vm822, %v2942, %v2943
      %v2945 = vrot.slane %v2665, 1
      %v2946 = vrot.slane %v2681, 1
      %v2947 = vsel %vm822, %v2945, %v2946
      %v2948 = vrot.slane %v2666, 1
      %v2949 = vrot.slane %v2682, 1
      %v2950 = vsel %vm822, %v2948, %v2949
      %v2951 = vrot.slane %v2667, 1
      %v2952 = vrot.slane %v2683, 1
      %v2953 = vsel %vm822, %v2951, %v2952
      %v2954 = vrot.slane %v2668, 1
      %v2955 = vrot.slane %v2684, 1
      %v2956 = vsel %vm822, %v2954, %v2955
      %v2957 = vrot.slane %v2669, 1
      %v2958 = vrot.slane %v2685, 1
      %v2959 = vsel %vm822, %v2957, %v2958
      %v2960 = vrot.slane %v2670, 1
      %v2961 = vrot.slane %v2686, 1
      %v2962 = vsel %vm822, %v2960, %v2961
      %v2963 = vrot.slane %v2671, 1
      %v2964 = vrot.slane %v2687, 1
      %v2965 = vsel %vm822, %v2963, %v2964
      %v2966 = vrot.slane %v2672, 1
      %v2967 = vrot.slane %v2688, 1
      %v2968 = vsel %vm822, %v2966, %v2967
      %v2969 = vrot.slane %v2673, 1
      %v2970 = vrot.slane %v2689, 1
      %v2971 = vsel %vm822, %v2969, %v2970
      %v2972 = vrot.slane %v2674, 1
      %v2973 = vrot.slane %v2690, 1
      %v2974 = vsel %vm822, %v2972, %v2973
      %v2975 = vrot.slane %v2675, 1
      %v2976 = vrot.slane %v2691, 1
      %v2977 = vsel %vm822, %v2975, %v2976
      %v2978 = vrot.slane %v2676, 1
      %v2979 = vrot.slane %v2692, 1
      %v2980 = vsel %vm822, %v2978, %v2979
      %v2997 = vld [vmem:[%s4] sm:$0xf]
      %v2998 = vld [vmem:[%s4 + $0x4] sm:$0xf]
      %v2999 = vld [vmem:[%s4 + $0x8] sm:$0xf]
      %v3000 = vld [vmem:[%s4 + $0xc] sm:$0xf]
      %v3001 = vld [vmem:[%s4 + $0x10] sm:$0xf]
      %v3002 = vld [vmem:[%s4 + $0x14] sm:$0xf]
      %v3003 = vld [vmem:[%s4 + $0x18] sm:$0xf]
      %v3004 = vld [vmem:[%s4 + $0x1c] sm:$0xf]
      %v3005 = vld [vmem:[%s4 + $0x20] sm:$0xf]
      %v3006 = vld [vmem:[%s4 + $0x24] sm:$0xf]
      %v3007 = vld [vmem:[%s4 + $0x28] sm:$0xf]
      %v3008 = vld [vmem:[%s4 + $0x2c] sm:$0xf]
      %v3009 = vld [vmem:[%s4 + $0x30] sm:$0xf]
      %v3010 = vld [vmem:[%s4 + $0x34] sm:$0xf]
      %v3011 = vld [vmem:[%s4 + $0x38] sm:$0xf]
      %v3012 = vld [vmem:[%s4 + $0x3c] sm:$0xf]
      %v3013 = vld [vmem:[%s4 + $0x40] sm:$0xf]
      %v3014 = vld [vmem:[%s4 + $0x44] sm:$0xf]
      %v3015 = vld [vmem:[%s4 + $0x48] sm:$0xf]
      %v3016 = vld [vmem:[%s4 + $0x4c] sm:$0xf]
      %v3017 = vld [vmem:[%s4 + $0x50] sm:$0xf]
      %v3018 = vld [vmem:[%s4 + $0x54] sm:$0xf]
      %v3019 = vld [vmem:[%s4 + $0x58] sm:$0xf]
      %v3020 = vld [vmem:[%s4 + $0x5c] sm:$0xf]
      %v3021 = vld [vmem:[%s4 + $0x60] sm:$0xf]
      %v3022 = vld [vmem:[%s4 + $0x64] sm:$0xf]
      %v3023 = vld [vmem:[%s4 + $0x68] sm:$0xf]
      %v3024 = vld [vmem:[%s4 + $0x6c] sm:$0xf]
      %v3025 = vld [vmem:[%s4 + $0x70] sm:$0xf]
      %v3026 = vld [vmem:[%s4 + $0x74] sm:$0xf]
      %v3027 = vld [vmem:[%s4 + $0x78] sm:$0xf]
      %v3028 = vld [vmem:[%s4 + $0x7c] sm:$0xf]
      %v3029 = vld [vmem:[%s4 + $0x80] sm:$0xf]
      %v3030 = vld [vmem:[%s4 + $0x84] sm:$0xf]
      %v3031 = vld [vmem:[%s4 + $0x88] sm:$0xf]
      %v3032 = vld [vmem:[%s4 + $0x8c] sm:$0xf]
      %v3033 = vld [vmem:[%s4 + $0x90] sm:$0xf]
      %v3034 = vld [vmem:[%s4 + $0x94] sm:$0xf]
      %v3035 = vld [vmem:[%s4 + $0x98] sm:$0xf]
      %v3036 = vld [vmem:[%s4 + $0x9c] sm:$0xf]
      %v3037 = vld [vmem:[%s4 + $0xa0] sm:$0xf]
      %v3038 = vld [vmem:[%s4 + $0xa4] sm:$0xf]
      %v3039 = vld [vmem:[%s4 + $0xa8] sm:$0xf]
      %v3040 = vld [vmem:[%s4 + $0xac] sm:$0xf]
      %v3041 = vld [vmem:[%s4 + $0xb0] sm:$0xf]
      %v3042 = vld [vmem:[%s4 + $0xb4] sm:$0xf]
      %v3043 = vld [vmem:[%s4 + $0xb8] sm:$0xf]
      %v3044 = vld [vmem:[%s4 + $0xbc] sm:$0xf]
      %s3045 = scalar_lea.vmem %s4, 192
      %v3046 = vld [vmem:[%s3045] sm:$0xf]
      %v3047 = vld [vmem:[%s3045 + $0x4] sm:$0xf]
      %v3048 = vld [vmem:[%s3045 + $0x8] sm:$0xf]
      %v3049 = vld [vmem:[%s3045 + $0xc] sm:$0xf]
      %v3050 = vld [vmem:[%s3045 + $0x10] sm:$0xf]
      %v3051 = vld [vmem:[%s3045 + $0x14] sm:$0xf]
      %v3052 = vld [vmem:[%s3045 + $0x18] sm:$0xf]
      %v3053 = vld [vmem:[%s3045 + $0x1c] sm:$0xf]
      %v3054 = vld [vmem:[%s3045 + $0x20] sm:$0xf]
      %v3055 = vld [vmem:[%s3045 + $0x24] sm:$0xf]
      %v3056 = vld [vmem:[%s3045 + $0x28] sm:$0xf]
      %v3057 = vld [vmem:[%s3045 + $0x2c] sm:$0xf]
      %v3058 = vld [vmem:[%s3045 + $0x30] sm:$0xf]
      %v3059 = vld [vmem:[%s3045 + $0x34] sm:$0xf]
      %v3060 = vld [vmem:[%s3045 + $0x38] sm:$0xf]
      %v3061 = vld [vmem:[%s3045 + $0x3c] sm:$0xf]
      %v3062 = vld [vmem:[%s3045 + $0x40] sm:$0xf]
      %v3063 = vld [vmem:[%s3045 + $0x44] sm:$0xf]
      %v3064 = vld [vmem:[%s3045 + $0x48] sm:$0xf]
      %v3065 = vld [vmem:[%s3045 + $0x4c] sm:$0xf]
      %v3066 = vld [vmem:[%s3045 + $0x50] sm:$0xf]
      %v3067 = vld [vmem:[%s3045 + $0x54] sm:$0xf]
      %v3068 = vld [vmem:[%s3045 + $0x58] sm:$0xf]
      %v3069 = vld [vmem:[%s3045 + $0x5c] sm:$0xf]
      %v3070 = vld [vmem:[%s3045 + $0x60] sm:$0xf]
      %v3071 = vld [vmem:[%s3045 + $0x64] sm:$0xf]
      %v3072 = vld [vmem:[%s3045 + $0x68] sm:$0xf]
      %v3073 = vld [vmem:[%s3045 + $0x6c] sm:$0xf]
      %v3074 = vld [vmem:[%s3045 + $0x70] sm:$0xf]
      %v3075 = vld [vmem:[%s3045 + $0x74] sm:$0xf]
      %v3076 = vld [vmem:[%s3045 + $0x78] sm:$0xf]
      %v3077 = vld [vmem:[%s3045 + $0x7c] sm:$0xf]
      %v3078 = vld [vmem:[%s3045 + $0x80] sm:$0xf]
      %v3079 = vld [vmem:[%s3045 + $0x84] sm:$0xf]
      %v3080 = vld [vmem:[%s3045 + $0x88] sm:$0xf]
      %v3081 = vld [vmem:[%s3045 + $0x8c] sm:$0xf]
      %v3082 = vld [vmem:[%s3045 + $0x90] sm:$0xf]
      %v3083 = vld [vmem:[%s3045 + $0x94] sm:$0xf]
      %v3084 = vld [vmem:[%s3045 + $0x98] sm:$0xf]
      %v3085 = vld [vmem:[%s3045 + $0x9c] sm:$0xf]
      %v3086 = vld [vmem:[%s3045 + $0xa0] sm:$0xf]
      %v3087 = vld [vmem:[%s3045 + $0xa4] sm:$0xf]
      %v3088 = vld [vmem:[%s3045 + $0xa8] sm:$0xf]
      %v3089 = vld [vmem:[%s3045 + $0xac] sm:$0xf]
      %v3090 = vld [vmem:[%s3045 + $0xb0] sm:$0xf]
      %v3091 = vld [vmem:[%s3045 + $0xb4] sm:$0xf]
      %v3092 = vld [vmem:[%s3045 + $0xb8] sm:$0xf]
      %v3093 = vld [vmem:[%s3045 + $0xbc] sm:$0xf]
      %v3142 = vunpack.c.l.b16 %v3046
      %v3143 = vunpack.c.l.b16 %v3047
      %v3144 = vunpack.c.l.b16 %v3048
      %v3145 = vunpack.c.l.b16 %v3049
      %v3146 = vunpack.c.l.b16 %v3050
      %v3147 = vunpack.c.l.b16 %v3051
      %v3148 = vunpack.c.l.b16 %v3052
      %v3149 = vunpack.c.l.b16 %v3053
      %v3150 = vunpack.c.l.b16 %v3054
      %v3151 = vunpack.c.l.b16 %v3055
      %v3152 = vunpack.c.l.b16 %v3056
      %v3153 = vunpack.c.l.b16 %v3057
      %v3154 = vunpack.c.l.b16 %v3058
      %v3155 = vunpack.c.l.b16 %v3059
      %v3156 = vunpack.c.l.b16 %v3060
      %v3157 = vunpack.c.l.b16 %v3061
      %v3158 = vunpack.c.l.b16 %v3062
      %v3159 = vunpack.c.l.b16 %v3063
      %v3160 = vunpack.c.l.b16 %v3064
      %v3161 = vunpack.c.l.b16 %v3065
      %v3162 = vunpack.c.l.b16 %v3066
      %v3163 = vunpack.c.l.b16 %v3067
      %v3164 = vunpack.c.l.b16 %v3068
      %v3165 = vunpack.c.l.b16 %v3069
      %v3166 = vunpack.c.l.b16 %v3070
      %v3167 = vunpack.c.l.b16 %v3071
      %v3168 = vunpack.c.l.b16 %v3072
      %v3169 = vunpack.c.l.b16 %v3073
      %v3170 = vunpack.c.l.b16 %v3074
      %v3171 = vunpack.c.l.b16 %v3075
      %v3172 = vunpack.c.l.b16 %v3076
      %v3173 = vunpack.c.l.b16 %v3077
      %v3174 = vunpack.c.l.b16 %v3078
      %v3175 = vunpack.c.l.b16 %v3079
      %v3176 = vunpack.c.l.b16 %v3080
      %v3177 = vunpack.c.l.b16 %v3081
      %v3178 = vunpack.c.l.b16 %v3082
      %v3179 = vunpack.c.l.b16 %v3083
      %v3180 = vunpack.c.l.b16 %v3084
      %v3181 = vunpack.c.l.b16 %v3085
      %v3182 = vunpack.c.l.b16 %v3086
      %v3183 = vunpack.c.l.b16 %v3087
      %v3184 = vunpack.c.l.b16 %v3088
      %v3185 = vunpack.c.l.b16 %v3089
      %v3186 = vunpack.c.l.b16 %v3090
      %v3187 = vunpack.c.l.b16 %v3091
      %v3188 = vunpack.c.l.b16 %v3092
      %v3189 = vunpack.c.l.b16 %v3093
      %v3190 = vpack.c.b16 %v3143, %v3142
      %v3191 = vpack.c.b16 %v3145, %v3144
      %v3192 = vpack.c.b16 %v3147, %v3146
      %v3193 = vpack.c.b16 %v3149, %v3148
      %v3194 = vpack.c.b16 %v3151, %v3150
      %v3195 = vpack.c.b16 %v3153, %v3152
      %v3196 = vpack.c.b16 %v3155, %v3154
      %v3197 = vpack.c.b16 %v3157, %v3156
      %v3198 = vpack.c.b16 %v3159, %v3158
      %v3199 = vpack.c.b16 %v3161, %v3160
      %v3200 = vpack.c.b16 %v3163, %v3162
      %v3201 = vpack.c.b16 %v3165, %v3164
      %v3202 = vpack.c.b16 %v3167, %v3166
      %v3203 = vpack.c.b16 %v3169, %v3168
      %v3204 = vpack.c.b16 %v3171, %v3170
      %v3205 = vpack.c.b16 %v3173, %v3172
      %v3206 = vpack.c.b16 %v3175, %v3174
      %v3207 = vpack.c.b16 %v3177, %v3176
      %v3208 = vpack.c.b16 %v3179, %v3178
      %v3209 = vpack.c.b16 %v3181, %v3180
      %v3210 = vpack.c.b16 %v3183, %v3182
      %v3211 = vpack.c.b16 %v3185, %v3184
      %v3212 = vpack.c.b16 %v3187, %v3186
      %v3213 = vpack.c.b16 %v3189, %v3188
      %3238 = vmatpush.bf16.msra.mxu0 %v3197
      %3239 = vmatpush.bf16.msra.mxu0 %v3196
      %3240 = vmatpush.bf16.msra.mxu0 %v3195
      %3241 = vmatpush.bf16.msra.mxu0 %v3194
      %3242 = vmatpush.bf16.msra.mxu0 %v3193
      %3243 = vmatpush.bf16.msra.mxu0 %v3192
      %3244 = vmatpush.bf16.msra.mxu0 %v3191
      %3245 = vmatpush.bf16.msra.mxu0 %v3190
      %3246 = vmatmul.bf16.gmra.mxu0 %v2661
      %v3247 = vpop.f32.mrf.mxu0
      %v3248 = vadd.f32 0.0, %v3247
      %v3249 = vpop.f32.mrf.mxu0
      %v3250 = vadd.f32 0.0, %v3249
      %3251 = vmatmul.bf16.gmra.mxu0 %v2662
      %v3252 = vpop.f32.mrf.mxu0
      %v3253 = vadd.f32 0.0, %v3252
      %v3254 = vpop.f32.mrf.mxu0
      %v3255 = vadd.f32 0.0, %v3254
      %3256 = vmatmul.bf16.gmra.mxu0 %v2663
      %v3257 = vpop.f32.mrf.mxu0
      %v3258 = vadd.f32 0.0, %v3257
      %v3259 = vpop.f32.mrf.mxu0
      %v3260 = vadd.f32 0.0, %v3259
      %3261 = vmatmul.bf16.gmra.mxu0 %v2664
      %v3262 = vpop.f32.mrf.mxu0
      %v3263 = vadd.f32 0.0, %v3262
      %v3264 = vpop.f32.mrf.mxu0
      %v3265 = vadd.f32 0.0, %v3264
      %3266 = vmatmul.bf16.gmra.mxu0 %v2665
      %v3267 = vpop.f32.mrf.mxu0
      %v3268 = vadd.f32 0.0, %v3267
      %v3269 = vpop.f32.mrf.mxu0
      %v3270 = vadd.f32 0.0, %v3269
      %3271 = vmatmul.bf16.gmra.mxu0 %v2666
      %v3272 = vpop.f32.mrf.mxu0
      %v3273 = vadd.f32 0.0, %v3272
      %v3274 = vpop.f32.mrf.mxu0
      %v3275 = vadd.f32 0.0, %v3274
      %3276 = vmatmul.bf16.gmra.mxu0 %v2667
      %v3277 = vpop.f32.mrf.mxu0
      %v3278 = vadd.f32 0.0, %v3277
      %v3279 = vpop.f32.mrf.mxu0
      %v3280 = vadd.f32 0.0, %v3279
      %3281 = vmatmul.bf16.gmra.mxu0 %v2668
      %v3282 = vpop.f32.mrf.mxu0
      %v3283 = vadd.f32 0.0, %v3282
      %v3284 = vpop.f32.mrf.mxu0
      %v3285 = vadd.f32 0.0, %v3284
      %3286 = vmatmul.bf16.gmra.mxu0 %v2669
      %v3287 = vpop.f32.mrf.mxu0
      %v3288 = vadd.f32 0.0, %v3287
      %v3289 = vpop.f32.mrf.mxu0
      %v3290 = vadd.f32 0.0, %v3289
      %3291 = vmatmul.bf16.gmra.mxu0 %v2670
      %v3292 = vpop.f32.mrf.mxu0
      %v3293 = vadd.f32 0.0, %v3292
      %v3294 = vpop.f32.mrf.mxu0
      %v3295 = vadd.f32 0.0, %v3294
      %3296 = vmatmul.bf16.gmra.mxu0 %v2671
      %v3297 = vpop.f32.mrf.mxu0
      %v3298 = vadd.f32 0.0, %v3297
      %v3299 = vpop.f32.mrf.mxu0
      %v3300 = vadd.f32 0.0, %v3299
      %3301 = vmatmul.bf16.gmra.mxu0 %v2672
      %v3302 = vpop.f32.mrf.mxu0
      %v3303 = vadd.f32 0.0, %v3302
      %v3304 = vpop.f32.mrf.mxu0
      %v3305 = vadd.f32 0.0, %v3304
      %3306 = vmatmul.bf16.gmra.mxu0 %v2673
      %v3307 = vpop.f32.mrf.mxu0
      %v3308 = vadd.f32 0.0, %v3307
      %v3309 = vpop.f32.mrf.mxu0
      %v3310 = vadd.f32 0.0, %v3309
      %3311 = vmatmul.bf16.gmra.mxu0 %v2674
      %v3312 = vpop.f32.mrf.mxu0
      %v3313 = vadd.f32 0.0, %v3312
      %v3314 = vpop.f32.mrf.mxu0
      %v3315 = vadd.f32 0.0, %v3314
      %3316 = vmatmul.bf16.gmra.mxu0 %v2675
      %v3317 = vpop.f32.mrf.mxu0
      %v3318 = vadd.f32 0.0, %v3317
      %v3319 = vpop.f32.mrf.mxu0
      %v3320 = vadd.f32 0.0, %v3319
      %3321 = vmatmul.bf16.gmra.mxu0 %v2676
      %v3322 = vpop.f32.mrf.mxu0
      %v3323 = vadd.f32 0.0, %v3322
      %v3324 = vpop.f32.mrf.mxu0
      %v3325 = vadd.f32 0.0, %v3324
      %3326 = vdwg.mxu0
      %3327 = vmatpush.bf16.msra.mxu0 %v3205
      %3328 = vmatpush.bf16.msra.mxu0 %v3204
      %3329 = vmatpush.bf16.msra.mxu0 %v3203
      %3330 = vmatpush.bf16.msra.mxu0 %v3202
      %3331 = vmatpush.bf16.msra.mxu0 %v3201
      %3332 = vmatpush.bf16.msra.mxu0 %v3200
      %3333 = vmatpush.bf16.msra.mxu0 %v3199
      %3334 = vmatpush.bf16.msra.mxu0 %v3198
      %3335 = vmatmul.bf16.gmra.mxu0 %v2704
      %v3336 = vpop.f32.mrf.mxu0
      %v3337 = vadd.f32 %v3248, %v3336
      %v3338 = vpop.f32.mrf.mxu0
      %v3339 = vadd.f32 %v3250, %v3338
      %3340 = vmatmul.bf16.gmra.mxu0 %v2716
      %v3341 = vpop.f32.mrf.mxu0
      %v3342 = vadd.f32 %v3253, %v3341
      %v3343 = vpop.f32.mrf.mxu0
      %v3344 = vadd.f32 %v3255, %v3343
      %3345 = vmatmul.bf16.gmra.mxu0 %v2728
      %v3346 = vpop.f32.mrf.mxu0
      %v3347 = vadd.f32 %v3258, %v3346
      %v3348 = vpop.f32.mrf.mxu0
      %v3349 = vadd.f32 %v3260, %v3348
      %3350 = vmatmul.bf16.gmra.mxu0 %v2740
      %v3351 = vpop.f32.mrf.mxu0
      %v3352 = vadd.f32 %v3263, %v3351
      %v3353 = vpop.f32.mrf.mxu0
      %v3354 = vadd.f32 %v3265, %v3353
      %3355 = vmatmul.bf16.gmra.mxu0 %v2752
      %v3356 = vpop.f32.mrf.mxu0
      %v3357 = vadd.f32 %v3268, %v3356
      %v3358 = vpop.f32.mrf.mxu0
      %v3359 = vadd.f32 %v3270, %v3358
      %3360 = vmatmul.bf16.gmra.mxu0 %v2764
      %v3361 = vpop.f32.mrf.mxu0
      %v3362 = vadd.f32 %v3273, %v3361
      %v3363 = vpop.f32.mrf.mxu0
      %v3364 = vadd.f32 %v3275, %v3363
      %3365 = vmatmul.bf16.gmra.mxu0 %v2776
      %v3366 = vpop.f32.mrf.mxu0
      %v3367 = vadd.f32 %v3278, %v3366
      %v3368 = vpop.f32.mrf.mxu0
      %v3369 = vadd.f32 %v3280, %v3368
      %3370 = vmatmul.bf16.gmra.mxu0 %v2788
      %v3371 = vpop.f32.mrf.mxu0
      %v3372 = vadd.f32 %v3283, %v3371
      %v3373 = vpop.f32.mrf.mxu0
      %v3374 = vadd.f32 %v3285, %v3373
      %3375 = vmatmul.bf16.gmra.mxu0 %v2800
      %v3376 = vpop.f32.mrf.mxu0
      %v3377 = vadd.f32 %v3288, %v3376
      %v3378 = vpop.f32.mrf.mxu0
      %v3379 = vadd.f32 %v3290, %v3378
      %3380 = vmatmul.bf16.gmra.mxu0 %v2812
      %v3381 = vpop.f32.mrf.mxu0
      %v3382 = vadd.f32 %v3293, %v3381
      %v3383 = vpop.f32.mrf.mxu0
      %v3384 = vadd.f32 %v3295, %v3383
      %3385 = vmatmul.bf16.gmra.mxu0 %v2824
      %v3386 = vpop.f32.mrf.mxu0
      %v3387 = vadd.f32 %v3298, %v3386
      %v3388 = vpop.f32.mrf.mxu0
      %v3389 = vadd.f32 %v3300, %v3388
      %3390 = vmatmul.bf16.gmra.mxu0 %v2836
      %v3391 = vpop.f32.mrf.mxu0
      %v3392 = vadd.f32 %v3303, %v3391
      %v3393 = vpop.f32.mrf.mxu0
      %v3394 = vadd.f32 %v3305, %v3393
      %3395 = vmatmul.bf16.gmra.mxu0 %v2848
      %v3396 = vpop.f32.mrf.mxu0
      %v3397 = vadd.f32 %v3308, %v3396
      %v3398 = vpop.f32.mrf.mxu0
      %v3399 = vadd.f32 %v3310, %v3398
      %3400 = vmatmul.bf16.gmra.mxu0 %v2860
      %v3401 = vpop.f32.mrf.mxu0
      %v3402 = vadd.f32 %v3313, %v3401
      %v3403 = vpop.f32.mrf.mxu0
      %v3404 = vadd.f32 %v3315, %v3403
      %3405 = vmatmul.bf16.gmra.mxu0 %v2872
      %v3406 = vpop.f32.mrf.mxu0
      %v3407 = vadd.f32 %v3318, %v3406
      %v3408 = vpop.f32.mrf.mxu0
      %v3409 = vadd.f32 %v3320, %v3408
      %3410 = vmatmul.bf16.gmra.mxu0 %v2884
      %v3411 = vpop.f32.mrf.mxu0
      %v3412 = vadd.f32 %v3323, %v3411
      %v3413 = vpop.f32.mrf.mxu0
      %v3414 = vadd.f32 %v3325, %v3413
      %3415 = vdwg.mxu0
      %3416 = vmatpush.bf16.msra.mxu0 %v3213
      %3417 = vmatpush.bf16.msra.mxu0 %v3212
      %3418 = vmatpush.bf16.msra.mxu0 %v3211
      %3419 = vmatpush.bf16.msra.mxu0 %v3210
      %3420 = vmatpush.bf16.msra.mxu0 %v3209
      %3421 = vmatpush.bf16.msra.mxu0 %v3208
      %3422 = vmatpush.bf16.msra.mxu0 %v3207
      %3423 = vmatpush.bf16.msra.mxu0 %v3206
      %3424 = vmatmul.bf16.gmra.mxu0 %v2935
      %v3425 = vpop.f32.mrf.mxu0
      %v3426 = vadd.f32 %v3337, %v3425
      %v3427 = vpop.f32.mrf.mxu0
      %v3428 = vadd.f32 %v3339, %v3427
      %3429 = vmatmul.bf16.gmra.mxu0 %v2938
      %v3430 = vpop.f32.mrf.mxu0
      %v3431 = vadd.f32 %v3342, %v3430
      %v3432 = vpop.f32.mrf.mxu0
      %v3433 = vadd.f32 %v3344, %v3432
      %3434 = vmatmul.bf16.gmra.mxu0 %v2941
      %v3435 = vpop.f32.mrf.mxu0
      %v3436 = vadd.f32 %v3347, %v3435
      %v3437 = vpop.f32.mrf.mxu0
      %v3438 = vadd.f32 %v3349, %v3437
      %3439 = vmatmul.bf16.gmra.mxu0 %v2944
      %v3440 = vpop.f32.mrf.mxu0
      %v3441 = vadd.f32 %v3352, %v3440
      %v3442 = vpop.f32.mrf.mxu0
      %v3443 = vadd.f32 %v3354, %v3442
      %3444 = vmatmul.bf16.gmra.mxu0 %v2947
      %v3445 = vpop.f32.mrf.mxu0
      %v3446 = vadd.f32 %v3357, %v3445
      %v3447 = vpop.f32.mrf.mxu0
      %v3448 = vadd.f32 %v3359, %v3447
      %3449 = vmatmul.bf16.gmra.mxu0 %v2950
      %v3450 = vpop.f32.mrf.mxu0
      %v3451 = vadd.f32 %v3362, %v3450
      %v3452 = vpop.f32.mrf.mxu0
      %v3453 = vadd.f32 %v3364, %v3452
      %3454 = vmatmul.bf16.gmra.mxu0 %v2953
      %v3455 = vpop.f32.mrf.mxu0
      %v3456 = vadd.f32 %v3367, %v3455
      %v3457 = vpop.f32.mrf.mxu0
      %v3458 = vadd.f32 %v3369, %v3457
      %3459 = vmatmul.bf16.gmra.mxu0 %v2956
      %v3460 = vpop.f32.mrf.mxu0
      %v3461 = vadd.f32 %v3372, %v3460
      %v3462 = vpop.f32.mrf.mxu0
      %v3463 = vadd.f32 %v3374, %v3462
      %3464 = vmatmul.bf16.gmra.mxu0 %v2959
      %v3465 = vpop.f32.mrf.mxu0
      %v3466 = vadd.f32 %v3377, %v3465
      %v3467 = vpop.f32.mrf.mxu0
      %v3468 = vadd.f32 %v3379, %v3467
      %3469 = vmatmul.bf16.gmra.mxu0 %v2962
      %v3470 = vpop.f32.mrf.mxu0
      %v3471 = vadd.f32 %v3382, %v3470
      %v3472 = vpop.f32.mrf.mxu0
      %v3473 = vadd.f32 %v3384, %v3472
      %3474 = vmatmul.bf16.gmra.mxu0 %v2965
      %v3475 = vpop.f32.mrf.mxu0
      %v3476 = vadd.f32 %v3387, %v3475
      %v3477 = vpop.f32.mrf.mxu0
      %v3478 = vadd.f32 %v3389, %v3477
      %3479 = vmatmul.bf16.gmra.mxu0 %v2968
      %v3480 = vpop.f32.mrf.mxu0
      %v3481 = vadd.f32 %v3392, %v3480
      %v3482 = vpop.f32.mrf.mxu0
      %v3483 = vadd.f32 %v3394, %v3482
      %3484 = vmatmul.bf16.gmra.mxu0 %v2971
      %v3485 = vpop.f32.mrf.mxu0
      %v3486 = vadd.f32 %v3397, %v3485
      %v3487 = vpop.f32.mrf.mxu0
      %v3488 = vadd.f32 %v3399, %v3487
      %3489 = vmatmul.bf16.gmra.mxu0 %v2974
      %v3490 = vpop.f32.mrf.mxu0
      %v3491 = vadd.f32 %v3402, %v3490
      %v3492 = vpop.f32.mrf.mxu0
      %v3493 = vadd.f32 %v3404, %v3492
      %3494 = vmatmul.bf16.gmra.mxu0 %v2977
      %v3495 = vpop.f32.mrf.mxu0
      %v3496 = vadd.f32 %v3407, %v3495
      %v3497 = vpop.f32.mrf.mxu0
      %v3498 = vadd.f32 %v3409, %v3497
      %3499 = vmatmul.bf16.gmra.mxu0 %v2980
      %v3500 = vpop.f32.mrf.mxu0
      %v3501 = vadd.f32 %v3412, %v3500
      %v3502 = vpop.f32.mrf.mxu0
      %v3503 = vadd.f32 %v3414, %v3502
      %3504 = vdwg.mxu0
      %v3553 = vunpack.c.l.b16 %v2997
      %v3554 = vunpack.c.l.b16 %v2998
      %v3555 = vunpack.c.l.b16 %v2999
      %v3556 = vunpack.c.l.b16 %v3000
      %v3557 = vunpack.c.l.b16 %v3001
      %v3558 = vunpack.c.l.b16 %v3002
      %v3559 = vunpack.c.l.b16 %v3003
      %v3560 = vunpack.c.l.b16 %v3004
      %v3561 = vunpack.c.l.b16 %v3005
      %v3562 = vunpack.c.l.b16 %v3006
      %v3563 = vunpack.c.l.b16 %v3007
      %v3564 = vunpack.c.l.b16 %v3008
      %v3565 = vunpack.c.l.b16 %v3009
      %v3566 = vunpack.c.l.b16 %v3010
      %v3567 = vunpack.c.l.b16 %v3011
      %v3568 = vunpack.c.l.b16 %v3012
      %v3569 = vunpack.c.l.b16 %v3013
      %v3570 = vunpack.c.l.b16 %v3014
      %v3571 = vunpack.c.l.b16 %v3015
      %v3572 = vunpack.c.l.b16 %v3016
      %v3573 = vunpack.c.l.b16 %v3017
      %v3574 = vunpack.c.l.b16 %v3018
      %v3575 = vunpack.c.l.b16 %v3019
      %v3576 = vunpack.c.l.b16 %v3020
      %v3577 = vunpack.c.l.b16 %v3021
      %v3578 = vunpack.c.l.b16 %v3022
      %v3579 = vunpack.c.l.b16 %v3023
      %v3580 = vunpack.c.l.b16 %v3024
      %v3581 = vunpack.c.l.b16 %v3025
      %v3582 = vunpack.c.l.b16 %v3026
      %v3583 = vunpack.c.l.b16 %v3027
      %v3584 = vunpack.c.l.b16 %v3028
      %v3585 = vunpack.c.l.b16 %v3029
      %v3586 = vunpack.c.l.b16 %v3030
      %v3587 = vunpack.c.l.b16 %v3031
      %v3588 = vunpack.c.l.b16 %v3032
      %v3589 = vunpack.c.l.b16 %v3033
      %v3590 = vunpack.c.l.b16 %v3034
      %v3591 = vunpack.c.l.b16 %v3035
      %v3592 = vunpack.c.l.b16 %v3036
      %v3593 = vunpack.c.l.b16 %v3037
      %v3594 = vunpack.c.l.b16 %v3038
      %v3595 = vunpack.c.l.b16 %v3039
      %v3596 = vunpack.c.l.b16 %v3040
      %v3597 = vunpack.c.l.b16 %v3041
      %v3598 = vunpack.c.l.b16 %v3042
      %v3599 = vunpack.c.l.b16 %v3043
      %v3600 = vunpack.c.l.b16 %v3044
      %v3601 = vpack.c.b16 %v3554, %v3553
      %v3602 = vpack.c.b16 %v3556, %v3555
      %v3603 = vpack.c.b16 %v3558, %v3557
      %v3604 = vpack.c.b16 %v3560, %v3559
      %v3605 = vpack.c.b16 %v3562, %v3561
      %v3606 = vpack.c.b16 %v3564, %v3563
      %v3607 = vpack.c.b16 %v3566, %v3565
      %v3608 = vpack.c.b16 %v3568, %v3567
      %v3609 = vpack.c.b16 %v3570, %v3569
      %v3610 = vpack.c.b16 %v3572, %v3571
      %v3611 = vpack.c.b16 %v3574, %v3573
      %v3612 = vpack.c.b16 %v3576, %v3575
      %v3613 = vpack.c.b16 %v3578, %v3577
      %v3614 = vpack.c.b16 %v3580, %v3579
      %v3615 = vpack.c.b16 %v3582, %v3581
      %v3616 = vpack.c.b16 %v3584, %v3583
      %v3617 = vpack.c.b16 %v3586, %v3585
      %v3618 = vpack.c.b16 %v3588, %v3587
      %v3619 = vpack.c.b16 %v3590, %v3589
      %v3620 = vpack.c.b16 %v3592, %v3591
      %v3621 = vpack.c.b16 %v3594, %v3593
      %v3622 = vpack.c.b16 %v3596, %v3595
      %v3623 = vpack.c.b16 %v3598, %v3597
      %v3624 = vpack.c.b16 %v3600, %v3599
      %3649 = vmatpush.bf16.msra.mxu0 %v3608
      %3650 = vmatpush.bf16.msra.mxu0 %v3607
      %3651 = vmatpush.bf16.msra.mxu0 %v3606
      %3652 = vmatpush.bf16.msra.mxu0 %v3605
      %3653 = vmatpush.bf16.msra.mxu0 %v3604
      %3654 = vmatpush.bf16.msra.mxu0 %v3603
      %3655 = vmatpush.bf16.msra.mxu0 %v3602
      %3656 = vmatpush.bf16.msra.mxu0 %v3601
      %3657 = vmatmul.bf16.gmra.mxu0 0
      %v3658 = vpop.f32.mrf.mxu0
      %v3659 = vadd.f32 %v3426, %v3658
      %v3660 = vpop.f32.mrf.mxu0
      %v3661 = vadd.f32 %v3428, %v3660
      %3662 = vmatmul.bf16.gmra.mxu0 %v2661
      %v3663 = vpop.f32.mrf.mxu0
      %v3664 = vadd.f32 %v3431, %v3663
      %v3665 = vpop.f32.mrf.mxu0
      %v3666 = vadd.f32 %v3433, %v3665
      %3667 = vmatmul.bf16.gmra.mxu0 %v2662
      %v3668 = vpop.f32.mrf.mxu0
      %v3669 = vadd.f32 %v3436, %v3668
      %v3670 = vpop.f32.mrf.mxu0
      %v3671 = vadd.f32 %v3438, %v3670
      %3672 = vmatmul.bf16.gmra.mxu0 %v2663
      %v3673 = vpop.f32.mrf.mxu0
      %v3674 = vadd.f32 %v3441, %v3673
      %v3675 = vpop.f32.mrf.mxu0
      %v3676 = vadd.f32 %v3443, %v3675
      %3677 = vmatmul.bf16.gmra.mxu0 %v2664
      %v3678 = vpop.f32.mrf.mxu0
      %v3679 = vadd.f32 %v3446, %v3678
      %v3680 = vpop.f32.mrf.mxu0
      %v3681 = vadd.f32 %v3448, %v3680
      %3682 = vmatmul.bf16.gmra.mxu0 %v2665
      %v3683 = vpop.f32.mrf.mxu0
      %v3684 = vadd.f32 %v3451, %v3683
      %v3685 = vpop.f32.mrf.mxu0
      %v3686 = vadd.f32 %v3453, %v3685
      %3687 = vmatmul.bf16.gmra.mxu0 %v2666
      %v3688 = vpop.f32.mrf.mxu0
      %v3689 = vadd.f32 %v3456, %v3688
      %v3690 = vpop.f32.mrf.mxu0
      %v3691 = vadd.f32 %v3458, %v3690
      %3692 = vmatmul.bf16.gmra.mxu0 %v2667
      %v3693 = vpop.f32.mrf.mxu0
      %v3694 = vadd.f32 %v3461, %v3693
      %v3695 = vpop.f32.mrf.mxu0
      %v3696 = vadd.f32 %v3463, %v3695
      %3697 = vmatmul.bf16.gmra.mxu0 %v2668
      %v3698 = vpop.f32.mrf.mxu0
      %v3699 = vadd.f32 %v3466, %v3698
      %v3700 = vpop.f32.mrf.mxu0
      %v3701 = vadd.f32 %v3468, %v3700
      %3702 = vmatmul.bf16.gmra.mxu0 %v2669
      %v3703 = vpop.f32.mrf.mxu0
      %v3704 = vadd.f32 %v3471, %v3703
      %v3705 = vpop.f32.mrf.mxu0
      %v3706 = vadd.f32 %v3473, %v3705
      %3707 = vmatmul.bf16.gmra.mxu0 %v2670
      %v3708 = vpop.f32.mrf.mxu0
      %v3709 = vadd.f32 %v3476, %v3708
      %v3710 = vpop.f32.mrf.mxu0
      %v3711 = vadd.f32 %v3478, %v3710
      %3712 = vmatmul.bf16.gmra.mxu0 %v2671
      %v3713 = vpop.f32.mrf.mxu0
      %v3714 = vadd.f32 %v3481, %v3713
      %v3715 = vpop.f32.mrf.mxu0
      %v3716 = vadd.f32 %v3483, %v3715
      %3717 = vmatmul.bf16.gmra.mxu0 %v2672
      %v3718 = vpop.f32.mrf.mxu0
      %v3719 = vadd.f32 %v3486, %v3718
      %v3720 = vpop.f32.mrf.mxu0
      %v3721 = vadd.f32 %v3488, %v3720
      %3722 = vmatmul.bf16.gmra.mxu0 %v2673
      %v3723 = vpop.f32.mrf.mxu0
      %v3724 = vadd.f32 %v3491, %v3723
      %v3725 = vpop.f32.mrf.mxu0
      %v3726 = vadd.f32 %v3493, %v3725
      %3727 = vmatmul.bf16.gmra.mxu0 %v2674
      %v3728 = vpop.f32.mrf.mxu0
      %v3729 = vadd.f32 %v3496, %v3728
      %v3730 = vpop.f32.mrf.mxu0
      %v3731 = vadd.f32 %v3498, %v3730
      %3732 = vmatmul.bf16.gmra.mxu0 %v2675
      %v3733 = vpop.f32.mrf.mxu0
      %v3734 = vadd.f32 %v3501, %v3733
      %v3735 = vpop.f32.mrf.mxu0
      %v3736 = vadd.f32 %v3503, %v3735
      %3737 = vdwg.mxu0
      %3738 = vmatpush.bf16.msra.mxu0 %v3616
      %3739 = vmatpush.bf16.msra.mxu0 %v3615
      %3740 = vmatpush.bf16.msra.mxu0 %v3614
      %3741 = vmatpush.bf16.msra.mxu0 %v3613
      %3742 = vmatpush.bf16.msra.mxu0 %v3612
      %3743 = vmatpush.bf16.msra.mxu0 %v3611
      %3744 = vmatpush.bf16.msra.mxu0 %v3610
      %3745 = vmatpush.bf16.msra.mxu0 %v3609
      %3746 = vmatmul.bf16.gmra.mxu0 %v579
      %v3747 = vpop.f32.mrf.mxu0
      %v3748 = vadd.f32 %v3659, %v3747
      %v3749 = vpop.f32.mrf.mxu0
      %v3750 = vadd.f32 %v3661, %v3749
      %3751 = vmatmul.bf16.gmra.mxu0 %v2704
      %v3752 = vpop.f32.mrf.mxu0
      %v3753 = vadd.f32 %v3664, %v3752
      %v3754 = vpop.f32.mrf.mxu0
      %v3755 = vadd.f32 %v3666, %v3754
      %3756 = vmatmul.bf16.gmra.mxu0 %v2716
      %v3757 = vpop.f32.mrf.mxu0
      %v3758 = vadd.f32 %v3669, %v3757
      %v3759 = vpop.f32.mrf.mxu0
      %v3760 = vadd.f32 %v3671, %v3759
      %3761 = vmatmul.bf16.gmra.mxu0 %v2728
      %v3762 = vpop.f32.mrf.mxu0
      %v3763 = vadd.f32 %v3674, %v3762
      %v3764 = vpop.f32.mrf.mxu0
      %v3765 = vadd.f32 %v3676, %v3764
      %3766 = vmatmul.bf16.gmra.mxu0 %v2740
      %v3767 = vpop.f32.mrf.mxu0
      %v3768 = vadd.f32 %v3679, %v3767
      %v3769 = vpop.f32.mrf.mxu0
      %v3770 = vadd.f32 %v3681, %v3769
      %3771 = vmatmul.bf16.gmra.mxu0 %v2752
      %v3772 = vpop.f32.mrf.mxu0
      %v3773 = vadd.f32 %v3684, %v3772
      %v3774 = vpop.f32.mrf.mxu0
      %v3775 = vadd.f32 %v3686, %v3774
      %3776 = vmatmul.bf16.gmra.mxu0 %v2764
      %v3777 = vpop.f32.mrf.mxu0
      %v3778 = vadd.f32 %v3689, %v3777
      %v3779 = vpop.f32.mrf.mxu0
      %v3780 = vadd.f32 %v3691, %v3779
      %3781 = vmatmul.bf16.gmra.mxu0 %v2776
      %v3782 = vpop.f32.mrf.mxu0
      %v3783 = vadd.f32 %v3694, %v3782
      %v3784 = vpop.f32.mrf.mxu0
      %v3785 = vadd.f32 %v3696, %v3784
      %3786 = vmatmul.bf16.gmra.mxu0 %v2788
      %v3787 = vpop.f32.mrf.mxu0
      %v3788 = vadd.f32 %v3699, %v3787
      %v3789 = vpop.f32.mrf.mxu0
      %v3790 = vadd.f32 %v3701, %v3789
      %3791 = vmatmul.bf16.gmra.mxu0 %v2800
      %v3792 = vpop.f32.mrf.mxu0
      %v3793 = vadd.f32 %v3704, %v3792
      %v3794 = vpop.f32.mrf.mxu0
      %v3795 = vadd.f32 %v3706, %v3794
      %3796 = vmatmul.bf16.gmra.mxu0 %v2812
      %v3797 = vpop.f32.mrf.mxu0
      %v3798 = vadd.f32 %v3709, %v3797
      %v3799 = vpop.f32.mrf.mxu0
      %v3800 = vadd.f32 %v3711, %v3799
      %3801 = vmatmul.bf16.gmra.mxu0 %v2824
      %v3802 = vpop.f32.mrf.mxu0
      %v3803 = vadd.f32 %v3714, %v3802
      %v3804 = vpop.f32.mrf.mxu0
      %v3805 = vadd.f32 %v3716, %v3804
      %3806 = vmatmul.bf16.gmra.mxu0 %v2836
      %v3807 = vpop.f32.mrf.mxu0
      %v3808 = vadd.f32 %v3719, %v3807
      %v3809 = vpop.f32.mrf.mxu0
      %v3810 = vadd.f32 %v3721, %v3809
      %3811 = vmatmul.bf16.gmra.mxu0 %v2848
      %v3812 = vpop.f32.mrf.mxu0
      %v3813 = vadd.f32 %v3724, %v3812
      %v3814 = vpop.f32.mrf.mxu0
      %v3815 = vadd.f32 %v3726, %v3814
      %3816 = vmatmul.bf16.gmra.mxu0 %v2860
      %v3817 = vpop.f32.mrf.mxu0
      %v3818 = vadd.f32 %v3729, %v3817
      %v3819 = vpop.f32.mrf.mxu0
      %v3820 = vadd.f32 %v3731, %v3819
      %3821 = vmatmul.bf16.gmra.mxu0 %v2872
      %v3822 = vpop.f32.mrf.mxu0
      %v3823 = vadd.f32 %v3734, %v3822
      %v3824 = vpop.f32.mrf.mxu0
      %v3825 = vadd.f32 %v3736, %v3824
      %3826 = vdwg.mxu0
      %3827 = vmatpush.bf16.msra.mxu0 %v3624
      %3828 = vmatpush.bf16.msra.mxu0 %v3623
      %3829 = vmatpush.bf16.msra.mxu0 %v3622
      %3830 = vmatpush.bf16.msra.mxu0 %v3621
      %3831 = vmatpush.bf16.msra.mxu0 %v3620
      %3832 = vmatpush.bf16.msra.mxu0 %v3619
      %3833 = vmatpush.bf16.msra.mxu0 %v3618
      %3834 = vmatpush.bf16.msra.mxu0 %v3617
      %3835 = vmatmul.bf16.gmra.mxu0 %v824
      %v3836 = vpop.f32.mrf.mxu0
      %v3837 = vadd.f32 %v3748, %v3836
      %v3838 = vpop.f32.mrf.mxu0
      %v3839 = vadd.f32 %v3750, %v3838
      %3840 = vmatmul.bf16.gmra.mxu0 %v2935
      %v3841 = vpop.f32.mrf.mxu0
      %v3842 = vadd.f32 %v3753, %v3841
      %v3843 = vpop.f32.mrf.mxu0
      %v3844 = vadd.f32 %v3755, %v3843
      %3845 = vmatmul.bf16.gmra.mxu0 %v2938
      %v3846 = vpop.f32.mrf.mxu0
      %v3847 = vadd.f32 %v3758, %v3846
      %v3848 = vpop.f32.mrf.mxu0
      %v3849 = vadd.f32 %v3760, %v3848
      %3850 = vmatmul.bf16.gmra.mxu0 %v2941
      %v3851 = vpop.f32.mrf.mxu0
      %v3852 = vadd.f32 %v3763, %v3851
      %v3853 = vpop.f32.mrf.mxu0
      %v3854 = vadd.f32 %v3765, %v3853
      %3855 = vmatmul.bf16.gmra.mxu0 %v2944
      %v3856 = vpop.f32.mrf.mxu0
      %v3857 = vadd.f32 %v3768, %v3856
      %v3858 = vpop.f32.mrf.mxu0
      %v3859 = vadd.f32 %v3770, %v3858
      %3860 = vmatmul.bf16.gmra.mxu0 %v2947
      %v3861 = vpop.f32.mrf.mxu0
      %v3862 = vadd.f32 %v3773, %v3861
      %v3863 = vpop.f32.mrf.mxu0
      %v3864 = vadd.f32 %v3775, %v3863
      %3865 = vmatmul.bf16.gmra.mxu0 %v2950
      %v3866 = vpop.f32.mrf.mxu0
      %v3867 = vadd.f32 %v3778, %v3866
      %v3868 = vpop.f32.mrf.mxu0
      %v3869 = vadd.f32 %v3780, %v3868
      %3870 = vmatmul.bf16.gmra.mxu0 %v2953
      %v3871 = vpop.f32.mrf.mxu0
      %v3872 = vadd.f32 %v3783, %v3871
      %v3873 = vpop.f32.mrf.mxu0
      %v3874 = vadd.f32 %v3785, %v3873
      %3875 = vmatmul.bf16.gmra.mxu0 %v2956
      %v3876 = vpop.f32.mrf.mxu0
      %v3877 = vadd.f32 %v3788, %v3876
      %v3878 = vpop.f32.mrf.mxu0
      %v3879 = vadd.f32 %v3790, %v3878
      %3880 = vmatmul.bf16.gmra.mxu0 %v2959
      %v3881 = vpop.f32.mrf.mxu0
      %v3882 = vadd.f32 %v3793, %v3881
      %v3883 = vpop.f32.mrf.mxu0
      %v3884 = vadd.f32 %v3795, %v3883
      %3885 = vmatmul.bf16.gmra.mxu0 %v2962
      %v3886 = vpop.f32.mrf.mxu0
      %v3887 = vadd.f32 %v3798, %v3886
      %v3888 = vpop.f32.mrf.mxu0
      %v3889 = vadd.f32 %v3800, %v3888
      %3890 = vmatmul.bf16.gmra.mxu0 %v2965
      %v3891 = vpop.f32.mrf.mxu0
      %v3892 = vadd.f32 %v3803, %v3891
      %v3893 = vpop.f32.mrf.mxu0
      %v3894 = vadd.f32 %v3805, %v3893
      %3895 = vmatmul.bf16.gmra.mxu0 %v2968
      %v3896 = vpop.f32.mrf.mxu0
      %v3897 = vadd.f32 %v3808, %v3896
      %v3898 = vpop.f32.mrf.mxu0
      %v3899 = vadd.f32 %v3810, %v3898
      %3900 = vmatmul.bf16.gmra.mxu0 %v2971
      %v3901 = vpop.f32.mrf.mxu0
      %v3902 = vadd.f32 %v3813, %v3901
      %v3903 = vpop.f32.mrf.mxu0
      %v3904 = vadd.f32 %v3815, %v3903
      %3905 = vmatmul.bf16.gmra.mxu0 %v2974
      %v3906 = vpop.f32.mrf.mxu0
      %v3907 = vadd.f32 %v3818, %v3906
      %v3908 = vpop.f32.mrf.mxu0
      %v3909 = vadd.f32 %v3820, %v3908
      %3910 = vmatmul.bf16.gmra.mxu0 %v2977
      %v3911 = vpop.f32.mrf.mxu0
      %v3912 = vadd.f32 %v3823, %v3911
      %v3913 = vpop.f32.mrf.mxu0
      %v3914 = vadd.f32 %v3825, %v3913
      %3915 = vdwg.mxu0
      %s3916 = scalar_lea.vmem %s4, 384
      %v3917 = vld [vmem:[%s3916] sm:$0xf]
      %v3918 = vld [vmem:[%s3916 + $0x4] sm:$0xf]
      %v3919 = vld [vmem:[%s3916 + $0x8] sm:$0xf]
      %v3920 = vld [vmem:[%s3916 + $0xc] sm:$0xf]
      %v3921 = vld [vmem:[%s3916 + $0x10] sm:$0xf]
      %v3922 = vld [vmem:[%s3916 + $0x14] sm:$0xf]
      %v3923 = vld [vmem:[%s3916 + $0x18] sm:$0xf]
      %v3924 = vld [vmem:[%s3916 + $0x1c] sm:$0xf]
      %v3925 = vld [vmem:[%s3916 + $0x20] sm:$0xf]
      %v3926 = vld [vmem:[%s3916 + $0x24] sm:$0xf]
      %v3927 = vld [vmem:[%s3916 + $0x28] sm:$0xf]
      %v3928 = vld [vmem:[%s3916 + $0x2c] sm:$0xf]
      %v3929 = vld [vmem:[%s3916 + $0x30] sm:$0xf]
      %v3930 = vld [vmem:[%s3916 + $0x34] sm:$0xf]
      %v3931 = vld [vmem:[%s3916 + $0x38] sm:$0xf]
      %v3932 = vld [vmem:[%s3916 + $0x3c] sm:$0xf]
      %v3933 = vld [vmem:[%s3916 + $0x40] sm:$0xf]
      %v3934 = vld [vmem:[%s3916 + $0x44] sm:$0xf]
      %v3935 = vld [vmem:[%s3916 + $0x48] sm:$0xf]
      %v3936 = vld [vmem:[%s3916 + $0x4c] sm:$0xf]
      %v3937 = vld [vmem:[%s3916 + $0x50] sm:$0xf]
      %v3938 = vld [vmem:[%s3916 + $0x54] sm:$0xf]
      %v3939 = vld [vmem:[%s3916 + $0x58] sm:$0xf]
      %v3940 = vld [vmem:[%s3916 + $0x5c] sm:$0xf]
      %v3941 = vld [vmem:[%s3916 + $0x60] sm:$0xf]
      %v3942 = vld [vmem:[%s3916 + $0x64] sm:$0xf]
      %v3943 = vld [vmem:[%s3916 + $0x68] sm:$0xf]
      %v3944 = vld [vmem:[%s3916 + $0x6c] sm:$0xf]
      %v3945 = vld [vmem:[%s3916 + $0x70] sm:$0xf]
      %v3946 = vld [vmem:[%s3916 + $0x74] sm:$0xf]
      %v3947 = vld [vmem:[%s3916 + $0x78] sm:$0xf]
      %v3948 = vld [vmem:[%s3916 + $0x7c] sm:$0xf]
      %v3949 = vld [vmem:[%s3916 + $0x80] sm:$0xf]
      %v3950 = vld [vmem:[%s3916 + $0x84] sm:$0xf]
      %v3951 = vld [vmem:[%s3916 + $0x88] sm:$0xf]
      %v3952 = vld [vmem:[%s3916 + $0x8c] sm:$0xf]
      %v3953 = vld [vmem:[%s3916 + $0x90] sm:$0xf]
      %v3954 = vld [vmem:[%s3916 + $0x94] sm:$0xf]
      %v3955 = vld [vmem:[%s3916 + $0x98] sm:$0xf]
      %v3956 = vld [vmem:[%s3916 + $0x9c] sm:$0xf]
      %v3957 = vld [vmem:[%s3916 + $0xa0] sm:$0xf]
      %v3958 = vld [vmem:[%s3916 + $0xa4] sm:$0xf]
      %v3959 = vld [vmem:[%s3916 + $0xa8] sm:$0xf]
      %v3960 = vld [vmem:[%s3916 + $0xac] sm:$0xf]
      %v3961 = vld [vmem:[%s3916 + $0xb0] sm:$0xf]
      %v3962 = vld [vmem:[%s3916 + $0xb4] sm:$0xf]
      %v3963 = vld [vmem:[%s3916 + $0xb8] sm:$0xf]
      %v3964 = vld [vmem:[%s3916 + $0xbc] sm:$0xf]
      %v4013 = vunpack.c.l.b16 %v3917
      %v4014 = vunpack.c.l.b16 %v3918
      %v4015 = vunpack.c.l.b16 %v3919
      %v4016 = vunpack.c.l.b16 %v3920
      %v4017 = vunpack.c.l.b16 %v3921
      %v4018 = vunpack.c.l.b16 %v3922
      %v4019 = vunpack.c.l.b16 %v3923
      %v4020 = vunpack.c.l.b16 %v3924
      %v4021 = vunpack.c.l.b16 %v3925
      %v4022 = vunpack.c.l.b16 %v3926
      %v4023 = vunpack.c.l.b16 %v3927
      %v4024 = vunpack.c.l.b16 %v3928
      %v4025 = vunpack.c.l.b16 %v3929
      %v4026 = vunpack.c.l.b16 %v3930
      %v4027 = vunpack.c.l.b16 %v3931
      %v4028 = vunpack.c.l.b16 %v3932
      %v4029 = vunpack.c.l.b16 %v3933
      %v4030 = vunpack.c.l.b16 %v3934
      %v4031 = vunpack.c.l.b16 %v3935
      %v4032 = vunpack.c.l.b16 %v3936
      %v4033 = vunpack.c.l.b16 %v3937
      %v4034 = vunpack.c.l.b16 %v3938
      %v4035 = vunpack.c.l.b16 %v3939
      %v4036 = vunpack.c.l.b16 %v3940
      %v4037 = vunpack.c.l.b16 %v3941
      %v4038 = vunpack.c.l.b16 %v3942
      %v4039 = vunpack.c.l.b16 %v3943
      %v4040 = vunpack.c.l.b16 %v3944
      %v4041 = vunpack.c.l.b16 %v3945
      %v4042 = vunpack.c.l.b16 %v3946
      %v4043 = vunpack.c.l.b16 %v3947
      %v4044 = vunpack.c.l.b16 %v3948
      %v4045 = vunpack.c.l.b16 %v3949
      %v4046 = vunpack.c.l.b16 %v3950
      %v4047 = vunpack.c.l.b16 %v3951
      %v4048 = vunpack.c.l.b16 %v3952
      %v4049 = vunpack.c.l.b16 %v3953
      %v4050 = vunpack.c.l.b16 %v3954
      %v4051 = vunpack.c.l.b16 %v3955
      %v4052 = vunpack.c.l.b16 %v3956
      %v4053 = vunpack.c.l.b16 %v3957
      %v4054 = vunpack.c.l.b16 %v3958
      %v4055 = vunpack.c.l.b16 %v3959
      %v4056 = vunpack.c.l.b16 %v3960
      %v4057 = vunpack.c.l.b16 %v3961
      %v4058 = vunpack.c.l.b16 %v3962
      %v4059 = vunpack.c.l.b16 %v3963
      %v4060 = vunpack.c.l.b16 %v3964
      %v4061 = vpack.c.b16 %v4014, %v4013
      %v4062 = vpack.c.b16 %v4016, %v4015
      %v4063 = vpack.c.b16 %v4018, %v4017
      %v4064 = vpack.c.b16 %v4020, %v4019
      %v4065 = vpack.c.b16 %v4022, %v4021
      %v4066 = vpack.c.b16 %v4024, %v4023
      %v4067 = vpack.c.b16 %v4026, %v4025
      %v4068 = vpack.c.b16 %v4028, %v4027
      %v4069 = vpack.c.b16 %v4030, %v4029
      %v4070 = vpack.c.b16 %v4032, %v4031
      %v4071 = vpack.c.b16 %v4034, %v4033
      %v4072 = vpack.c.b16 %v4036, %v4035
      %v4073 = vpack.c.b16 %v4038, %v4037
      %v4074 = vpack.c.b16 %v4040, %v4039
      %v4075 = vpack.c.b16 %v4042, %v4041
      %v4076 = vpack.c.b16 %v4044, %v4043
      %v4077 = vpack.c.b16 %v4046, %v4045
      %v4078 = vpack.c.b16 %v4048, %v4047
      %v4079 = vpack.c.b16 %v4050, %v4049
      %v4080 = vpack.c.b16 %v4052, %v4051
      %v4081 = vpack.c.b16 %v4054, %v4053
      %v4082 = vpack.c.b16 %v4056, %v4055
      %v4083 = vpack.c.b16 %v4058, %v4057
      %v4084 = vpack.c.b16 %v4060, %v4059
      %4109 = vmatpush.bf16.msra.mxu0 %v4068
      %4110 = vmatpush.bf16.msra.mxu0 %v4067
      %4111 = vmatpush.bf16.msra.mxu0 %v4066
      %4112 = vmatpush.bf16.msra.mxu0 %v4065
      %4113 = vmatpush.bf16.msra.mxu0 %v4064
      %4114 = vmatpush.bf16.msra.mxu0 %v4063
      %4115 = vmatpush.bf16.msra.mxu0 %v4062
      %4116 = vmatpush.bf16.msra.mxu0 %v4061
      %4117 = vmatmul.bf16.gmra.mxu0 %v2662
      %v4118 = vpop.f32.mrf.mxu0
      %v4119 = vadd.f32 0.0, %v4118
      %v4120 = vpop.f32.mrf.mxu0
      %v4121 = vadd.f32 0.0, %v4120
      %4122 = vmatmul.bf16.gmra.mxu0 %v2663
      %v4123 = vpop.f32.mrf.mxu0
      %v4124 = vadd.f32 0.0, %v4123
      %v4125 = vpop.f32.mrf.mxu0
      %v4126 = vadd.f32 0.0, %v4125
      %4127 = vmatmul.bf16.gmra.mxu0 %v2664
      %v4128 = vpop.f32.mrf.mxu0
      %v4129 = vadd.f32 0.0, %v4128
      %v4130 = vpop.f32.mrf.mxu0
      %v4131 = vadd.f32 0.0, %v4130
      %4132 = vmatmul.bf16.gmra.mxu0 %v2665
      %v4133 = vpop.f32.mrf.mxu0
      %v4134 = vadd.f32 0.0, %v4133
      %v4135 = vpop.f32.mrf.mxu0
      %v4136 = vadd.f32 0.0, %v4135
      %4137 = vmatmul.bf16.gmra.mxu0 %v2666
      %v4138 = vpop.f32.mrf.mxu0
      %v4139 = vadd.f32 0.0, %v4138
      %v4140 = vpop.f32.mrf.mxu0
      %v4141 = vadd.f32 0.0, %v4140
      %4142 = vmatmul.bf16.gmra.mxu0 %v2667
      %v4143 = vpop.f32.mrf.mxu0
      %v4144 = vadd.f32 0.0, %v4143
      %v4145 = vpop.f32.mrf.mxu0
      %v4146 = vadd.f32 0.0, %v4145
      %4147 = vmatmul.bf16.gmra.mxu0 %v2668
      %v4148 = vpop.f32.mrf.mxu0
      %v4149 = vadd.f32 0.0, %v4148
      %v4150 = vpop.f32.mrf.mxu0
      %v4151 = vadd.f32 0.0, %v4150
      %4152 = vmatmul.bf16.gmra.mxu0 %v2669
      %v4153 = vpop.f32.mrf.mxu0
      %v4154 = vadd.f32 0.0, %v4153
      %v4155 = vpop.f32.mrf.mxu0
      %v4156 = vadd.f32 0.0, %v4155
      %4157 = vmatmul.bf16.gmra.mxu0 %v2670
      %v4158 = vpop.f32.mrf.mxu0
      %v4159 = vadd.f32 0.0, %v4158
      %v4160 = vpop.f32.mrf.mxu0
      %v4161 = vadd.f32 0.0, %v4160
      %4162 = vmatmul.bf16.gmra.mxu0 %v2671
      %v4163 = vpop.f32.mrf.mxu0
      %v4164 = vadd.f32 0.0, %v4163
      %v4165 = vpop.f32.mrf.mxu0
      %v4166 = vadd.f32 0.0, %v4165
      %4167 = vmatmul.bf16.gmra.mxu0 %v2672
      %v4168 = vpop.f32.mrf.mxu0
      %v4169 = vadd.f32 0.0, %v4168
      %v4170 = vpop.f32.mrf.mxu0
      %v4171 = vadd.f32 0.0, %v4170
      %4172 = vmatmul.bf16.gmra.mxu0 %v2673
      %v4173 = vpop.f32.mrf.mxu0
      %v4174 = vadd.f32 0.0, %v4173
      %v4175 = vpop.f32.mrf.mxu0
      %v4176 = vadd.f32 0.0, %v4175
      %4177 = vmatmul.bf16.gmra.mxu0 %v2674
      %v4178 = vpop.f32.mrf.mxu0
      %v4179 = vadd.f32 0.0, %v4178
      %v4180 = vpop.f32.mrf.mxu0
      %v4181 = vadd.f32 0.0, %v4180
      %4182 = vmatmul.bf16.gmra.mxu0 %v2675
      %v4183 = vpop.f32.mrf.mxu0
      %v4184 = vadd.f32 0.0, %v4183
      %v4185 = vpop.f32.mrf.mxu0
      %v4186 = vadd.f32 0.0, %v4185
      %4187 = vmatmul.bf16.gmra.mxu0 %v2676
      %v4188 = vpop.f32.mrf.mxu0
      %v4189 = vadd.f32 0.0, %v4188
      %v4190 = vpop.f32.mrf.mxu0
      %v4191 = vadd.f32 0.0, %v4190
      %4192 = vmatmul.bf16.gmra.mxu0 0
      %v4193 = vpop.f32.mrf.mxu0
      %v4194 = vadd.f32 0.0, %v4193
      %v4195 = vpop.f32.mrf.mxu0
      %v4196 = vadd.f32 0.0, %v4195
      %4197 = vdwg.mxu0
      %4198 = vmatpush.bf16.msra.mxu0 %v4076
      %4199 = vmatpush.bf16.msra.mxu0 %v4075
      %4200 = vmatpush.bf16.msra.mxu0 %v4074
      %4201 = vmatpush.bf16.msra.mxu0 %v4073
      %4202 = vmatpush.bf16.msra.mxu0 %v4072
      %4203 = vmatpush.bf16.msra.mxu0 %v4071
      %4204 = vmatpush.bf16.msra.mxu0 %v4070
      %4205 = vmatpush.bf16.msra.mxu0 %v4069
      %4206 = vmatmul.bf16.gmra.mxu0 %v2716
      %v4207 = vpop.f32.mrf.mxu0
      %v4208 = vadd.f32 %v4119, %v4207
      %v4209 = vpop.f32.mrf.mxu0
      %v4210 = vadd.f32 %v4121, %v4209
      %4211 = vmatmul.bf16.gmra.mxu0 %v2728
      %v4212 = vpop.f32.mrf.mxu0
      %v4213 = vadd.f32 %v4124, %v4212
      %v4214 = vpop.f32.mrf.mxu0
      %v4215 = vadd.f32 %v4126, %v4214
      %4216 = vmatmul.bf16.gmra.mxu0 %v2740
      %v4217 = vpop.f32.mrf.mxu0
      %v4218 = vadd.f32 %v4129, %v4217
      %v4219 = vpop.f32.mrf.mxu0
      %v4220 = vadd.f32 %v4131, %v4219
      %4221 = vmatmul.bf16.gmra.mxu0 %v2752
      %v4222 = vpop.f32.mrf.mxu0
      %v4223 = vadd.f32 %v4134, %v4222
      %v4224 = vpop.f32.mrf.mxu0
      %v4225 = vadd.f32 %v4136, %v4224
      %4226 = vmatmul.bf16.gmra.mxu0 %v2764
      %v4227 = vpop.f32.mrf.mxu0
      %v4228 = vadd.f32 %v4139, %v4227
      %v4229 = vpop.f32.mrf.mxu0
      %v4230 = vadd.f32 %v4141, %v4229
      %4231 = vmatmul.bf16.gmra.mxu0 %v2776
      %v4232 = vpop.f32.mrf.mxu0
      %v4233 = vadd.f32 %v4144, %v4232
      %v4234 = vpop.f32.mrf.mxu0
      %v4235 = vadd.f32 %v4146, %v4234
      %4236 = vmatmul.bf16.gmra.mxu0 %v2788
      %v4237 = vpop.f32.mrf.mxu0
      %v4238 = vadd.f32 %v4149, %v4237
      %v4239 = vpop.f32.mrf.mxu0
      %v4240 = vadd.f32 %v4151, %v4239
      %4241 = vmatmul.bf16.gmra.mxu0 %v2800
      %v4242 = vpop.f32.mrf.mxu0
      %v4243 = vadd.f32 %v4154, %v4242
      %v4244 = vpop.f32.mrf.mxu0
      %v4245 = vadd.f32 %v4156, %v4244
      %4246 = vmatmul.bf16.gmra.mxu0 %v2812
      %v4247 = vpop.f32.mrf.mxu0
      %v4248 = vadd.f32 %v4159, %v4247
      %v4249 = vpop.f32.mrf.mxu0
      %v4250 = vadd.f32 %v4161, %v4249
      %4251 = vmatmul.bf16.gmra.mxu0 %v2824
      %v4252 = vpop.f32.mrf.mxu0
      %v4253 = vadd.f32 %v4164, %v4252
      %v4254 = vpop.f32.mrf.mxu0
      %v4255 = vadd.f32 %v4166, %v4254
      %4256 = vmatmul.bf16.gmra.mxu0 %v2836
      %v4257 = vpop.f32.mrf.mxu0
      %v4258 = vadd.f32 %v4169, %v4257
      %v4259 = vpop.f32.mrf.mxu0
      %v4260 = vadd.f32 %v4171, %v4259
      %4261 = vmatmul.bf16.gmra.mxu0 %v2848
      %v4262 = vpop.f32.mrf.mxu0
      %v4263 = vadd.f32 %v4174, %v4262
      %v4264 = vpop.f32.mrf.mxu0
      %v4265 = vadd.f32 %v4176, %v4264
      %4266 = vmatmul.bf16.gmra.mxu0 %v2860
      %v4267 = vpop.f32.mrf.mxu0
      %v4268 = vadd.f32 %v4179, %v4267
      %v4269 = vpop.f32.mrf.mxu0
      %v4270 = vadd.f32 %v4181, %v4269
      %4271 = vmatmul.bf16.gmra.mxu0 %v2872
      %v4272 = vpop.f32.mrf.mxu0
      %v4273 = vadd.f32 %v4184, %v4272
      %v4274 = vpop.f32.mrf.mxu0
      %v4275 = vadd.f32 %v4186, %v4274
      %4276 = vmatmul.bf16.gmra.mxu0 %v2884
      %v4277 = vpop.f32.mrf.mxu0
      %v4278 = vadd.f32 %v4189, %v4277
      %v4279 = vpop.f32.mrf.mxu0
      %v4280 = vadd.f32 %v4191, %v4279
      %4281 = vmatmul.bf16.gmra.mxu0 %v579
      %v4282 = vpop.f32.mrf.mxu0
      %v4283 = vadd.f32 %v4194, %v4282
      %v4284 = vpop.f32.mrf.mxu0
      %v4285 = vadd.f32 %v4196, %v4284
      %4286 = vdwg.mxu0
      %4287 = vmatpush.bf16.msra.mxu0 %v4084
      %4288 = vmatpush.bf16.msra.mxu0 %v4083
      %4289 = vmatpush.bf16.msra.mxu0 %v4082
      %4290 = vmatpush.bf16.msra.mxu0 %v4081
      %4291 = vmatpush.bf16.msra.mxu0 %v4080
      %4292 = vmatpush.bf16.msra.mxu0 %v4079
      %4293 = vmatpush.bf16.msra.mxu0 %v4078
      %4294 = vmatpush.bf16.msra.mxu0 %v4077
      %4295 = vmatmul.bf16.gmra.mxu0 %v2938
      %v4296 = vpop.f32.mrf.mxu0
      %v4297 = vadd.f32 %v4208, %v4296
      %v4298 = vpop.f32.mrf.mxu0
      %v4299 = vadd.f32 %v4210, %v4298
      %4300 = vmatmul.bf16.gmra.mxu0 %v2941
      %v4301 = vpop.f32.mrf.mxu0
      %v4302 = vadd.f32 %v4213, %v4301
      %v4303 = vpop.f32.mrf.mxu0
      %v4304 = vadd.f32 %v4215, %v4303
      %4305 = vmatmul.bf16.gmra.mxu0 %v2944
      %v4306 = vpop.f32.mrf.mxu0
      %v4307 = vadd.f32 %v4218, %v4306
      %v4308 = vpop.f32.mrf.mxu0
      %v4309 = vadd.f32 %v4220, %v4308
      %4310 = vmatmul.bf16.gmra.mxu0 %v2947
      %v4311 = vpop.f32.mrf.mxu0
      %v4312 = vadd.f32 %v4223, %v4311
      %v4313 = vpop.f32.mrf.mxu0
      %v4314 = vadd.f32 %v4225, %v4313
      %4315 = vmatmul.bf16.gmra.mxu0 %v2950
      %v4316 = vpop.f32.mrf.mxu0
      %v4317 = vadd.f32 %v4228, %v4316
      %v4318 = vpop.f32.mrf.mxu0
      %v4319 = vadd.f32 %v4230, %v4318
      %4320 = vmatmul.bf16.gmra.mxu0 %v2953
      %v4321 = vpop.f32.mrf.mxu0
      %v4322 = vadd.f32 %v4233, %v4321
      %v4323 = vpop.f32.mrf.mxu0
      %v4324 = vadd.f32 %v4235, %v4323
      %4325 = vmatmul.bf16.gmra.mxu0 %v2956
      %v4326 = vpop.f32.mrf.mxu0
      %v4327 = vadd.f32 %v4238, %v4326
      %v4328 = vpop.f32.mrf.mxu0
      %v4329 = vadd.f32 %v4240, %v4328
      %4330 = vmatmul.bf16.gmra.mxu0 %v2959
      %v4331 = vpop.f32.mrf.mxu0
      %v4332 = vadd.f32 %v4243, %v4331
      %v4333 = vpop.f32.mrf.mxu0
      %v4334 = vadd.f32 %v4245, %v4333
      %4335 = vmatmul.bf16.gmra.mxu0 %v2962
      %v4336 = vpop.f32.mrf.mxu0
      %v4337 = vadd.f32 %v4248, %v4336
      %v4338 = vpop.f32.mrf.mxu0
      %v4339 = vadd.f32 %v4250, %v4338
      %4340 = vmatmul.bf16.gmra.mxu0 %v2965
      %v4341 = vpop.f32.mrf.mxu0
      %v4342 = vadd.f32 %v4253, %v4341
      %v4343 = vpop.f32.mrf.mxu0
      %v4344 = vadd.f32 %v4255, %v4343
      %4345 = vmatmul.bf16.gmra.mxu0 %v2968
      %v4346 = vpop.f32.mrf.mxu0
      %v4347 = vadd.f32 %v4258, %v4346
      %v4348 = vpop.f32.mrf.mxu0
      %v4349 = vadd.f32 %v4260, %v4348
      %4350 = vmatmul.bf16.gmra.mxu0 %v2971
      %v4351 = vpop.f32.mrf.mxu0
      %v4352 = vadd.f32 %v4263, %v4351
      %v4353 = vpop.f32.mrf.mxu0
      %v4354 = vadd.f32 %v4265, %v4353
      %4355 = vmatmul.bf16.gmra.mxu0 %v2974
      %v4356 = vpop.f32.mrf.mxu0
      %v4357 = vadd.f32 %v4268, %v4356
      %v4358 = vpop.f32.mrf.mxu0
      %v4359 = vadd.f32 %v4270, %v4358
      %4360 = vmatmul.bf16.gmra.mxu0 %v2977
      %v4361 = vpop.f32.mrf.mxu0
      %v4362 = vadd.f32 %v4273, %v4361
      %v4363 = vpop.f32.mrf.mxu0
      %v4364 = vadd.f32 %v4275, %v4363
      %4365 = vmatmul.bf16.gmra.mxu0 %v2980
      %v4366 = vpop.f32.mrf.mxu0
      %v4367 = vadd.f32 %v4278, %v4366
      %v4368 = vpop.f32.mrf.mxu0
      %v4369 = vadd.f32 %v4280, %v4368
      %4370 = vmatmul.bf16.gmra.mxu0 %v824
      %v4371 = vpop.f32.mrf.mxu0
      %v4372 = vadd.f32 %v4283, %v4371
      %v4373 = vpop.f32.mrf.mxu0
      %v4374 = vadd.f32 %v4285, %v4373
      %4375 = vdwg.mxu0
      %v4376 = vadd.f32 %v3837, %v4297
      %v4377 = vadd.f32 %v3839, %v4299
      %v4378 = vadd.f32 %v3842, %v4302
      %v4379 = vadd.f32 %v3844, %v4304
      %v4380 = vadd.f32 %v3847, %v4307
      %v4381 = vadd.f32 %v3849, %v4309
      %v4382 = vadd.f32 %v3852, %v4312
      %v4383 = vadd.f32 %v3854, %v4314
      %v4384 = vadd.f32 %v3857, %v4317
      %v4385 = vadd.f32 %v3859, %v4319
      %v4386 = vadd.f32 %v3862, %v4322
      %v4387 = vadd.f32 %v3864, %v4324
      %v4388 = vadd.f32 %v3867, %v4327
      %v4389 = vadd.f32 %v3869, %v4329
      %v4390 = vadd.f32 %v3872, %v4332
      %v4391 = vadd.f32 %v3874, %v4334
      %v4392 = vadd.f32 %v3877, %v4337
      %v4393 = vadd.f32 %v3879, %v4339
      %v4394 = vadd.f32 %v3882, %v4342
      %v4395 = vadd.f32 %v3884, %v4344
      %v4396 = vadd.f32 %v3887, %v4347
      %v4397 = vadd.f32 %v3889, %v4349
      %v4398 = vadd.f32 %v3892, %v4352
      %v4399 = vadd.f32 %v3894, %v4354
      %v4400 = vadd.f32 %v3897, %v4357
      %v4401 = vadd.f32 %v3899, %v4359
      %v4402 = vadd.f32 %v3902, %v4362
      %v4403 = vadd.f32 %v3904, %v4364
      %v4404 = vadd.f32 %v3907, %v4367
      %v4405 = vadd.f32 %v3909, %v4369
      %v4406 = vadd.f32 %v3912, %v4372
      %v4407 = vadd.f32 %v3914, %v4374
      %v4408 = vunpack.c.l.bf16 %v280
      %v4409 = vunpack.c.l.bf16 %v281
      %v4410 = vunpack.c.l.bf16 %v282
      %v4411 = vunpack.c.l.bf16 %v283
      %v4412 = vunpack.c.l.bf16 %v284
      %v4413 = vunpack.c.l.bf16 %v285
      %v4414 = vunpack.c.l.bf16 %v286
      %v4415 = vunpack.c.l.bf16 %v287
      %v4416 = vunpack.c.l.bf16 %v288
      %v4417 = vunpack.c.l.bf16 %v289
      %v4418 = vunpack.c.l.bf16 %v290
      %v4419 = vunpack.c.l.bf16 %v291
      %v4420 = vunpack.c.l.bf16 %v292
      %v4421 = vunpack.c.l.bf16 %v293
      %v4422 = vunpack.c.l.bf16 %v294
      %v4423 = vunpack.c.l.bf16 %v295
      %v4424 = vunpack.c.l.bf16 %v296
      %v4425 = vunpack.c.l.bf16 %v297
      %v4426 = vunpack.c.l.bf16 %v298
      %v4427 = vunpack.c.l.bf16 %v299
      %v4428 = vunpack.c.l.bf16 %v300
      %v4429 = vunpack.c.l.bf16 %v301
      %v4430 = vunpack.c.l.bf16 %v302
      %v4431 = vunpack.c.l.bf16 %v303
      %v4432 = vunpack.c.l.bf16 %v304
      %v4433 = vunpack.c.l.bf16 %v305
      %v4434 = vunpack.c.l.bf16 %v306
      %v4435 = vunpack.c.l.bf16 %v307
      %v4436 = vunpack.c.l.bf16 %v308
      %v4437 = vunpack.c.l.bf16 %v309
      %v4438 = vunpack.c.l.bf16 %v310
      %v4439 = vunpack.c.l.bf16 %v311
      %v4440 = vld [vmem:[%s5] sm:$0x1]
      %v4442 = vperm.slane %v4440, 0
      %v4444 = vmul.f32 %v4376, %v4442
      %v4445 = vmul.f32 %v4377, %v4442
      %v4446 = vmul.f32 %v4378, %v4442
      %v4447 = vmul.f32 %v4379, %v4442
      %v4448 = vmul.f32 %v4380, %v4442
      %v4449 = vmul.f32 %v4381, %v4442
      %v4450 = vmul.f32 %v4382, %v4442
      %v4451 = vmul.f32 %v4383, %v4442
      %v4452 = vmul.f32 %v4384, %v4442
      %v4453 = vmul.f32 %v4385, %v4442
      %v4454 = vmul.f32 %v4386, %v4442
      %v4455 = vmul.f32 %v4387, %v4442
      %v4456 = vmul.f32 %v4388, %v4442
      %v4457 = vmul.f32 %v4389, %v4442
      %v4458 = vmul.f32 %v4390, %v4442
      %v4459 = vmul.f32 %v4391, %v4442
      %v4460 = vmul.f32 %v4392, %v4442
      %v4461 = vmul.f32 %v4393, %v4442
      %v4462 = vmul.f32 %v4394, %v4442
      %v4463 = vmul.f32 %v4395, %v4442
      %v4464 = vmul.f32 %v4396, %v4442
      %v4465 = vmul.f32 %v4397, %v4442
      %v4466 = vmul.f32 %v4398, %v4442
      %v4467 = vmul.f32 %v4399, %v4442
      %v4468 = vmul.f32 %v4400, %v4442
      %v4469 = vmul.f32 %v4401, %v4442
      %v4470 = vmul.f32 %v4402, %v4442
      %v4471 = vmul.f32 %v4403, %v4442
      %v4472 = vmul.f32 %v4404, %v4442
      %v4473 = vmul.f32 %v4405, %v4442
      %v4474 = vmul.f32 %v4406, %v4442
      %v4475 = vmul.f32 %v4407, %v4442
      %v4476 = vld [vmem:[%s6] sm:$0x1]
      %v4478 = vperm.slane %v4476, 0
      %v4480 = vadd.f32 %v4444, %v4478
      %v4481 = vadd.f32 %v4445, %v4478
      %v4482 = vadd.f32 %v4446, %v4478
      %v4483 = vadd.f32 %v4447, %v4478
      %v4484 = vadd.f32 %v4448, %v4478
      %v4485 = vadd.f32 %v4449, %v4478
      %v4486 = vadd.f32 %v4450, %v4478
      %v4487 = vadd.f32 %v4451, %v4478
      %v4488 = vadd.f32 %v4452, %v4478
      %v4489 = vadd.f32 %v4453, %v4478
      %v4490 = vadd.f32 %v4454, %v4478
      %v4491 = vadd.f32 %v4455, %v4478
      %v4492 = vadd.f32 %v4456, %v4478
      %v4493 = vadd.f32 %v4457, %v4478
      %v4494 = vadd.f32 %v4458, %v4478
      %v4495 = vadd.f32 %v4459, %v4478
      %v4496 = vadd.f32 %v4460, %v4478
      %v4497 = vadd.f32 %v4461, %v4478
      %v4498 = vadd.f32 %v4462, %v4478
      %v4499 = vadd.f32 %v4463, %v4478
      %v4500 = vadd.f32 %v4464, %v4478
      %v4501 = vadd.f32 %v4465, %v4478
      %v4502 = vadd.f32 %v4466, %v4478
      %v4503 = vadd.f32 %v4467, %v4478
      %v4504 = vadd.f32 %v4468, %v4478
      %v4505 = vadd.f32 %v4469, %v4478
      %v4506 = vadd.f32 %v4470, %v4478
      %v4507 = vadd.f32 %v4471, %v4478
      %v4508 = vadd.f32 %v4472, %v4478
      %v4509 = vadd.f32 %v4473, %v4478
      %v4510 = vadd.f32 %v4474, %v4478
      %v4511 = vadd.f32 %v4475, %v4478
      %v4512 = vadd.f32 %v4480, %v4408
      %v4513 = vadd.f32 %v4481, %v4409
      %v4514 = vadd.f32 %v4482, %v4410
      %v4515 = vadd.f32 %v4483, %v4411
      %v4516 = vadd.f32 %v4484, %v4412
      %v4517 = vadd.f32 %v4485, %v4413
      %v4518 = vadd.f32 %v4486, %v4414
      %v4519 = vadd.f32 %v4487, %v4415
      %v4520 = vadd.f32 %v4488, %v4416
      %v4521 = vadd.f32 %v4489, %v4417
      %v4522 = vadd.f32 %v4490, %v4418
      %v4523 = vadd.f32 %v4491, %v4419
      %v4524 = vadd.f32 %v4492, %v4420
      %v4525 = vadd.f32 %v4493, %v4421
      %v4526 = vadd.f32 %v4494, %v4422
      %v4527 = vadd.f32 %v4495, %v4423
      %v4528 = vadd.f32 %v4496, %v4424
      %v4529 = vadd.f32 %v4497, %v4425
      %v4530 = vadd.f32 %v4498, %v4426
      %v4531 = vadd.f32 %v4499, %v4427
      %v4532 = vadd.f32 %v4500, %v4428
      %v4533 = vadd.f32 %v4501, %v4429
      %v4534 = vadd.f32 %v4502, %v4430
      %v4535 = vadd.f32 %v4503, %v4431
      %v4536 = vadd.f32 %v4504, %v4432
      %v4537 = vadd.f32 %v4505, %v4433
      %v4538 = vadd.f32 %v4506, %v4434
      %v4539 = vadd.f32 %v4507, %v4435
      %v4540 = vadd.f32 %v4508, %v4436
      %v4541 = vadd.f32 %v4509, %v4437
      %v4542 = vadd.f32 %v4510, %v4438
      %v4543 = vadd.f32 %v4511, %v4439
      %v4544 = vmax.f32 %v4512, 0.0
      %v4545 = vmax.f32 %v4513, 0.0
      %v4546 = vmax.f32 %v4514, 0.0
      %v4547 = vmax.f32 %v4515, 0.0
      %v4548 = vmax.f32 %v4516, 0.0
      %v4549 = vmax.f32 %v4517, 0.0
      %v4550 = vmax.f32 %v4518, 0.0
      %v4551 = vmax.f32 %v4519, 0.0
      %v4552 = vmax.f32 %v4520, 0.0
      %v4553 = vmax.f32 %v4521, 0.0
      %v4554 = vmax.f32 %v4522, 0.0
      %v4555 = vmax.f32 %v4523, 0.0
      %v4556 = vmax.f32 %v4524, 0.0
      %v4557 = vmax.f32 %v4525, 0.0
      %v4558 = vmax.f32 %v4526, 0.0
      %v4559 = vmax.f32 %v4527, 0.0
      %v4560 = vmax.f32 %v4528, 0.0
      %v4561 = vmax.f32 %v4529, 0.0
      %v4562 = vmax.f32 %v4530, 0.0
      %v4563 = vmax.f32 %v4531, 0.0
      %v4564 = vmax.f32 %v4532, 0.0
      %v4565 = vmax.f32 %v4533, 0.0
      %v4566 = vmax.f32 %v4534, 0.0
      %v4567 = vmax.f32 %v4535, 0.0
      %v4568 = vmax.f32 %v4536, 0.0
      %v4569 = vmax.f32 %v4537, 0.0
      %v4570 = vmax.f32 %v4538, 0.0
      %v4571 = vmax.f32 %v4539, 0.0
      %v4572 = vmax.f32 %v4540, 0.0
      %v4573 = vmax.f32 %v4541, 0.0
      %v4574 = vmax.f32 %v4542, 0.0
      %v4575 = vmax.f32 %v4543, 0.0
      %4576 = vst [vmem:[%s278] sm:$0xff] %v4544
      %4577 = vst [vmem:[%s278 + $0x8] sm:$0xff] %v4545
      %4578 = vst [vmem:[%s278 + $0x10] sm:$0xff] %v4546
      %4579 = vst [vmem:[%s278 + $0x18] sm:$0xff] %v4547
      %4580 = vst [vmem:[%s278 + $0x20] sm:$0xff] %v4548
      %4581 = vst [vmem:[%s278 + $0x28] sm:$0xff] %v4549
      %4582 = vst [vmem:[%s278 + $0x30] sm:$0xff] %v4550
      %4583 = vst [vmem:[%s278 + $0x38] sm:$0xff] %v4551
      %4584 = vst [vmem:[%s278 + $0x40] sm:$0xff] %v4552
      %4585 = vst [vmem:[%s278 + $0x48] sm:$0xff] %v4553
      %4586 = vst [vmem:[%s278 + $0x50] sm:$0xff] %v4554
      %4587 = vst [vmem:[%s278 + $0x58] sm:$0xff] %v4555
      %4588 = vst [vmem:[%s278 + $0x60] sm:$0xff] %v4556
      %4589 = vst [vmem:[%s278 + $0x68] sm:$0xff] %v4557
      %4590 = vst [vmem:[%s278 + $0x70] sm:$0xff] %v4558
      %4591 = vst [vmem:[%s278 + $0x78] sm:$0xff] %v4559
      %4592 = vst [vmem:[%s278 + $0x80] sm:$0xff] %v4560
      %4593 = vst [vmem:[%s278 + $0x88] sm:$0xff] %v4561
      %4594 = vst [vmem:[%s278 + $0x90] sm:$0xff] %v4562
      %4595 = vst [vmem:[%s278 + $0x98] sm:$0xff] %v4563
      %4596 = vst [vmem:[%s278 + $0xa0] sm:$0xff] %v4564
      %4597 = vst [vmem:[%s278 + $0xa8] sm:$0xff] %v4565
      %4598 = vst [vmem:[%s278 + $0xb0] sm:$0xff] %v4566
      %4599 = vst [vmem:[%s278 + $0xb8] sm:$0xff] %v4567
      %4600 = vst [vmem:[%s278 + $0xc0] sm:$0xff] %v4568
      %4601 = vst [vmem:[%s278 + $0xc8] sm:$0xff] %v4569
      %4602 = vst [vmem:[%s278 + $0xd0] sm:$0xff] %v4570
      %4603 = vst [vmem:[%s278 + $0xd8] sm:$0xff] %v4571
      %4604 = vst [vmem:[%s278 + $0xe0] sm:$0xff] %v4572
      %4605 = vst [vmem:[%s278 + $0xe8] sm:$0xff] %v4573
      %4606 = vst [vmem:[%s278 + $0xf0] sm:$0xff] %v4574
      %4607 = vst [vmem:[%s278 + $0xf8] sm:$0xff] %v4575
      %p4608 = scmp.lt.s32.totalorder %s18, 1
      %s4609 = scalar_select %p4608, %s18, 1
      %s4610 = smul.addr %s4609, 32
      %s4611 = smul.addr %s4610, 8
      %s4612 = scalar_lea.vmem %s7, %s4611
      // Predicated region
      $region49: #{basic_block_forward.1} parent=47 // pred_check
        %p4613 = pneg %p188
      $region50: #{basic_block_forward.1} parent=47 // pred_check_branch
        %4615 = sbr.rel (%p4613) target = $region52
      $region51: #{basic_block_forward.1} parent=47 // pred_region
        _
      $region52: #{basic_block_forward.1} parent=47 // pred_fallthru
        _
    $region48: #{basic_block_forward.1} parent=5 // pred_fallthru
      _
    %p4616 = scmp.le.s32.totalorder 2, %s13
    // Predicated region
    $region53: #{basic_block_forward.1} parent=5 // pred_check
      %p4617 = pneg %p4616
    $region54: #{basic_block_forward.1} parent=5 // pred_check_branch
      %4619 = sbr.rel (%p4617) target = $region56
    $region55: #{basic_block_forward.1} parent=5 // pred_region
      %s4620 = ssub.s32 %s13, 2
      // Predicated region
      $region57: #{basic_block_forward.1} parent=55 // pred_check
        %p4621 = pneg %p194
      $region58: #{basic_block_forward.1} parent=55 // pred_check_branch
        %4623 = sbr.rel (%p4621) target = $region60
      $region59: #{basic_block_forward.1} parent=55 // pred_region
        %p4624 = scmp.lt.s32.totalorder %s19, 1
        %s4625 = scalar_select %p4624, %s19, 1
        %s4626 = smul.addr %s4625, 32
        %s4627 = smul.addr %s4626, 8
        %s4628 = scalar_lea.vmem %s7, %s4627
      $region60: #{basic_block_forward.1} parent=55 // pred_fallthru
        _
    $region56: #{basic_block_forward.1} parent=5 // pred_fallthru
      _
  $region6: #{basic_block_forward.1} parent=0 // loop_footer
    %s17 = sadd.s32 1, %s13
  $region7: #{basic_block_forward.1} parent=0 // loop_footer_branch
    %12 = sbr.rel target = $region3
  $region8: #{basic_block_forward.1} parent=0 // loop_exit
    _

</llo_original>
